<compile_context>
chip_gen: v7x
topology: tpu7x:2x2x1
jax: 0.10.0
libtpu: 0.0.40
codegen_flags: <defaults>
</compile_context>

<pallas_src>
import functools

import jax
import jax.numpy as jnp
import numpy as np
from jax.experimental import pallas as pl
from jax.experimental.pallas import tpu as pltpu

BT = 8  # batch-tile rows (f32 sublane count)


# ----------------------------------------------------------------------------
# Fused kernel: L-layer LSTM (fori_loop over time) + 4-layer MLP autoencoder.
# Gate order matches PyTorch: [i, f, g, o]; g columns are pre-scaled by 2.
# ----------------------------------------------------------------------------
def make_fused_kernel(num_layers, T, H):
    def kernel(x_ref, lstm_ref, ae_ref, out_ref, xg_ref, hseq_ref):
        f32 = jnp.float32

        # ---------------- LSTM layers ----------------
        row = 0
        h = None
        for l in range(num_layers):
            din = 1 if l == 0 else H
            din_pad = 8 if l == 0 else H
            wih = lstm_ref[row:row + din, :]            # (din, 4H)
            row += din_pad
            whh = lstm_ref[row:row + H, :]              # (H, 4H) — kept vreg-resident
            row += H
            bias = lstm_ref[row:row + 1, :]             # (1, 4H)
            row += 8

            # Hoisted input-side projection for ALL timesteps (off the recurrence path).
            if l == 0:
                # Din == 1: K=1 matmul is exactly a VPU broadcast multiply (no MXU).
                xg_ref[...] = x_ref[...] * wih + bias
            else:
                xg_ref[...] = jnp.dot(hseq_ref[...], wih,
                                      preferred_element_type=f32) + bias

            write_seq = (l + 1 < num_layers)

            def step(t, carry, whh=whh, write_seq=write_seq):
                h, c = carry
                r = pl.multiple_of(t * BT, BT)
                gates = xg_ref[pl.ds(r, BT), :] + jnp.dot(
                    h, whh, preferred_element_type=f32)          # (BT, 4H)
                # One full-tile EUP pass; g columns hold 2*g, so tanh(g) = 2*sigmoid(2g) - 1.
                s = jax.nn.sigmoid(gates)
                i_g = s[:, 0:H]
                f_g = s[:, H:2 * H]
                g_g = 2.0 * s[:, 2 * H:3 * H] - 1.0
                o_g = s[:, 3 * H:4 * H]
                c = f_g * c + i_g * g_g
                h = o_g * jnp.tanh(c)
                if write_seq:
                    hseq_ref[pl.ds(r, BT), :] = h
                return (h, c)

            h0 = jnp.zeros((BT, H), f32)
            c0 = jnp.zeros((BT, H), f32)
            h, _ = jax.lax.fori_loop(0, T, step, (h0, c0), unroll=True)

        # ---------------- autoencoder (all widths zero-padded to 128 lanes) ----------------
        r = 0
        w1 = ae_ref[r:r + H, :];    r += H
        b1 = ae_ref[r:r + 1, :];    r += 8
        w2 = ae_ref[r:r + 128, :];  r += 128
        b2 = ae_ref[r:r + 1, :];    r += 8
        w3 = ae_ref[r:r + 128, :];  r += 128
        b3 = ae_ref[r:r + 1, :];    r += 8
        w4 = ae_ref[r:r + 128, :];  r += 128
        b4 = ae_ref[r:r + 1, :];    r += 8
        ident = ae_ref[r:r + H, :]                      # identity -> copies h into lanes [0,H)

        z = jnp.maximum(jnp.dot(h, w1, preferred_element_type=f32) + b1, 0.0)
        z = jnp.maximum(jnp.dot(z, w2, preferred_element_type=f32) + b2, 0.0)
        z = jnp.maximum(jnp.dot(z, w3, preferred_element_type=f32) + b3, 0.0)
        # lanes [0,H): last_hidden, lanes [H,2H): reconstruction — one lane-dense store.
        out_ref[...] = (jnp.dot(h, ident, preferred_element_type=f32)
                        + jnp.dot(z, w4, preferred_element_type=f32) + b4)

    return kernel


# ----------------------------------------------------------------------------
# Model forward: layout prep in plain JAX, one fused Pallas call (grid over batch tiles).
# ----------------------------------------------------------------------------
def model_forward(x, lstm_slab, ae_slab, num_layers):
    B, T, din = x.shape
    assert din == 1
    H = lstm_slab.shape[1] // 4
    assert H % 8 == 0 and 2 * H <= 128
    BP = ((B + BT - 1) // BT) * BT
    nb = BP // BT

    # (B, T, 1) batch-first -> per-batch-tile time-major rows (t*8 + j), flattened.
    xf = jnp.pad(x.astype(jnp.float32), ((0, BP - B), (0, 0), (0, 0)))      # (BP, T, 1)
    xf = xf.reshape(nb, BT, T, 1).transpose(0, 2, 1, 3).reshape(nb * T * BT, 1)

    out = pl.pallas_call(
        make_fused_kernel(num_layers, T, H),
        out_shape=jax.ShapeDtypeStruct((nb * BT, 128), jnp.float32),
        grid=(nb,),
        in_specs=[
            pl.BlockSpec((T * BT, 1), lambda b: (b, 0)),
            pl.BlockSpec(lstm_slab.shape, lambda b: (0, 0)),   # one DMA, reused across tiles
            pl.BlockSpec(ae_slab.shape, lambda b: (0, 0)),     # one DMA, reused across tiles
        ],
        out_specs=pl.BlockSpec((BT, 128), lambda b: (b, 0)),
        scratch_shapes=[
            pltpu.VMEM((T * BT, 4 * H), jnp.float32),   # hoisted gate pre-activations
            pltpu.VMEM((T * BT, H), jnp.float32),       # inter-layer hidden sequence
        ],
        compiler_params=pltpu.CompilerParams(
            dimension_semantics=("parallel",)),         # batch tiles shard across TCs on v7x
    )(xf, lstm_slab, ae_slab)

    return out[:B, :H], out[:B, H:2 * H]


# ----------------------------------------------------------------------------
# Parameter packing: 2 contiguous slabs, all sub-blocks at 8-row-aligned offsets.
# ----------------------------------------------------------------------------
def pack_params(params, H, num_layers):
    f32 = jnp.float32
    # Pre-scale g-gate columns [2H,3H) by 2 so the kernel needs a single sigmoid pass.
    gscale = jnp.concatenate([jnp.ones((2 * H,), f32),
                              jnp.full((H,), 2.0, f32),
                              jnp.ones((H,), f32)])[None, :]

    blocks = []
    for l, layer in enumerate(params['lstm']):
        din = layer['w_ih'].shape[1]
        din_pad = 8 if l == 0 else H
        wih_T = jnp.asarray(layer['w_ih'], f32).T * gscale                    # (din, 4H)
        whh_T = jnp.asarray(layer['w_hh'], f32).T * gscale                    # (H, 4H)
        bias = (jnp.asarray(layer['b_ih'], f32)
                + jnp.asarray(layer['b_hh'], f32))[None, :] * gscale          # (1, 4H)
        blocks.append(jnp.pad(wih_T, ((0, din_pad - din), (0, 0))))
        blocks.append(whh_T)
        blocks.append(jnp.pad(bias, ((0, 7), (0, 0))))
    lstm_slab = jnp.concatenate(blocks, axis=0)

    def emb_w(w, rows, lane_off):
        wT = jnp.asarray(w, f32).T                       # (din, dout)
        out = jnp.zeros((rows, 128), f32)
        return out.at[:wT.shape[0], lane_off:lane_off + wT.shape[1]].set(wT)

    def emb_b(b, lane_off):
        b = jnp.asarray(b, f32)
        out = jnp.zeros((8, 128), f32)
        return out.at[0, lane_off:lane_off + b.shape[0]].set(b)

    ae = params['ae']
    ae_slab = jnp.concatenate([
        emb_w(ae['w1'], H, 0),   emb_b(ae['b1'], 0),
        emb_w(ae['w2'], 128, 0), emb_b(ae['b2'], 0),
        emb_w(ae['w3'], 128, 0), emb_b(ae['b3'], 0),
        emb_w(ae['w4'], 128, H), emb_b(ae['b4'], H),
        emb_w(jnp.eye(H, dtype=f32), H, 0),              # identity pass-through of last_hidden
    ], axis=0)
    return lstm_slab, ae_slab


# ----------------------------------------------------------------------------
# Deterministic parameter init (PyTorch-style uniform bounds, raw torch layout).
# ----------------------------------------------------------------------------
def init_params(key, H, num_layers, input_size=1):
    keys = jax.random.split(key, 8 * num_layers + 16)
    kctr = [0]

    def nxt():
        k = keys[kctr[0]]
        kctr[0] += 1
        return k

    def unif(shape, bound):
        return jax.random.uniform(nxt(), shape, jnp.float32, -bound, bound)

    bound = 1.0 / np.sqrt(H)
    lstm = []
    for l in range(num_layers):
        din = input_size if l == 0 else H
        lstm.append({
            'w_ih': unif((4 * H, din), bound),
            'w_hh': unif((4 * H, H), bound),
            'b_ih': unif((4 * H,), bound),
            'b_hh': unif((4 * H,), bound),
        })

    H4, H8 = H // 4, H // 8

    def linear(dout, din):
        bnd = 1.0 / np.sqrt(din)
        return unif((dout, din), bnd), unif((dout,), bnd)

    ae = {}
    ae['w1'], ae['b1'] = linear(H4, H)
    ae['w2'], ae['b2'] = linear(H8, H4)
    ae['w3'], ae['b3'] = linear(H4, H8)
    ae['w4'], ae['b4'] = linear(H, H4)
    return {'lstm': lstm, 'ae': ae}


# ----------------------------------------------------------------------------
# Pure-JAX reference (for correctness check).
# ----------------------------------------------------------------------------
def reference_forward(x, params):
    B, T, _ = x.shape
    h_in = x.astype(jnp.float32)
    h = None
    for layer in params['lstm']:
        H = layer['w_hh'].shape[1]
        w_ih_T = layer['w_ih'].T
        w_hh_T = layer['w_hh'].T
        b = (layer['b_ih'] + layer['b_hh'])[None, :]
        h = jnp.zeros((B, H), jnp.float32)
        c = jnp.zeros((B, H), jnp.float32)
        outs = []
        for t in range(T):
            if w_ih_T.shape[0] == 1:
                inp = h_in[:, t, :] * w_ih_T       # K=1 matmul == broadcast multiply
            else:
                inp = h_in[:, t, :] @ w_ih_T
            gates = inp + h @ w_hh_T + b
            i_g = jax.nn.sigmoid(gates[:, :H])
            f_g = jax.nn.sigmoid(gates[:, H:2 * H])
            g_g = jnp.tanh(gates[:, 2 * H:3 * H])
            o_g = jax.nn.sigmoid(gates[:, 3 * H:])
            c = f_g * c + i_g * g_g
            h = o_g * jnp.tanh(c)
            outs.append(h)
        h_in = jnp.stack(outs, axis=1)
    ae = params['ae']
    z = jnp.maximum(h @ ae['w1'].T + ae['b1'][None, :], 0.0)
    z = jnp.maximum(z @ ae['w2'].T + ae['b2'][None, :], 0.0)
    z = jnp.maximum(z @ ae['w3'].T + ae['b3'][None, :], 0.0)
    recon = z @ ae['w4'].T + ae['b4'][None, :]
    return h, recon


if __name__ == "__main__":
    # model_config: HIDDEN_DIM_LSTM=32, NUM_LAYERS=2, DROPOUT ignored (eval semantics).
    B, T, H, L = 2, 8, 32, 2

    key = jax.random.PRNGKey(0)
    k_x, k_p = jax.random.split(key)
    x = jax.random.normal(k_x, (B, T, 1), jnp.float32)       # (batch, seq, input_size=1)
    params = init_params(k_p, H, L)
    lstm_slab, ae_slab = pack_params(params, H, L)           # packed once, outside the hot path

    fwd = jax.jit(functools.partial(model_forward, num_layers=L))
    last_hidden, recon = fwd(x, lstm_slab, ae_slab)
    jax.block_until_ready((last_hidden, recon))

    ref_last, ref_recon = reference_forward(x, params)
    np.testing.assert_allclose(np.asarray(last_hidden), np.asarray(ref_last),
                               rtol=1e-5, atol=1e-5)
    np.testing.assert_allclose(np.asarray(recon), np.asarray(ref_recon),
                               rtol=1e-5, atol=1e-5)

    assert last_hidden.shape == (B, H) and recon.shape == (B, H)
    print("KERNEL_OK")
</pallas_src>

<mosaic_0001>
module attributes {stable_mosaic.version = 11 : i64} {
  func.func @kernel(%arg0: i32, %arg1: memref<64x1xf32, #tpu.memory_space<vmem>>, %arg2: memref<120x128xf32, #tpu.memory_space<vmem>>, %arg3: memref<480x128xf32, #tpu.memory_space<vmem>>, %arg4: memref<8x128xf32, #tpu.memory_space<vmem>>, %arg5: memref<64x128xf32, #tpu.memory_space<vmem>>, %arg6: memref<64x32xf32, #tpu.memory_space<vmem>>) attributes {dimension_semantics = [#tpu.dimension_semantics<parallel>], iteration_bounds = array<i64: 1>, scalar_prefetch = 0 : i64, scratch_operands = 2 : i64, tpu.core_type = #tpu.core_type<tc>, window_params = [{transform_indices = @transform_0, window_bounds = array<i64: 64, 1>}, {pipeline_mode = #tpu.pipeline_mode<synchronous>, transform_indices = @transform_1, window_bounds = array<i64: 120, 128>}, {pipeline_mode = #tpu.pipeline_mode<synchronous>, transform_indices = @transform_2, window_bounds = array<i64: 480, 128>}, {transform_indices = @transform_3, window_bounds = array<i64: 8, 128>}]} {
    %c0 = arith.constant 0 : index
    %c0_0 = arith.constant 0 : index
    %0 = vector.load %arg2[%c0, %c0_0] : memref<120x128xf32, #tpu.memory_space<vmem>>, vector<1x128xf32>
    %c8 = arith.constant 8 : index
    %c0_1 = arith.constant 0 : index
    %1 = vector.load %arg2[%c8, %c0_1] : memref<120x128xf32, #tpu.memory_space<vmem>>, vector<32x128xf32>
    %c40 = arith.constant 40 : index
    %c0_2 = arith.constant 0 : index
    %2 = vector.load %arg2[%c40, %c0_2] : memref<120x128xf32, #tpu.memory_space<vmem>>, vector<1x128xf32>
    %c0_3 = arith.constant 0 : index
    %c0_4 = arith.constant 0 : index
    %3 = vector.load %arg1[%c0_3, %c0_4] : memref<64x1xf32, #tpu.memory_space<vmem>>, vector<64x1xf32>
    %4 = vector.broadcast %3 : vector<64x1xf32> to vector<64x128xf32>
    %5 = vector.broadcast %0 : vector<1x128xf32> to vector<64x128xf32>
    %6 = arith.mulf %4, %5 : vector<64x128xf32>
    %7 = vector.broadcast %2 : vector<1x128xf32> to vector<64x128xf32>
    %8 = arith.addf %6, %7 : vector<64x128xf32>
    %c0_5 = arith.constant 0 : index
    %c0_6 = arith.constant 0 : index
    %9 = vector.load %arg5[%c0_5, %c0_6] : memref<64x128xf32, #tpu.memory_space<vmem>>, vector<64x128xf32>
    tpu.vector_store %arg5[%c0_5, %c0_6], %8 {strides = array<i32>} : memref<64x128xf32, #tpu.memory_space<vmem>>, vector<64x128xf32>,
    %cst = arith.constant 0.000000e+00 : f32
    %10 = vector.broadcast %cst : f32 to vector<8x32xf32>
    %cst_7 = arith.constant 0.000000e+00 : f32
    %11 = vector.broadcast %cst_7 : f32 to vector<8x32xf32>
    %c0_i32 = arith.constant 0 : i32
    %c8_i32 = arith.constant 8 : i32
    %12 = arith.muli %c0_i32, %c8_i32 : i32
    %13 = tpu.assume_multiple %12, 8 : i32
    %14 = arith.index_cast %13 : i32 to index
    %c0_8 = arith.constant 0 : index
    %15 = vector.load %arg5[%14, %c0_8] : memref<64x128xf32, #tpu.memory_space<vmem>>, vector<8x128xf32>
    %cst_9 = arith.constant dense<0.000000e+00> : vector<8x128xf32>
    %16 = tpu.matmul %10, %1, %cst_9 {dimension_numbers = #tpu.dot_dimension_numbers<[1], [0], [0], [1], [0, 0, 1, 1], [], []>} : vector<8x32xf32>, vector<32x128xf32>, vector<8x128xf32> -> vector<8x128xf32>
    %17 = arith.addf %15, %16 : vector<8x128xf32>
    %18 = arith.negf %17 : vector<8x128xf32>
    %19 = math.exp %18 : vector<8x128xf32>
    %cst_10 = arith.constant 1.000000e+00 : f32
    %20 = vector.broadcast %cst_10 : f32 to vector<8x128xf32>
    %21 = arith.addf %20, %19 : vector<8x128xf32>
    %22 = arith.divf %20, %21 : vector<8x128xf32>
    %23 = vector.extract_strided_slice %22 {offsets = [0, 0], sizes = [8, 32], strides = [1, 1]} : vector<8x128xf32> to vector<8x32xf32>
    %24 = vector.extract_strided_slice %22 {offsets = [0, 32], sizes = [8, 32], strides = [1, 1]} : vector<8x128xf32> to vector<8x32xf32>
    %25 = vector.extract_strided_slice %22 {offsets = [0, 64], sizes = [8, 32], strides = [1, 1]} : vector<8x128xf32> to vector<8x32xf32>
    %cst_11 = arith.constant 2.000000e+00 : f32
    %26 = vector.broadcast %cst_11 : f32 to vector<8x32xf32>
    %27 = arith.mulf %26, %25 : vector<8x32xf32>
    %cst_12 = arith.constant 1.000000e+00 : f32
    %28 = vector.broadcast %cst_12 : f32 to vector<8x32xf32>
    %29 = arith.subf %27, %28 : vector<8x32xf32>
    %30 = vector.extract_strided_slice %22 {offsets = [0, 96], sizes = [8, 32], strides = [1, 1]} : vector<8x128xf32> to vector<8x32xf32>
    %31 = arith.mulf %24, %11 : vector<8x32xf32>
    %32 = arith.mulf %23, %29 : vector<8x32xf32>
    %33 = arith.addf %31, %32 : vector<8x32xf32>
    %34 = math.tanh %33 : vector<8x32xf32>
    %35 = arith.mulf %30, %34 : vector<8x32xf32>
    %36 = arith.index_cast %13 : i32 to index
    %c0_13 = arith.constant 0 : index
    %37 = vector.load %arg6[%36, %c0_13] : memref<64x32xf32, #tpu.memory_space<vmem>>, vector<8x32xf32>
    tpu.vector_store %arg6[%36, %c0_13], %35 {strides = array<i32>} : memref<64x32xf32, #tpu.memory_space<vmem>>, vector<8x32xf32>,
    %c1_i32 = arith.constant 1 : i32
    %c8_i32_14 = arith.constant 8 : i32
    %38 = arith.muli %c1_i32, %c8_i32_14 : i32
    %39 = tpu.assume_multiple %38, 8 : i32
    %40 = arith.index_cast %39 : i32 to index
    %c0_15 = arith.constant 0 : index
    %41 = vector.load %arg5[%40, %c0_15] : memref<64x128xf32, #tpu.memory_space<vmem>>, vector<8x128xf32>
    %cst_16 = arith.constant dense<0.000000e+00> : vector<8x128xf32>
    %42 = tpu.matmul %35, %1, %cst_16 {dimension_numbers = #tpu.dot_dimension_numbers<[1], [0], [0], [1], [0, 0, 1, 1], [], []>} : vector<8x32xf32>, vector<32x128xf32>, vector<8x128xf32> -> vector<8x128xf32>
    %43 = arith.addf %41, %42 : vector<8x128xf32>
    %44 = arith.negf %43 : vector<8x128xf32>
    %45 = math.exp %44 : vector<8x128xf32>
    %cst_17 = arith.constant 1.000000e+00 : f32
    %46 = vector.broadcast %cst_17 : f32 to vector<8x128xf32>
    %47 = arith.addf %46, %45 : vector<8x128xf32>
    %48 = arith.divf %46, %47 : vector<8x128xf32>
    %49 = vector.extract_strided_slice %48 {offsets = [0, 0], sizes = [8, 32], strides = [1, 1]} : vector<8x128xf32> to vector<8x32xf32>
    %50 = vector.extract_strided_slice %48 {offsets = [0, 32], sizes = [8, 32], strides = [1, 1]} : vector<8x128xf32> to vector<8x32xf32>
    %51 = vector.extract_strided_slice %48 {offsets = [0, 64], sizes = [8, 32], strides = [1, 1]} : vector<8x128xf32> to vector<8x32xf32>
    %cst_18 = arith.constant 2.000000e+00 : f32
    %52 = vector.broadcast %cst_18 : f32 to vector<8x32xf32>
    %53 = arith.mulf %52, %51 : vector<8x32xf32>
    %cst_19 = arith.constant 1.000000e+00 : f32
    %54 = vector.broadcast %cst_19 : f32 to vector<8x32xf32>
    %55 = arith.subf %53, %54 : vector<8x32xf32>
    %56 = vector.extract_strided_slice %48 {offsets = [0, 96], sizes = [8, 32], strides = [1, 1]} : vector<8x128xf32> to vector<8x32xf32>
    %57 = arith.mulf %50, %33 : vector<8x32xf32>
    %58 = arith.mulf %49, %55 : vector<8x32xf32>
    %59 = arith.addf %57, %58 : vector<8x32xf32>
    %60 = math.tanh %59 : vector<8x32xf32>
    %61 = arith.mulf %56, %60 : vector<8x32xf32>
    %62 = arith.index_cast %39 : i32 to index
    %c0_20 = arith.constant 0 : index
    %63 = vector.load %arg6[%62, %c0_20] : memref<64x32xf32, #tpu.memory_space<vmem>>, vector<8x32xf32>
    tpu.vector_store %arg6[%62, %c0_20], %61 {strides = array<i32>} : memref<64x32xf32, #tpu.memory_space<vmem>>, vector<8x32xf32>,
    %c2_i32 = arith.constant 2 : i32
    %c8_i32_21 = arith.constant 8 : i32
    %64 = arith.muli %c2_i32, %c8_i32_21 : i32
    %65 = tpu.assume_multiple %64, 8 : i32
    %66 = arith.index_cast %65 : i32 to index
    %c0_22 = arith.constant 0 : index
    %67 = vector.load %arg5[%66, %c0_22] : memref<64x128xf32, #tpu.memory_space<vmem>>, vector<8x128xf32>
    %cst_23 = arith.constant dense<0.000000e+00> : vector<8x128xf32>
    %68 = tpu.matmul %61, %1, %cst_23 {dimension_numbers = #tpu.dot_dimension_numbers<[1], [0], [0], [1], [0, 0, 1, 1], [], []>} : vector<8x32xf32>, vector<32x128xf32>, vector<8x128xf32> -> vector<8x128xf32>
    %69 = arith.addf %67, %68 : vector<8x128xf32>
    %70 = arith.negf %69 : vector<8x128xf32>
    %71 = math.exp %70 : vector<8x128xf32>
    %cst_24 = arith.constant 1.000000e+00 : f32
    %72 = vector.broadcast %cst_24 : f32 to vector<8x128xf32>
    %73 = arith.addf %72, %71 : vector<8x128xf32>
    %74 = arith.divf %72, %73 : vector<8x128xf32>
    %75 = vector.extract_strided_slice %74 {offsets = [0, 0], sizes = [8, 32], strides = [1, 1]} : vector<8x128xf32> to vector<8x32xf32>
    %76 = vector.extract_strided_slice %74 {offsets = [0, 32], sizes = [8, 32], strides = [1, 1]} : vector<8x128xf32> to vector<8x32xf32>
    %77 = vector.extract_strided_slice %74 {offsets = [0, 64], sizes = [8, 32], strides = [1, 1]} : vector<8x128xf32> to vector<8x32xf32>
    %cst_25 = arith.constant 2.000000e+00 : f32
    %78 = vector.broadcast %cst_25 : f32 to vector<8x32xf32>
    %79 = arith.mulf %78, %77 : vector<8x32xf32>
    %cst_26 = arith.constant 1.000000e+00 : f32
    %80 = vector.broadcast %cst_26 : f32 to vector<8x32xf32>
    %81 = arith.subf %79, %80 : vector<8x32xf32>
    %82 = vector.extract_strided_slice %74 {offsets = [0, 96], sizes = [8, 32], strides = [1, 1]} : vector<8x128xf32> to vector<8x32xf32>
    %83 = arith.mulf %76, %59 : vector<8x32xf32>
    %84 = arith.mulf %75, %81 : vector<8x32xf32>
    %85 = arith.addf %83, %84 : vector<8x32xf32>
    %86 = math.tanh %85 : vector<8x32xf32>
    %87 = arith.mulf %82, %86 : vector<8x32xf32>
    %88 = arith.index_cast %65 : i32 to index
    %c0_27 = arith.constant 0 : index
    %89 = vector.load %arg6[%88, %c0_27] : memref<64x32xf32, #tpu.memory_space<vmem>>, vector<8x32xf32>
    tpu.vector_store %arg6[%88, %c0_27], %87 {strides = array<i32>} : memref<64x32xf32, #tpu.memory_space<vmem>>, vector<8x32xf32>,
    %c3_i32 = arith.constant 3 : i32
    %c8_i32_28 = arith.constant 8 : i32
    %90 = arith.muli %c3_i32, %c8_i32_28 : i32
    %91 = tpu.assume_multiple %90, 8 : i32
    %92 = arith.index_cast %91 : i32 to index
    %c0_29 = arith.constant 0 : index
    %93 = vector.load %arg5[%92, %c0_29] : memref<64x128xf32, #tpu.memory_space<vmem>>, vector<8x128xf32>
    %cst_30 = arith.constant dense<0.000000e+00> : vector<8x128xf32>
    %94 = tpu.matmul %87, %1, %cst_30 {dimension_numbers = #tpu.dot_dimension_numbers<[1], [0], [0], [1], [0, 0, 1, 1], [], []>} : vector<8x32xf32>, vector<32x128xf32>, vector<8x128xf32> -> vector<8x128xf32>
    %95 = arith.addf %93, %94 : vector<8x128xf32>
    %96 = arith.negf %95 : vector<8x128xf32>
    %97 = math.exp %96 : vector<8x128xf32>
    %cst_31 = arith.constant 1.000000e+00 : f32
    %98 = vector.broadcast %cst_31 : f32 to vector<8x128xf32>
    %99 = arith.addf %98, %97 : vector<8x128xf32>
    %100 = arith.divf %98, %99 : vector<8x128xf32>
    %101 = vector.extract_strided_slice %100 {offsets = [0, 0], sizes = [8, 32], strides = [1, 1]} : vector<8x128xf32> to vector<8x32xf32>
    %102 = vector.extract_strided_slice %100 {offsets = [0, 32], sizes = [8, 32], strides = [1, 1]} : vector<8x128xf32> to vector<8x32xf32>
    %103 = vector.extract_strided_slice %100 {offsets = [0, 64], sizes = [8, 32], strides = [1, 1]} : vector<8x128xf32> to vector<8x32xf32>
    %cst_32 = arith.constant 2.000000e+00 : f32
    %104 = vector.broadcast %cst_32 : f32 to vector<8x32xf32>
    %105 = arith.mulf %104, %103 : vector<8x32xf32>
    %cst_33 = arith.constant 1.000000e+00 : f32
    %106 = vector.broadcast %cst_33 : f32 to vector<8x32xf32>
    %107 = arith.subf %105, %106 : vector<8x32xf32>
    %108 = vector.extract_strided_slice %100 {offsets = [0, 96], sizes = [8, 32], strides = [1, 1]} : vector<8x128xf32> to vector<8x32xf32>
    %109 = arith.mulf %102, %85 : vector<8x32xf32>
    %110 = arith.mulf %101, %107 : vector<8x32xf32>
    %111 = arith.addf %109, %110 : vector<8x32xf32>
    %112 = math.tanh %111 : vector<8x32xf32>
    %113 = arith.mulf %108, %112 : vector<8x32xf32>
    %114 = arith.index_cast %91 : i32 to index
    %c0_34 = arith.constant 0 : index
    %115 = vector.load %arg6[%114, %c0_34] : memref<64x32xf32, #tpu.memory_space<vmem>>, vector<8x32xf32>
    tpu.vector_store %arg6[%114, %c0_34], %113 {strides = array<i32>} : memref<64x32xf32, #tpu.memory_space<vmem>>, vector<8x32xf32>,
    %c4_i32 = arith.constant 4 : i32
    %c8_i32_35 = arith.constant 8 : i32
    %116 = arith.muli %c4_i32, %c8_i32_35 : i32
    %117 = tpu.assume_multiple %116, 8 : i32
    %118 = arith.index_cast %117 : i32 to index
    %c0_36 = arith.constant 0 : index
    %119 = vector.load %arg5[%118, %c0_36] : memref<64x128xf32, #tpu.memory_space<vmem>>, vector<8x128xf32>
    %cst_37 = arith.constant dense<0.000000e+00> : vector<8x128xf32>
    %120 = tpu.matmul %113, %1, %cst_37 {dimension_numbers = #tpu.dot_dimension_numbers<[1], [0], [0], [1], [0, 0, 1, 1], [], []>} : vector<8x32xf32>, vector<32x128xf32>, vector<8x128xf32> -> vector<8x128xf32>
    %121 = arith.addf %119, %120 : vector<8x128xf32>
    %122 = arith.negf %121 : vector<8x128xf32>
    %123 = math.exp %122 : vector<8x128xf32>
    %cst_38 = arith.constant 1.000000e+00 : f32
    %124 = vector.broadcast %cst_38 : f32 to vector<8x128xf32>
    %125 = arith.addf %124, %123 : vector<8x128xf32>
    %126 = arith.divf %124, %125 : vector<8x128xf32>
    %127 = vector.extract_strided_slice %126 {offsets = [0, 0], sizes = [8, 32], strides = [1, 1]} : vector<8x128xf32> to vector<8x32xf32>
    %128 = vector.extract_strided_slice %126 {offsets = [0, 32], sizes = [8, 32], strides = [1, 1]} : vector<8x128xf32> to vector<8x32xf32>
    %129 = vector.extract_strided_slice %126 {offsets = [0, 64], sizes = [8, 32], strides = [1, 1]} : vector<8x128xf32> to vector<8x32xf32>
    %cst_39 = arith.constant 2.000000e+00 : f32
    %130 = vector.broadcast %cst_39 : f32 to vector<8x32xf32>
    %131 = arith.mulf %130, %129 : vector<8x32xf32>
    %cst_40 = arith.constant 1.000000e+00 : f32
    %132 = vector.broadcast %cst_40 : f32 to vector<8x32xf32>
    %133 = arith.subf %131, %132 : vector<8x32xf32>
    %134 = vector.extract_strided_slice %126 {offsets = [0, 96], sizes = [8, 32], strides = [1, 1]} : vector<8x128xf32> to vector<8x32xf32>
    %135 = arith.mulf %128, %111 : vector<8x32xf32>
    %136 = arith.mulf %127, %133 : vector<8x32xf32>
    %137 = arith.addf %135, %136 : vector<8x32xf32>
    %138 = math.tanh %137 : vector<8x32xf32>
    %139 = arith.mulf %134, %138 : vector<8x32xf32>
    %140 = arith.index_cast %117 : i32 to index
    %c0_41 = arith.constant 0 : index
    %141 = vector.load %arg6[%140, %c0_41] : memref<64x32xf32, #tpu.memory_space<vmem>>, vector<8x32xf32>
    tpu.vector_store %arg6[%140, %c0_41], %139 {strides = array<i32>} : memref<64x32xf32, #tpu.memory_space<vmem>>, vector<8x32xf32>,
    %c5_i32 = arith.constant 5 : i32
    %c8_i32_42 = arith.constant 8 : i32
    %142 = arith.muli %c5_i32, %c8_i32_42 : i32
    %143 = tpu.assume_multiple %142, 8 : i32
    %144 = arith.index_cast %143 : i32 to index
    %c0_43 = arith.constant 0 : index
    %145 = vector.load %arg5[%144, %c0_43] : memref<64x128xf32, #tpu.memory_space<vmem>>, vector<8x128xf32>
    %cst_44 = arith.constant dense<0.000000e+00> : vector<8x128xf32>
    %146 = tpu.matmul %139, %1, %cst_44 {dimension_numbers = #tpu.dot_dimension_numbers<[1], [0], [0], [1], [0, 0, 1, 1], [], []>} : vector<8x32xf32>, vector<32x128xf32>, vector<8x128xf32> -> vector<8x128xf32>
    %147 = arith.addf %145, %146 : vector<8x128xf32>
    %148 = arith.negf %147 : vector<8x128xf32>
    %149 = math.exp %148 : vector<8x128xf32>
    %cst_45 = arith.constant 1.000000e+00 : f32
    %150 = vector.broadcast %cst_45 : f32 to vector<8x128xf32>
    %151 = arith.addf %150, %149 : vector<8x128xf32>
    %152 = arith.divf %150, %151 : vector<8x128xf32>
    %153 = vector.extract_strided_slice %152 {offsets = [0, 0], sizes = [8, 32], strides = [1, 1]} : vector<8x128xf32> to vector<8x32xf32>
    %154 = vector.extract_strided_slice %152 {offsets = [0, 32], sizes = [8, 32], strides = [1, 1]} : vector<8x128xf32> to vector<8x32xf32>
    %155 = vector.extract_strided_slice %152 {offsets = [0, 64], sizes = [8, 32], strides = [1, 1]} : vector<8x128xf32> to vector<8x32xf32>
    %cst_46 = arith.constant 2.000000e+00 : f32
    %156 = vector.broadcast %cst_46 : f32 to vector<8x32xf32>
    %157 = arith.mulf %156, %155 : vector<8x32xf32>
    %cst_47 = arith.constant 1.000000e+00 : f32
    %158 = vector.broadcast %cst_47 : f32 to vector<8x32xf32>
    %159 = arith.subf %157, %158 : vector<8x32xf32>
    %160 = vector.extract_strided_slice %152 {offsets = [0, 96], sizes = [8, 32], strides = [1, 1]} : vector<8x128xf32> to vector<8x32xf32>
    %161 = arith.mulf %154, %137 : vector<8x32xf32>
    %162 = arith.mulf %153, %159 : vector<8x32xf32>
    %163 = arith.addf %161, %162 : vector<8x32xf32>
    %164 = math.tanh %163 : vector<8x32xf32>
    %165 = arith.mulf %160, %164 : vector<8x32xf32>
    %166 = arith.index_cast %143 : i32 to index
    %c0_48 = arith.constant 0 : index
    %167 = vector.load %arg6[%166, %c0_48] : memref<64x32xf32, #tpu.memory_space<vmem>>, vector<8x32xf32>
    tpu.vector_store %arg6[%166, %c0_48], %165 {strides = array<i32>} : memref<64x32xf32, #tpu.memory_space<vmem>>, vector<8x32xf32>,
    %c6_i32 = arith.constant 6 : i32
    %c8_i32_49 = arith.constant 8 : i32
    %168 = arith.muli %c6_i32, %c8_i32_49 : i32
    %169 = tpu.assume_multiple %168, 8 : i32
    %170 = arith.index_cast %169 : i32 to index
    %c0_50 = arith.constant 0 : index
    %171 = vector.load %arg5[%170, %c0_50] : memref<64x128xf32, #tpu.memory_space<vmem>>, vector<8x128xf32>
    %cst_51 = arith.constant dense<0.000000e+00> : vector<8x128xf32>
    %172 = tpu.matmul %165, %1, %cst_51 {dimension_numbers = #tpu.dot_dimension_numbers<[1], [0], [0], [1], [0, 0, 1, 1], [], []>} : vector<8x32xf32>, vector<32x128xf32>, vector<8x128xf32> -> vector<8x128xf32>
    %173 = arith.addf %171, %172 : vector<8x128xf32>
    %174 = arith.negf %173 : vector<8x128xf32>
    %175 = math.exp %174 : vector<8x128xf32>
    %cst_52 = arith.constant 1.000000e+00 : f32
    %176 = vector.broadcast %cst_52 : f32 to vector<8x128xf32>
    %177 = arith.addf %176, %175 : vector<8x128xf32>
    %178 = arith.divf %176, %177 : vector<8x128xf32>
    %179 = vector.extract_strided_slice %178 {offsets = [0, 0], sizes = [8, 32], strides = [1, 1]} : vector<8x128xf32> to vector<8x32xf32>
    %180 = vector.extract_strided_slice %178 {offsets = [0, 32], sizes = [8, 32], strides = [1, 1]} : vector<8x128xf32> to vector<8x32xf32>
    %181 = vector.extract_strided_slice %178 {offsets = [0, 64], sizes = [8, 32], strides = [1, 1]} : vector<8x128xf32> to vector<8x32xf32>
    %cst_53 = arith.constant 2.000000e+00 : f32
    %182 = vector.broadcast %cst_53 : f32 to vector<8x32xf32>
    %183 = arith.mulf %182, %181 : vector<8x32xf32>
    %cst_54 = arith.constant 1.000000e+00 : f32
    %184 = vector.broadcast %cst_54 : f32 to vector<8x32xf32>
    %185 = arith.subf %183, %184 : vector<8x32xf32>
    %186 = vector.extract_strided_slice %178 {offsets = [0, 96], sizes = [8, 32], strides = [1, 1]} : vector<8x128xf32> to vector<8x32xf32>
    %187 = arith.mulf %180, %163 : vector<8x32xf32>
    %188 = arith.mulf %179, %185 : vector<8x32xf32>
    %189 = arith.addf %187, %188 : vector<8x32xf32>
    %190 = math.tanh %189 : vector<8x32xf32>
    %191 = arith.mulf %186, %190 : vector<8x32xf32>
    %192 = arith.index_cast %169 : i32 to index
    %c0_55 = arith.constant 0 : index
    %193 = vector.load %arg6[%192, %c0_55] : memref<64x32xf32, #tpu.memory_space<vmem>>, vector<8x32xf32>
    tpu.vector_store %arg6[%192, %c0_55], %191 {strides = array<i32>} : memref<64x32xf32, #tpu.memory_space<vmem>>, vector<8x32xf32>,
    %c7_i32 = arith.constant 7 : i32
    %c8_i32_56 = arith.constant 8 : i32
    %194 = arith.muli %c7_i32, %c8_i32_56 : i32
    %195 = tpu.assume_multiple %194, 8 : i32
    %196 = arith.index_cast %195 : i32 to index
    %c0_57 = arith.constant 0 : index
    %197 = vector.load %arg5[%196, %c0_57] : memref<64x128xf32, #tpu.memory_space<vmem>>, vector<8x128xf32>
    %cst_58 = arith.constant dense<0.000000e+00> : vector<8x128xf32>
    %198 = tpu.matmul %191, %1, %cst_58 {dimension_numbers = #tpu.dot_dimension_numbers<[1], [0], [0], [1], [0, 0, 1, 1], [], []>} : vector<8x32xf32>, vector<32x128xf32>, vector<8x128xf32> -> vector<8x128xf32>
    %199 = arith.addf %197, %198 : vector<8x128xf32>
    %200 = arith.negf %199 : vector<8x128xf32>
    %201 = math.exp %200 : vector<8x128xf32>
    %cst_59 = arith.constant 1.000000e+00 : f32
    %202 = vector.broadcast %cst_59 : f32 to vector<8x128xf32>
    %203 = arith.addf %202, %201 : vector<8x128xf32>
    %204 = arith.divf %202, %203 : vector<8x128xf32>
    %205 = vector.extract_strided_slice %204 {offsets = [0, 0], sizes = [8, 32], strides = [1, 1]} : vector<8x128xf32> to vector<8x32xf32>
    %206 = vector.extract_strided_slice %204 {offsets = [0, 32], sizes = [8, 32], strides = [1, 1]} : vector<8x128xf32> to vector<8x32xf32>
    %207 = vector.extract_strided_slice %204 {offsets = [0, 64], sizes = [8, 32], strides = [1, 1]} : vector<8x128xf32> to vector<8x32xf32>
    %cst_60 = arith.constant 2.000000e+00 : f32
    %208 = vector.broadcast %cst_60 : f32 to vector<8x32xf32>
    %209 = arith.mulf %208, %207 : vector<8x32xf32>
    %cst_61 = arith.constant 1.000000e+00 : f32
    %210 = vector.broadcast %cst_61 : f32 to vector<8x32xf32>
    %211 = arith.subf %209, %210 : vector<8x32xf32>
    %212 = vector.extract_strided_slice %204 {offsets = [0, 96], sizes = [8, 32], strides = [1, 1]} : vector<8x128xf32> to vector<8x32xf32>
    %213 = arith.mulf %206, %189 : vector<8x32xf32>
    %214 = arith.mulf %205, %211 : vector<8x32xf32>
    %215 = arith.addf %213, %214 : vector<8x32xf32>
    %216 = math.tanh %215 : vector<8x32xf32>
    %217 = arith.mulf %212, %216 : vector<8x32xf32>
    %218 = arith.index_cast %195 : i32 to index
    %c0_62 = arith.constant 0 : index
    %219 = vector.load %arg6[%218, %c0_62] : memref<64x32xf32, #tpu.memory_space<vmem>>, vector<8x32xf32>
    tpu.vector_store %arg6[%218, %c0_62], %217 {strides = array<i32>} : memref<64x32xf32, #tpu.memory_space<vmem>>, vector<8x32xf32>,
    %c8_i32_63 = arith.constant 8 : i32
    %c48 = arith.constant 48 : index
    %c0_64 = arith.constant 0 : index
    %220 = vector.load %arg2[%c48, %c0_64] : memref<120x128xf32, #tpu.memory_space<vmem>>, vector<32x128xf32>
    %c80 = arith.constant 80 : index
    %c0_65 = arith.constant 0 : index
    %221 = vector.load %arg2[%c80, %c0_65] : memref<120x128xf32, #tpu.memory_space<vmem>>, vector<32x128xf32>
    %c112 = arith.constant 112 : index
    %c0_66 = arith.constant 0 : index
    %222 = vector.load %arg2[%c112, %c0_66] : memref<120x128xf32, #tpu.memory_space<vmem>>, vector<1x128xf32>
    %c0_67 = arith.constant 0 : index
    %c0_68 = arith.constant 0 : index
    %223 = vector.load %arg6[%c0_67, %c0_68] : memref<64x32xf32, #tpu.memory_space<vmem>>, vector<64x32xf32>
    %cst_69 = arith.constant dense<0.000000e+00> : vector<64x128xf32>
    %224 = tpu.matmul %223, %220, %cst_69 {dimension_numbers = #tpu.dot_dimension_numbers<[1], [0], [0], [1], [0, 0, 1, 1], [], []>} : vector<64x32xf32>, vector<32x128xf32>, vector<64x128xf32> -> vector<64x128xf32>
    %225 = vector.broadcast %222 : vector<1x128xf32> to vector<64x128xf32>
    %226 = arith.addf %224, %225 : vector<64x128xf32>
    %c0_70 = arith.constant 0 : index
    %c0_71 = arith.constant 0 : index
    %227 = vector.load %arg5[%c0_70, %c0_71] : memref<64x128xf32, #tpu.memory_space<vmem>>, vector<64x128xf32>
    tpu.vector_store %arg5[%c0_70, %c0_71], %226 {strides = array<i32>} : memref<64x128xf32, #tpu.memory_space<vmem>>, vector<64x128xf32>,
    %cst_72 = arith.constant 0.000000e+00 : f32
    %228 = vector.broadcast %cst_72 : f32 to vector<8x32xf32>
    %cst_73 = arith.constant 0.000000e+00 : f32
    %229 = vector.broadcast %cst_73 : f32 to vector<8x32xf32>
    %c0_i32_74 = arith.constant 0 : i32
    %c8_i32_75 = arith.constant 8 : i32
    %230 = arith.muli %c0_i32_74, %c8_i32_75 : i32
    %231 = tpu.assume_multiple %230, 8 : i32
    %232 = arith.index_cast %231 : i32 to index
    %c0_76 = arith.constant 0 : index
    %233 = vector.load %arg5[%232, %c0_76] : memref<64x128xf32, #tpu.memory_space<vmem>>, vector<8x128xf32>
    %cst_77 = arith.constant dense<0.000000e+00> : vector<8x128xf32>
    %234 = tpu.matmul %228, %221, %cst_77 {dimension_numbers = #tpu.dot_dimension_numbers<[1], [0], [0], [1], [0, 0, 1, 1], [], []>} : vector<8x32xf32>, vector<32x128xf32>, vector<8x128xf32> -> vector<8x128xf32>
    %235 = arith.addf %233, %234 : vector<8x128xf32>
    %236 = arith.negf %235 : vector<8x128xf32>
    %237 = math.exp %236 : vector<8x128xf32>
    %cst_78 = arith.constant 1.000000e+00 : f32
    %238 = vector.broadcast %cst_78 : f32 to vector<8x128xf32>
    %239 = arith.addf %238, %237 : vector<8x128xf32>
    %240 = arith.divf %238, %239 : vector<8x128xf32>
    %241 = vector.extract_strided_slice %240 {offsets = [0, 0], sizes = [8, 32], strides = [1, 1]} : vector<8x128xf32> to vector<8x32xf32>
    %242 = vector.extract_strided_slice %240 {offsets = [0, 32], sizes = [8, 32], strides = [1, 1]} : vector<8x128xf32> to vector<8x32xf32>
    %243 = vector.extract_strided_slice %240 {offsets = [0, 64], sizes = [8, 32], strides = [1, 1]} : vector<8x128xf32> to vector<8x32xf32>
    %cst_79 = arith.constant 2.000000e+00 : f32
    %244 = vector.broadcast %cst_79 : f32 to vector<8x32xf32>
    %245 = arith.mulf %244, %243 : vector<8x32xf32>
    %cst_80 = arith.constant 1.000000e+00 : f32
    %246 = vector.broadcast %cst_80 : f32 to vector<8x32xf32>
    %247 = arith.subf %245, %246 : vector<8x32xf32>
    %248 = vector.extract_strided_slice %240 {offsets = [0, 96], sizes = [8, 32], strides = [1, 1]} : vector<8x128xf32> to vector<8x32xf32>
    %249 = arith.mulf %242, %229 : vector<8x32xf32>
    %250 = arith.mulf %241, %247 : vector<8x32xf32>
    %251 = arith.addf %249, %250 : vector<8x32xf32>
    %252 = math.tanh %251 : vector<8x32xf32>
    %253 = arith.mulf %248, %252 : vector<8x32xf32>
    %c1_i32_81 = arith.constant 1 : i32
    %c8_i32_82 = arith.constant 8 : i32
    %254 = arith.muli %c1_i32_81, %c8_i32_82 : i32
    %255 = tpu.assume_multiple %254, 8 : i32
    %256 = arith.index_cast %255 : i32 to index
    %c0_83 = arith.constant 0 : index
    %257 = vector.load %arg5[%256, %c0_83] : memref<64x128xf32, #tpu.memory_space<vmem>>, vector<8x128xf32>
    %cst_84 = arith.constant dense<0.000000e+00> : vector<8x128xf32>
    %258 = tpu.matmul %253, %221, %cst_84 {dimension_numbers = #tpu.dot_dimension_numbers<[1], [0], [0], [1], [0, 0, 1, 1], [], []>} : vector<8x32xf32>, vector<32x128xf32>, vector<8x128xf32> -> vector<8x128xf32>
    %259 = arith.addf %257, %258 : vector<8x128xf32>
    %260 = arith.negf %259 : vector<8x128xf32>
    %261 = math.exp %260 : vector<8x128xf32>
    %cst_85 = arith.constant 1.000000e+00 : f32
    %262 = vector.broadcast %cst_85 : f32 to vector<8x128xf32>
    %263 = arith.addf %262, %261 : vector<8x128xf32>
    %264 = arith.divf %262, %263 : vector<8x128xf32>
    %265 = vector.extract_strided_slice %264 {offsets = [0, 0], sizes = [8, 32], strides = [1, 1]} : vector<8x128xf32> to vector<8x32xf32>
    %266 = vector.extract_strided_slice %264 {offsets = [0, 32], sizes = [8, 32], strides = [1, 1]} : vector<8x128xf32> to vector<8x32xf32>
    %267 = vector.extract_strided_slice %264 {offsets = [0, 64], sizes = [8, 32], strides = [1, 1]} : vector<8x128xf32> to vector<8x32xf32>
    %cst_86 = arith.constant 2.000000e+00 : f32
    %268 = vector.broadcast %cst_86 : f32 to vector<8x32xf32>
    %269 = arith.mulf %268, %267 : vector<8x32xf32>
    %cst_87 = arith.constant 1.000000e+00 : f32
    %270 = vector.broadcast %cst_87 : f32 to vector<8x32xf32>
    %271 = arith.subf %269, %270 : vector<8x32xf32>
    %272 = vector.extract_strided_slice %264 {offsets = [0, 96], sizes = [8, 32], strides = [1, 1]} : vector<8x128xf32> to vector<8x32xf32>
    %273 = arith.mulf %266, %251 : vector<8x32xf32>
    %274 = arith.mulf %265, %271 : vector<8x32xf32>
    %275 = arith.addf %273, %274 : vector<8x32xf32>
    %276 = math.tanh %275 : vector<8x32xf32>
    %277 = arith.mulf %272, %276 : vector<8x32xf32>
    %c2_i32_88 = arith.constant 2 : i32
    %c8_i32_89 = arith.constant 8 : i32
    %278 = arith.muli %c2_i32_88, %c8_i32_89 : i32
    %279 = tpu.assume_multiple %278, 8 : i32
    %280 = arith.index_cast %279 : i32 to index
    %c0_90 = arith.constant 0 : index
    %281 = vector.load %arg5[%280, %c0_90] : memref<64x128xf32, #tpu.memory_space<vmem>>, vector<8x128xf32>
    %cst_91 = arith.constant dense<0.000000e+00> : vector<8x128xf32>
    %282 = tpu.matmul %277, %221, %cst_91 {dimension_numbers = #tpu.dot_dimension_numbers<[1], [0], [0], [1], [0, 0, 1, 1], [], []>} : vector<8x32xf32>, vector<32x128xf32>, vector<8x128xf32> -> vector<8x128xf32>
    %283 = arith.addf %281, %282 : vector<8x128xf32>
    %284 = arith.negf %283 : vector<8x128xf32>
    %285 = math.exp %284 : vector<8x128xf32>
    %cst_92 = arith.constant 1.000000e+00 : f32
    %286 = vector.broadcast %cst_92 : f32 to vector<8x128xf32>
    %287 = arith.addf %286, %285 : vector<8x128xf32>
    %288 = arith.divf %286, %287 : vector<8x128xf32>
    %289 = vector.extract_strided_slice %288 {offsets = [0, 0], sizes = [8, 32], strides = [1, 1]} : vector<8x128xf32> to vector<8x32xf32>
    %290 = vector.extract_strided_slice %288 {offsets = [0, 32], sizes = [8, 32], strides = [1, 1]} : vector<8x128xf32> to vector<8x32xf32>
    %291 = vector.extract_strided_slice %288 {offsets = [0, 64], sizes = [8, 32], strides = [1, 1]} : vector<8x128xf32> to vector<8x32xf32>
    %cst_93 = arith.constant 2.000000e+00 : f32
    %292 = vector.broadcast %cst_93 : f32 to vector<8x32xf32>
    %293 = arith.mulf %292, %291 : vector<8x32xf32>
    %cst_94 = arith.constant 1.000000e+00 : f32
    %294 = vector.broadcast %cst_94 : f32 to vector<8x32xf32>
    %295 = arith.subf %293, %294 : vector<8x32xf32>
    %296 = vector.extract_strided_slice %288 {offsets = [0, 96], sizes = [8, 32], strides = [1, 1]} : vector<8x128xf32> to vector<8x32xf32>
    %297 = arith.mulf %290, %275 : vector<8x32xf32>
    %298 = arith.mulf %289, %295 : vector<8x32xf32>
    %299 = arith.addf %297, %298 : vector<8x32xf32>
    %300 = math.tanh %299 : vector<8x32xf32>
    %301 = arith.mulf %296, %300 : vector<8x32xf32>
    %c3_i32_95 = arith.constant 3 : i32
    %c8_i32_96 = arith.constant 8 : i32
    %302 = arith.muli %c3_i32_95, %c8_i32_96 : i32
    %303 = tpu.assume_multiple %302, 8 : i32
    %304 = arith.index_cast %303 : i32 to index
    %c0_97 = arith.constant 0 : index
    %305 = vector.load %arg5[%304, %c0_97] : memref<64x128xf32, #tpu.memory_space<vmem>>, vector<8x128xf32>
    %cst_98 = arith.constant dense<0.000000e+00> : vector<8x128xf32>
    %306 = tpu.matmul %301, %221, %cst_98 {dimension_numbers = #tpu.dot_dimension_numbers<[1], [0], [0], [1], [0, 0, 1, 1], [], []>} : vector<8x32xf32>, vector<32x128xf32>, vector<8x128xf32> -> vector<8x128xf32>
    %307 = arith.addf %305, %306 : vector<8x128xf32>
    %308 = arith.negf %307 : vector<8x128xf32>
    %309 = math.exp %308 : vector<8x128xf32>
    %cst_99 = arith.constant 1.000000e+00 : f32
    %310 = vector.broadcast %cst_99 : f32 to vector<8x128xf32>
    %311 = arith.addf %310, %309 : vector<8x128xf32>
    %312 = arith.divf %310, %311 : vector<8x128xf32>
    %313 = vector.extract_strided_slice %312 {offsets = [0, 0], sizes = [8, 32], strides = [1, 1]} : vector<8x128xf32> to vector<8x32xf32>
    %314 = vector.extract_strided_slice %312 {offsets = [0, 32], sizes = [8, 32], strides = [1, 1]} : vector<8x128xf32> to vector<8x32xf32>
    %315 = vector.extract_strided_slice %312 {offsets = [0, 64], sizes = [8, 32], strides = [1, 1]} : vector<8x128xf32> to vector<8x32xf32>
    %cst_100 = arith.constant 2.000000e+00 : f32
    %316 = vector.broadcast %cst_100 : f32 to vector<8x32xf32>
    %317 = arith.mulf %316, %315 : vector<8x32xf32>
    %cst_101 = arith.constant 1.000000e+00 : f32
    %318 = vector.broadcast %cst_101 : f32 to vector<8x32xf32>
    %319 = arith.subf %317, %318 : vector<8x32xf32>
    %320 = vector.extract_strided_slice %312 {offsets = [0, 96], sizes = [8, 32], strides = [1, 1]} : vector<8x128xf32> to vector<8x32xf32>
    %321 = arith.mulf %314, %299 : vector<8x32xf32>
    %322 = arith.mulf %313, %319 : vector<8x32xf32>
    %323 = arith.addf %321, %322 : vector<8x32xf32>
    %324 = math.tanh %323 : vector<8x32xf32>
    %325 = arith.mulf %320, %324 : vector<8x32xf32>
    %c4_i32_102 = arith.constant 4 : i32
    %c8_i32_103 = arith.constant 8 : i32
    %326 = arith.muli %c4_i32_102, %c8_i32_103 : i32
    %327 = tpu.assume_multiple %326, 8 : i32
    %328 = arith.index_cast %327 : i32 to index
    %c0_104 = arith.constant 0 : index
    %329 = vector.load %arg5[%328, %c0_104] : memref<64x128xf32, #tpu.memory_space<vmem>>, vector<8x128xf32>
    %cst_105 = arith.constant dense<0.000000e+00> : vector<8x128xf32>
    %330 = tpu.matmul %325, %221, %cst_105 {dimension_numbers = #tpu.dot_dimension_numbers<[1], [0], [0], [1], [0, 0, 1, 1], [], []>} : vector<8x32xf32>, vector<32x128xf32>, vector<8x128xf32> -> vector<8x128xf32>
    %331 = arith.addf %329, %330 : vector<8x128xf32>
    %332 = arith.negf %331 : vector<8x128xf32>
    %333 = math.exp %332 : vector<8x128xf32>
    %cst_106 = arith.constant 1.000000e+00 : f32
    %334 = vector.broadcast %cst_106 : f32 to vector<8x128xf32>
    %335 = arith.addf %334, %333 : vector<8x128xf32>
    %336 = arith.divf %334, %335 : vector<8x128xf32>
    %337 = vector.extract_strided_slice %336 {offsets = [0, 0], sizes = [8, 32], strides = [1, 1]} : vector<8x128xf32> to vector<8x32xf32>
    %338 = vector.extract_strided_slice %336 {offsets = [0, 32], sizes = [8, 32], strides = [1, 1]} : vector<8x128xf32> to vector<8x32xf32>
    %339 = vector.extract_strided_slice %336 {offsets = [0, 64], sizes = [8, 32], strides = [1, 1]} : vector<8x128xf32> to vector<8x32xf32>
    %cst_107 = arith.constant 2.000000e+00 : f32
    %340 = vector.broadcast %cst_107 : f32 to vector<8x32xf32>
    %341 = arith.mulf %340, %339 : vector<8x32xf32>
    %cst_108 = arith.constant 1.000000e+00 : f32
    %342 = vector.broadcast %cst_108 : f32 to vector<8x32xf32>
    %343 = arith.subf %341, %342 : vector<8x32xf32>
    %344 = vector.extract_strided_slice %336 {offsets = [0, 96], sizes = [8, 32], strides = [1, 1]} : vector<8x128xf32> to vector<8x32xf32>
    %345 = arith.mulf %338, %323 : vector<8x32xf32>
    %346 = arith.mulf %337, %343 : vector<8x32xf32>
    %347 = arith.addf %345, %346 : vector<8x32xf32>
    %348 = math.tanh %347 : vector<8x32xf32>
    %349 = arith.mulf %344, %348 : vector<8x32xf32>
    %c5_i32_109 = arith.constant 5 : i32
    %c8_i32_110 = arith.constant 8 : i32
    %350 = arith.muli %c5_i32_109, %c8_i32_110 : i32
    %351 = tpu.assume_multiple %350, 8 : i32
    %352 = arith.index_cast %351 : i32 to index
    %c0_111 = arith.constant 0 : index
    %353 = vector.load %arg5[%352, %c0_111] : memref<64x128xf32, #tpu.memory_space<vmem>>, vector<8x128xf32>
    %cst_112 = arith.constant dense<0.000000e+00> : vector<8x128xf32>
    %354 = tpu.matmul %349, %221, %cst_112 {dimension_numbers = #tpu.dot_dimension_numbers<[1], [0], [0], [1], [0, 0, 1, 1], [], []>} : vector<8x32xf32>, vector<32x128xf32>, vector<8x128xf32> -> vector<8x128xf32>
    %355 = arith.addf %353, %354 : vector<8x128xf32>
    %356 = arith.negf %355 : vector<8x128xf32>
    %357 = math.exp %356 : vector<8x128xf32>
    %cst_113 = arith.constant 1.000000e+00 : f32
    %358 = vector.broadcast %cst_113 : f32 to vector<8x128xf32>
    %359 = arith.addf %358, %357 : vector<8x128xf32>
    %360 = arith.divf %358, %359 : vector<8x128xf32>
    %361 = vector.extract_strided_slice %360 {offsets = [0, 0], sizes = [8, 32], strides = [1, 1]} : vector<8x128xf32> to vector<8x32xf32>
    %362 = vector.extract_strided_slice %360 {offsets = [0, 32], sizes = [8, 32], strides = [1, 1]} : vector<8x128xf32> to vector<8x32xf32>
    %363 = vector.extract_strided_slice %360 {offsets = [0, 64], sizes = [8, 32], strides = [1, 1]} : vector<8x128xf32> to vector<8x32xf32>
    %cst_114 = arith.constant 2.000000e+00 : f32
    %364 = vector.broadcast %cst_114 : f32 to vector<8x32xf32>
    %365 = arith.mulf %364, %363 : vector<8x32xf32>
    %cst_115 = arith.constant 1.000000e+00 : f32
    %366 = vector.broadcast %cst_115 : f32 to vector<8x32xf32>
    %367 = arith.subf %365, %366 : vector<8x32xf32>
    %368 = vector.extract_strided_slice %360 {offsets = [0, 96], sizes = [8, 32], strides = [1, 1]} : vector<8x128xf32> to vector<8x32xf32>
    %369 = arith.mulf %362, %347 : vector<8x32xf32>
    %370 = arith.mulf %361, %367 : vector<8x32xf32>
    %371 = arith.addf %369, %370 : vector<8x32xf32>
    %372 = math.tanh %371 : vector<8x32xf32>
    %373 = arith.mulf %368, %372 : vector<8x32xf32>
    %c6_i32_116 = arith.constant 6 : i32
    %c8_i32_117 = arith.constant 8 : i32
    %374 = arith.muli %c6_i32_116, %c8_i32_117 : i32
    %375 = tpu.assume_multiple %374, 8 : i32
    %376 = arith.index_cast %375 : i32 to index
    %c0_118 = arith.constant 0 : index
    %377 = vector.load %arg5[%376, %c0_118] : memref<64x128xf32, #tpu.memory_space<vmem>>, vector<8x128xf32>
    %cst_119 = arith.constant dense<0.000000e+00> : vector<8x128xf32>
    %378 = tpu.matmul %373, %221, %cst_119 {dimension_numbers = #tpu.dot_dimension_numbers<[1], [0], [0], [1], [0, 0, 1, 1], [], []>} : vector<8x32xf32>, vector<32x128xf32>, vector<8x128xf32> -> vector<8x128xf32>
    %379 = arith.addf %377, %378 : vector<8x128xf32>
    %380 = arith.negf %379 : vector<8x128xf32>
    %381 = math.exp %380 : vector<8x128xf32>
    %cst_120 = arith.constant 1.000000e+00 : f32
    %382 = vector.broadcast %cst_120 : f32 to vector<8x128xf32>
    %383 = arith.addf %382, %381 : vector<8x128xf32>
    %384 = arith.divf %382, %383 : vector<8x128xf32>
    %385 = vector.extract_strided_slice %384 {offsets = [0, 0], sizes = [8, 32], strides = [1, 1]} : vector<8x128xf32> to vector<8x32xf32>
    %386 = vector.extract_strided_slice %384 {offsets = [0, 32], sizes = [8, 32], strides = [1, 1]} : vector<8x128xf32> to vector<8x32xf32>
    %387 = vector.extract_strided_slice %384 {offsets = [0, 64], sizes = [8, 32], strides = [1, 1]} : vector<8x128xf32> to vector<8x32xf32>
    %cst_121 = arith.constant 2.000000e+00 : f32
    %388 = vector.broadcast %cst_121 : f32 to vector<8x32xf32>
    %389 = arith.mulf %388, %387 : vector<8x32xf32>
    %cst_122 = arith.constant 1.000000e+00 : f32
    %390 = vector.broadcast %cst_122 : f32 to vector<8x32xf32>
    %391 = arith.subf %389, %390 : vector<8x32xf32>
    %392 = vector.extract_strided_slice %384 {offsets = [0, 96], sizes = [8, 32], strides = [1, 1]} : vector<8x128xf32> to vector<8x32xf32>
    %393 = arith.mulf %386, %371 : vector<8x32xf32>
    %394 = arith.mulf %385, %391 : vector<8x32xf32>
    %395 = arith.addf %393, %394 : vector<8x32xf32>
    %396 = math.tanh %395 : vector<8x32xf32>
    %397 = arith.mulf %392, %396 : vector<8x32xf32>
    %c7_i32_123 = arith.constant 7 : i32
    %c8_i32_124 = arith.constant 8 : i32
    %398 = arith.muli %c7_i32_123, %c8_i32_124 : i32
    %399 = tpu.assume_multiple %398, 8 : i32
    %400 = arith.index_cast %399 : i32 to index
    %c0_125 = arith.constant 0 : index
    %401 = vector.load %arg5[%400, %c0_125] : memref<64x128xf32, #tpu.memory_space<vmem>>, vector<8x128xf32>
    %cst_126 = arith.constant dense<0.000000e+00> : vector<8x128xf32>
    %402 = tpu.matmul %397, %221, %cst_126 {dimension_numbers = #tpu.dot_dimension_numbers<[1], [0], [0], [1], [0, 0, 1, 1], [], []>} : vector<8x32xf32>, vector<32x128xf32>, vector<8x128xf32> -> vector<8x128xf32>
    %403 = arith.addf %401, %402 : vector<8x128xf32>
    %404 = arith.negf %403 : vector<8x128xf32>
    %405 = math.exp %404 : vector<8x128xf32>
    %cst_127 = arith.constant 1.000000e+00 : f32
    %406 = vector.broadcast %cst_127 : f32 to vector<8x128xf32>
    %407 = arith.addf %406, %405 : vector<8x128xf32>
    %408 = arith.divf %406, %407 : vector<8x128xf32>
    %409 = vector.extract_strided_slice %408 {offsets = [0, 0], sizes = [8, 32], strides = [1, 1]} : vector<8x128xf32> to vector<8x32xf32>
    %410 = vector.extract_strided_slice %408 {offsets = [0, 32], sizes = [8, 32], strides = [1, 1]} : vector<8x128xf32> to vector<8x32xf32>
    %411 = vector.extract_strided_slice %408 {offsets = [0, 64], sizes = [8, 32], strides = [1, 1]} : vector<8x128xf32> to vector<8x32xf32>
    %cst_128 = arith.constant 2.000000e+00 : f32
    %412 = vector.broadcast %cst_128 : f32 to vector<8x32xf32>
    %413 = arith.mulf %412, %411 : vector<8x32xf32>
    %cst_129 = arith.constant 1.000000e+00 : f32
    %414 = vector.broadcast %cst_129 : f32 to vector<8x32xf32>
    %415 = arith.subf %413, %414 : vector<8x32xf32>
    %416 = vector.extract_strided_slice %408 {offsets = [0, 96], sizes = [8, 32], strides = [1, 1]} : vector<8x128xf32> to vector<8x32xf32>
    %417 = arith.mulf %410, %395 : vector<8x32xf32>
    %418 = arith.mulf %409, %415 : vector<8x32xf32>
    %419 = arith.addf %417, %418 : vector<8x32xf32>
    %420 = math.tanh %419 : vector<8x32xf32>
    %421 = arith.mulf %416, %420 : vector<8x32xf32>
    %c8_i32_130 = arith.constant 8 : i32
    %c0_131 = arith.constant 0 : index
    %c0_132 = arith.constant 0 : index
    %422 = vector.load %arg3[%c0_131, %c0_132] : memref<480x128xf32, #tpu.memory_space<vmem>>, vector<32x128xf32>
    %c32 = arith.constant 32 : index
    %c0_133 = arith.constant 0 : index
    %423 = vector.load %arg3[%c32, %c0_133] : memref<480x128xf32, #tpu.memory_space<vmem>>, vector<1x128xf32>
    %c40_134 = arith.constant 40 : index
    %c0_135 = arith.constant 0 : index
    %424 = vector.load %arg3[%c40_134, %c0_135] : memref<480x128xf32, #tpu.memory_space<vmem>>, vector<128x128xf32>
    %c168 = arith.constant 168 : index
    %c0_136 = arith.constant 0 : index
    %425 = vector.load %arg3[%c168, %c0_136] : memref<480x128xf32, #tpu.memory_space<vmem>>, vector<1x128xf32>
    %c176 = arith.constant 176 : index
    %c0_137 = arith.constant 0 : index
    %426 = vector.load %arg3[%c176, %c0_137] : memref<480x128xf32, #tpu.memory_space<vmem>>, vector<128x128xf32>
    %c304 = arith.constant 304 : index
    %c0_138 = arith.constant 0 : index
    %427 = vector.load %arg3[%c304, %c0_138] : memref<480x128xf32, #tpu.memory_space<vmem>>, vector<1x128xf32>
    %c312 = arith.constant 312 : index
    %c0_139 = arith.constant 0 : index
    %428 = vector.load %arg3[%c312, %c0_139] : memref<480x128xf32, #tpu.memory_space<vmem>>, vector<128x128xf32>
    %c440 = arith.constant 440 : index
    %c0_140 = arith.constant 0 : index
    %429 = vector.load %arg3[%c440, %c0_140] : memref<480x128xf32, #tpu.memory_space<vmem>>, vector<1x128xf32>
    %c448 = arith.constant 448 : index
    %c0_141 = arith.constant 0 : index
    %430 = vector.load %arg3[%c448, %c0_141] : memref<480x128xf32, #tpu.memory_space<vmem>>, vector<32x128xf32>
    %cst_142 = arith.constant dense<0.000000e+00> : vector<8x128xf32>
    %431 = tpu.matmul %421, %422, %cst_142 {dimension_numbers = #tpu.dot_dimension_numbers<[1], [0], [0], [1], [0, 0, 1, 1], [], []>} : vector<8x32xf32>, vector<32x128xf32>, vector<8x128xf32> -> vector<8x128xf32>
    %432 = vector.broadcast %423 : vector<1x128xf32> to vector<8x128xf32>
    %433 = arith.addf %431, %432 : vector<8x128xf32>
    %cst_143 = arith.constant 0.000000e+00 : f32
    %434 = vector.broadcast %cst_143 : f32 to vector<8x128xf32>
    %435 = arith.maximumf %433, %434 : vector<8x128xf32>
    %cst_144 = arith.constant dense<0.000000e+00> : vector<8x128xf32>
    %436 = tpu.matmul %435, %424, %cst_144 {dimension_numbers = #tpu.dot_dimension_numbers<[1], [0], [0], [1], [0, 0, 1, 1], [], []>} : vector<8x128xf32>, vector<128x128xf32>, vector<8x128xf32> -> vector<8x128xf32>
    %437 = vector.broadcast %425 : vector<1x128xf32> to vector<8x128xf32>
    %438 = arith.addf %436, %437 : vector<8x128xf32>
    %cst_145 = arith.constant 0.000000e+00 : f32
    %439 = vector.broadcast %cst_145 : f32 to vector<8x128xf32>
    %440 = arith.maximumf %438, %439 : vector<8x128xf32>
    %cst_146 = arith.constant dense<0.000000e+00> : vector<8x128xf32>
    %441 = tpu.matmul %440, %426, %cst_146 {dimension_numbers = #tpu.dot_dimension_numbers<[1], [0], [0], [1], [0, 0, 1, 1], [], []>} : vector<8x128xf32>, vector<128x128xf32>, vector<8x128xf32> -> vector<8x128xf32>
    %442 = vector.broadcast %427 : vector<1x128xf32> to vector<8x128xf32>
    %443 = arith.addf %441, %442 : vector<8x128xf32>
    %cst_147 = arith.constant 0.000000e+00 : f32
    %444 = vector.broadcast %cst_147 : f32 to vector<8x128xf32>
    %445 = arith.maximumf %443, %444 : vector<8x128xf32>
    %cst_148 = arith.constant dense<0.000000e+00> : vector<8x128xf32>
    %446 = tpu.matmul %421, %430, %cst_148 {dimension_numbers = #tpu.dot_dimension_numbers<[1], [0], [0], [1], [0, 0, 1, 1], [], []>} : vector<8x32xf32>, vector<32x128xf32>, vector<8x128xf32> -> vector<8x128xf32>
    %cst_149 = arith.constant dense<0.000000e+00> : vector<8x128xf32>
    %447 = tpu.matmul %445, %428, %cst_149 {dimension_numbers = #tpu.dot_dimension_numbers<[1], [0], [0], [1], [0, 0, 1, 1], [], []>} : vector<8x128xf32>, vector<128x128xf32>, vector<8x128xf32> -> vector<8x128xf32>
    %448 = arith.addf %446, %447 : vector<8x128xf32>
    %449 = vector.broadcast %429 : vector<1x128xf32> to vector<8x128xf32>
    %450 = arith.addf %448, %449 : vector<8x128xf32>
    %c0_150 = arith.constant 0 : index
    %c0_151 = arith.constant 0 : index
    %451 = vector.load %arg4[%c0_150, %c0_151] : memref<8x128xf32, #tpu.memory_space<vmem>>, vector<8x128xf32>
    tpu.vector_store %arg4[%c0_150, %c0_151], %450 {strides = array<i32>} : memref<8x128xf32, #tpu.memory_space<vmem>>, vector<8x128xf32>,
    return
  }
  func.func @transform_0(%arg0: i32) -> (i32, i32) {
    %c0_i32 = arith.constant 0 : i32
    %c0_i32_0 = arith.constant 0 : i32
    return %arg0, %c0_i32 : i32, i32
  }
  func.func @transform_1(%arg0: i32) -> (i32, i32) {
    %c0_i32 = arith.constant 0 : i32
    %c0_i32_0 = arith.constant 0 : i32
    %c0_i32_1 = arith.constant 0 : i32
    return %c0_i32, %c0_i32_0 : i32, i32
  }
  func.func @transform_2(%arg0: i32) -> (i32, i32) {
    %c0_i32 = arith.constant 0 : i32
    %c0_i32_0 = arith.constant 0 : i32
    %c0_i32_1 = arith.constant 0 : i32
    return %c0_i32, %c0_i32_0 : i32, i32
  }
  func.func @transform_3(%arg0: i32) -> (i32, i32) {
    %c0_i32 = arith.constant 0 : i32
    %c0_i32_0 = arith.constant 0 : i32
    return %arg0, %c0_i32 : i32, i32
  }
}

</mosaic_0001>

<llo_original>
// kernel: model_forward.1
$region0: #{model_forward.1}
  #allocation0 [shape = 'u32[]', space=smem, size = 0x4, offset = 0x4, fixed_abs, tag = 'smem constant byte address 0x4 - core index']
  #allocation1 [shape = 'u32[144,128]{1,0:T(1,128)}', space=vmem, size = 0x12000, scoped, tag = 'internal scratch']
  #allocation2 [shape = 'f32[64,128]{1,0:T(8,128)}', space=vmem, size = 0x8000, scoped, tag = 'scratch operand']
  #allocation3 [shape = 'f32[64,32]{1,0:T(8,128)}', space=vmem, size = 0x8000, scoped, tag = 'scratch operand']
  %s0 = inlined_call_operand.vmem [shape: f32[64,1], index: 0, kind: input, shape index: {}]
  %s1 = inlined_call_operand.hbm [shape: f32[120,128], index: 1, kind: input, shape index: {}]
  %s2 = inlined_call_operand.hbm [shape: f32[480,128], index: 2, kind: input, shape index: {}]
  %s3 = inlined_call_operand.vmem [shape: f32[8,128], index: 3, kind: output, shape index: {}]
  %s4 = sld [smem:[#allocation0]]
  $region30: #{model_forward.1} parent=0
    _
  %s6 = ssub.s32 1, %s4
  %s7 = scalar_select 0, %s6, %s4
  $region1: #{model_forward.1} parent=0
    #allocation4 [shape = 'u8[61440]{0}', space=vmem, size = 0xf000, scoped, tag = 'input window, operand 1, single buffered']
    #allocation5 [shape = 's32[1]{0}', space=sflag, size = 0x4, scoped, tag = 'scoped memory for model_forward.1']
    #allocation6 [shape = 'u8[245760]{0}', space=vmem, size = 0x3c000, scoped, tag = 'input window, operand 2, single buffered']
    #allocation7 [shape = 's32[1]{0}', space=sflag, size = 0x4, scoped, tag = 'scoped memory for model_forward.1']
    %8 = vsyncpa [#allocation5], 0
    %9 = vsyncpa [#allocation7], 0
    // Predicated region
    $region2: #{model_forward.1} parent=1 // pred_check
      _
    $region3: #{model_forward.1} parent=1 // pred_check_branch
      %11 = sbr.rel (0) target = $region5
    $region4: #{model_forward.1} parent=1 // pred_region
      _
    $region5: #{model_forward.1} parent=1 // pred_fallthru
      _
    // Predicated region
    $region6: #{model_forward.1} parent=1 // pred_check
      _
    $region7: #{model_forward.1} parent=1 // pred_check_branch
      %13 = sbr.rel (0) target = $region9
    $region8: #{model_forward.1} parent=1 // pred_region
      %s15 = ssub.s32 1920, 1920
      %16 = vsyncadd [#allocation5], %s15
      %s17 = sshll.u32 [#allocation4], 4
      %s18 = int_to_ptr.vmem [resolvable:$true] %s17
      %23 = dma.hbm_to_vmem [thread:$0]  %s1, 1920, %s18, [#allocation5], 128, 128, 8
    $region9: #{model_forward.1} parent=1 // pred_fallthru
      _
    // Predicated region
    $region10: #{model_forward.1} parent=1 // pred_check
      _
    $region11: #{model_forward.1} parent=1 // pred_check_branch
      %25 = sbr.rel (0) target = $region13
    $region12: #{model_forward.1} parent=1 // pred_region
      %s27 = ssub.s32 7680, 7680
      %28 = vsyncadd [#allocation7], %s27
      %s29 = sshll.u32 [#allocation6], 4
      %s30 = int_to_ptr.vmem [resolvable:$true] %s29
      %35 = dma.hbm_to_vmem [thread:$0]  %s2, 7680, %s30, [#allocation7], 128, 128, 8
    $region13: #{model_forward.1} parent=1 // pred_fallthru
      _
    // Predicated region
    $region14: #{model_forward.1} parent=1 // pred_check
      _
    $region15: #{model_forward.1} parent=1 // pred_check_branch
      %37 = sbr.rel (0) target = $region17
    $region16: #{model_forward.1} parent=1 // pred_region
      %38 = dma.done [#allocation5], 1920
    $region17: #{model_forward.1} parent=1 // pred_fallthru
      _
    // Predicated region
    $region18: #{model_forward.1} parent=1 // pred_check
      _
    $region19: #{model_forward.1} parent=1 // pred_check_branch
      %40 = sbr.rel (0) target = $region21
    $region20: #{model_forward.1} parent=1 // pred_region
      %41 = dma.done [#allocation7], 7680
    $region21: #{model_forward.1} parent=1 // pred_fallthru
      _
    %v42 = vld [vmem:[#allocation4] sm:$0x1]
    %v43 = vld [vmem:[#allocation4 + $0x8] sm:$0xff]
    %v44 = vld [vmem:[#allocation4 + $0x10] sm:$0xff]
    %v45 = vld [vmem:[#allocation4 + $0x18] sm:$0xff]
    %v46 = vld [vmem:[#allocation4 + $0x20] sm:$0xff]
    %v47 = vld [vmem:[#allocation4 + $0x28] sm:$0x1]
    %v48 = vld [vmem:[%s0] sm:$0xff]
    %v49 = vld [vmem:[%s0 + $0x8] sm:$0xff]
    %v50 = vld [vmem:[%s0 + $0x10] sm:$0xff]
    %v51 = vld [vmem:[%s0 + $0x18] sm:$0xff]
    %v52 = vld [vmem:[%s0 + $0x20] sm:$0xff]
    %v53 = vld [vmem:[%s0 + $0x28] sm:$0xff]
    %v54 = vld [vmem:[%s0 + $0x30] sm:$0xff]
    %v55 = vld [vmem:[%s0 + $0x38] sm:$0xff]
    %57 = vset.pattern.permute.xlu0 0
    %58 = vperm.xlu0 %57, %v48
    %v59 = vpop.permute.xlu0 %58
    %62 = vset.pattern.permute.xlu0 0
    %63 = vperm.xlu0 %62, %v49
    %v64 = vpop.permute.xlu0 %63
    %67 = vset.pattern.permute.xlu0 0
    %68 = vperm.xlu0 %67, %v50
    %v69 = vpop.permute.xlu0 %68
    %72 = vset.pattern.permute.xlu0 0
    %73 = vperm.xlu0 %72, %v51
    %v74 = vpop.permute.xlu0 %73
    %77 = vset.pattern.permute.xlu0 0
    %78 = vperm.xlu0 %77, %v52
    %v79 = vpop.permute.xlu0 %78
    %82 = vset.pattern.permute.xlu0 0
    %83 = vperm.xlu0 %82, %v53
    %v84 = vpop.permute.xlu0 %83
    %87 = vset.pattern.permute.xlu0 0
    %88 = vperm.xlu0 %87, %v54
    %v89 = vpop.permute.xlu0 %88
    %92 = vset.pattern.permute.xlu0 0
    %93 = vperm.xlu0 %92, %v55
    %v94 = vpop.permute.xlu0 %93
    %v96 = vlaneseq
    %v97 = vshrl.u32 %v96, 7
    %v98 = vsub.s32 0, %v97
    %v99 = vrot.slane %v42, %v98
    %v100 = vmul.f32 %v59, %v99
    %v101 = vmul.f32 %v64, %v99
    %v102 = vmul.f32 %v69, %v99
    %v103 = vmul.f32 %v74, %v99
    %v104 = vmul.f32 %v79, %v99
    %v105 = vmul.f32 %v84, %v99
    %v106 = vmul.f32 %v89, %v99
    %v107 = vmul.f32 %v94, %v99
    %v108 = vlaneseq
    %v109 = vshrl.u32 %v108, 7
    %v110 = vsub.s32 0, %v109
    %v111 = vrot.slane %v47, %v110
    %v112 = vadd.f32 %v100, %v111
    %v113 = vadd.f32 %v101, %v111
    %v114 = vadd.f32 %v102, %v111
    %v115 = vadd.f32 %v103, %v111
    %v116 = vadd.f32 %v104, %v111
    %v117 = vadd.f32 %v105, %v111
    %v118 = vadd.f32 %v106, %v111
    %v119 = vadd.f32 %v107, %v111
    %120 = vst [vmem:[#allocation2] sm:$0xff] %v112
    %121 = vst [vmem:[#allocation2 + $0x8] sm:$0xff] %v113
    %122 = vst [vmem:[#allocation2 + $0x10] sm:$0xff] %v114
    %123 = vst [vmem:[#allocation2 + $0x18] sm:$0xff] %v115
    %124 = vst [vmem:[#allocation2 + $0x20] sm:$0xff] %v116
    %125 = vst [vmem:[#allocation2 + $0x28] sm:$0xff] %v117
    %126 = vst [vmem:[#allocation2 + $0x30] sm:$0xff] %v118
    %127 = vst [vmem:[#allocation2 + $0x38] sm:$0xff] %v119
    %v128 = vld [vmem:[#allocation2] sm:$0xff]
    %vm129 = vcmask 261120
    %v131 = vsel %vm129, 0.0, 0
    %133 = vmatprep.subr.mxu0 0.0
    %134 = vmatpush1.msra.mxu0 %v43
    %135 = vmatprep.subr.mxu0 0.0
    %136 = vmatpush1.msra.mxu0 %v44
    %137 = vmatprep.subr.mxu0 0.0
    %138 = vmatpush1.msra.mxu0 %v45
    %139 = vmatprep.subr.mxu0 0.0
    %140 = vmatpush1.msra.mxu0 %v46
    %141 = vmatprep.subr.mxu0 0.0
    %142 = vmatpush1.msra.mxu0 0.0
    %143 = vmatprep.subr.mxu0 0.0
    %144 = vmatpush1.msra.mxu0 0.0
    %145 = vmatprep.subr.mxu0 0.0
    %146 = vmatpush1.msra.mxu0 0.0
    %147 = vmatprep.subr.mxu0 0.0
    %148 = vmatpush1.msra.mxu0 0.0
    %149 = vmatprep.subr.mxu0 0.0
    %150 = vmatpush1.msra.mxu0 0.0
    %151 = vmatprep.subr.mxu0 0.0
    %152 = vmatpush1.msra.mxu0 0.0
    %153 = vmatprep.subr.mxu0 0.0
    %154 = vmatpush1.msra.mxu0 0.0
    %155 = vmatprep.subr.mxu0 0.0
    %156 = vmatpush1.msra.mxu0 0.0
    %157 = vmatprep.subr.mxu0 0.0
    %158 = vmatpush1.msra.mxu0 0.0
    %159 = vmatprep.subr.mxu0 0.0
    %160 = vmatpush1.msra.mxu0 0.0
    %161 = vmatprep.subr.mxu0 0.0
    %162 = vmatpush1.msra.mxu0 0.0
    %163 = vmatprep.subr.mxu0 0.0
    %164 = vmatpush1.msra.mxu0 0.0
    %165 = vmatprep.subr.mxu0 0.0
    %166 = vmatpush1.msra.mxu0 0.0
    %167 = vmatprep.subr.mxu0 0.0
    %168 = vmatpush1.msra.mxu0 0.0
    %169 = vmatprep.subr.mxu0 0.0
    %170 = vmatpush1.msra.mxu0 0.0
    %171 = vmatprep.subr.mxu0 0.0
    %172 = vmatpush1.msra.mxu0 0.0
    %173 = vmatprep.subr.mxu0 0.0
    %174 = vmatpush1.msra.mxu0 0.0
    %175 = vmatprep.subr.mxu0 0.0
    %176 = vmatpush1.msra.mxu0 0.0
    %177 = vmatprep.subr.mxu0 0.0
    %178 = vmatpush1.msra.mxu0 0.0
    %179 = vmatprep.subr.mxu0 0.0
    %180 = vmatpush1.msra.mxu0 0.0
    %181 = vmatprep.subr.mxu0 0.0
    %182 = vmatpush1.msra.mxu0 0.0
    %183 = vmatprep.subr.mxu0 0.0
    %184 = vmatpush1.msra.mxu0 0.0
    %185 = vmatprep.subr.mxu0 0.0
    %186 = vmatpush1.msra.mxu0 0.0
    %187 = vmatprep.subr.mxu0 0.0
    %188 = vmatpush1.msra.mxu0 0.0
    %189 = vmatprep.subr.mxu0 0.0
    %190 = vmatpush1.msra.mxu0 0.0
    %191 = vmatprep.subr.mxu0 0.0
    %192 = vmatpush1.msra.mxu0 0.0
    %193 = vmatprep.subr.mxu0 0.0
    %194 = vmatpush1.msra.mxu0 0.0
    %195 = vmatprep.subr.mxu0 0.0
    %196 = vmatpush1.msra.mxu0 0.0
    %197 = vmatprep.mubr.f32.mxu0 0.0
    %198 = vmatmul.mubr.f32.gmra.mrb[0].mxu0 %v131
    %v199 = vpop.f32.mrb[0].mxu0
    %v200 = vadd.f32 0.0, %v199
    %v201 = vpop.f32.mrb[0].mxu0
    %202 = vdwg.mxu0
    %v203 = vadd.f32 %v128, %v200
    %v204 = vxor.u32 %v203, 2147483648
    %v205 = vmul.f32 %v204, 1.442695
    %v206 = vpow.pop %v205
    %v207 = vadd.f32 %v206, 1.0
    %v208 = vrcp.pop %v207
    %v209 = vmul.f32 1.0, %v208
    %v210 = vmul.f32 %v209, 2.0
    %v211 = vsub.f32 %v210, 1.0
    %v212 = vmul.f32 %v209, 0.0
    %214 = vrot.lane.b32.xlu0 %v211, 64
    %v215 = vpop.permute.xlu0 %214
    %v217 = vmul.f32 %v209, %v215
    %219 = vrot.lane.b32.xlu0 %v217, 32
    %v220 = vpop.permute.xlu0 %219
    %v222 = vadd.f32 %v212, %v220
    %v223 = vtanh.pop %v222
    %225 = vrot.lane.b32.xlu0 %v223, 64
    %v226 = vpop.permute.xlu0 %225
    %v228 = vmul.f32 %v209, %v226
    %230 = vrot.lane.b32.xlu0 %v228, 32
    %v231 = vpop.permute.xlu0 %230
    %233 = vst.msk [vmem:[#allocation3] sm:$0xff] %vm129, %v231
    %s234 = scalar_lea.vmem [#allocation2], 8
    %v235 = vld [vmem:[%s234] sm:$0xff]
    %v236 = vsel %vm129, %v231, 0
    %238 = vmatprep.subr.mxu0 0.0
    %239 = vmatpush1.msra.mxu0 %v43
    %240 = vmatprep.subr.mxu0 0.0
    %241 = vmatpush1.msra.mxu0 %v44
    %242 = vmatprep.subr.mxu0 0.0
    %243 = vmatpush1.msra.mxu0 %v45
    %244 = vmatprep.subr.mxu0 0.0
    %245 = vmatpush1.msra.mxu0 %v46
    %246 = vmatprep.subr.mxu0 0.0
    %247 = vmatpush1.msra.mxu0 0.0
    %248 = vmatprep.subr.mxu0 0.0
    %249 = vmatpush1.msra.mxu0 0.0
    %250 = vmatprep.subr.mxu0 0.0
    %251 = vmatpush1.msra.mxu0 0.0
    %252 = vmatprep.subr.mxu0 0.0
    %253 = vmatpush1.msra.mxu0 0.0
    %254 = vmatprep.subr.mxu0 0.0
    %255 = vmatpush1.msra.mxu0 0.0
    %256 = vmatprep.subr.mxu0 0.0
    %257 = vmatpush1.msra.mxu0 0.0
    %258 = vmatprep.subr.mxu0 0.0
    %259 = vmatpush1.msra.mxu0 0.0
    %260 = vmatprep.subr.mxu0 0.0
    %261 = vmatpush1.msra.mxu0 0.0
    %262 = vmatprep.subr.mxu0 0.0
    %263 = vmatpush1.msra.mxu0 0.0
    %264 = vmatprep.subr.mxu0 0.0
    %265 = vmatpush1.msra.mxu0 0.0
    %266 = vmatprep.subr.mxu0 0.0
    %267 = vmatpush1.msra.mxu0 0.0
    %268 = vmatprep.subr.mxu0 0.0
    %269 = vmatpush1.msra.mxu0 0.0
    %270 = vmatprep.subr.mxu0 0.0
    %271 = vmatpush1.msra.mxu0 0.0
    %272 = vmatprep.subr.mxu0 0.0
    %273 = vmatpush1.msra.mxu0 0.0
    %274 = vmatprep.subr.mxu0 0.0
    %275 = vmatpush1.msra.mxu0 0.0
    %276 = vmatprep.subr.mxu0 0.0
    %277 = vmatpush1.msra.mxu0 0.0
    %278 = vmatprep.subr.mxu0 0.0
    %279 = vmatpush1.msra.mxu0 0.0
    %280 = vmatprep.subr.mxu0 0.0
    %281 = vmatpush1.msra.mxu0 0.0
    %282 = vmatprep.subr.mxu0 0.0
    %283 = vmatpush1.msra.mxu0 0.0
    %284 = vmatprep.subr.mxu0 0.0
    %285 = vmatpush1.msra.mxu0 0.0
    %286 = vmatprep.subr.mxu0 0.0
    %287 = vmatpush1.msra.mxu0 0.0
    %288 = vmatprep.subr.mxu0 0.0
    %289 = vmatpush1.msra.mxu0 0.0
    %290 = vmatprep.subr.mxu0 0.0
    %291 = vmatpush1.msra.mxu0 0.0
    %292 = vmatprep.subr.mxu0 0.0
    %293 = vmatpush1.msra.mxu0 0.0
    %294 = vmatprep.subr.mxu0 0.0
    %295 = vmatpush1.msra.mxu0 0.0
    %296 = vmatprep.subr.mxu0 0.0
    %297 = vmatpush1.msra.mxu0 0.0
    %298 = vmatprep.subr.mxu0 0.0
    %299 = vmatpush1.msra.mxu0 0.0
    %300 = vmatprep.subr.mxu0 0.0
    %301 = vmatpush1.msra.mxu0 0.0
    %302 = vmatprep.mubr.f32.mxu0 0.0
    %303 = vmatmul.mubr.f32.gmra.mrb[0].mxu0 %v236
    %v304 = vpop.f32.mrb[0].mxu0
    %v305 = vadd.f32 0.0, %v304
    %v306 = vpop.f32.mrb[0].mxu0
    %307 = vdwg.mxu0
    %v308 = vadd.f32 %v235, %v305
    %v309 = vxor.u32 %v308, 2147483648
    %v310 = vmul.f32 %v309, 1.442695
    %v311 = vpow.pop %v310
    %v312 = vadd.f32 %v311, 1.0
    %v313 = vrcp.pop %v312
    %v314 = vmul.f32 1.0, %v313
    %v315 = vmul.f32 %v314, 2.0
    %v316 = vsub.f32 %v315, 1.0
    %v317 = vmul.f32 %v314, %v222
    %319 = vrot.lane.b32.xlu0 %v316, 64
    %v320 = vpop.permute.xlu0 %319
    %v322 = vmul.f32 %v314, %v320
    %324 = vrot.lane.b32.xlu0 %v322, 32
    %v325 = vpop.permute.xlu0 %324
    %v327 = vadd.f32 %v317, %v325
    %v328 = vtanh.pop %v327
    %330 = vrot.lane.b32.xlu0 %v328, 64
    %v331 = vpop.permute.xlu0 %330
    %v333 = vmul.f32 %v314, %v331
    %335 = vrot.lane.b32.xlu0 %v333, 32
    %v336 = vpop.permute.xlu0 %335
    %s338 = scalar_lea.vmem [#allocation3], 8
    %339 = vst.msk [vmem:[%s338] sm:$0xff] %vm129, %v336
    %s340 = scalar_lea.vmem [#allocation2], 16
    %v341 = vld [vmem:[%s340] sm:$0xff]
    %v342 = vsel %vm129, %v336, 0
    %344 = vmatprep.subr.mxu0 0.0
    %345 = vmatpush1.msra.mxu0 %v43
    %346 = vmatprep.subr.mxu0 0.0
    %347 = vmatpush1.msra.mxu0 %v44
    %348 = vmatprep.subr.mxu0 0.0
    %349 = vmatpush1.msra.mxu0 %v45
    %350 = vmatprep.subr.mxu0 0.0
    %351 = vmatpush1.msra.mxu0 %v46
    %352 = vmatprep.subr.mxu0 0.0
    %353 = vmatpush1.msra.mxu0 0.0
    %354 = vmatprep.subr.mxu0 0.0
    %355 = vmatpush1.msra.mxu0 0.0
    %356 = vmatprep.subr.mxu0 0.0
    %357 = vmatpush1.msra.mxu0 0.0
    %358 = vmatprep.subr.mxu0 0.0
    %359 = vmatpush1.msra.mxu0 0.0
    %360 = vmatprep.subr.mxu0 0.0
    %361 = vmatpush1.msra.mxu0 0.0
    %362 = vmatprep.subr.mxu0 0.0
    %363 = vmatpush1.msra.mxu0 0.0
    %364 = vmatprep.subr.mxu0 0.0
    %365 = vmatpush1.msra.mxu0 0.0
    %366 = vmatprep.subr.mxu0 0.0
    %367 = vmatpush1.msra.mxu0 0.0
    %368 = vmatprep.subr.mxu0 0.0
    %369 = vmatpush1.msra.mxu0 0.0
    %370 = vmatprep.subr.mxu0 0.0
    %371 = vmatpush1.msra.mxu0 0.0
    %372 = vmatprep.subr.mxu0 0.0
    %373 = vmatpush1.msra.mxu0 0.0
    %374 = vmatprep.subr.mxu0 0.0
    %375 = vmatpush1.msra.mxu0 0.0
    %376 = vmatprep.subr.mxu0 0.0
    %377 = vmatpush1.msra.mxu0 0.0
    %378 = vmatprep.subr.mxu0 0.0
    %379 = vmatpush1.msra.mxu0 0.0
    %380 = vmatprep.subr.mxu0 0.0
    %381 = vmatpush1.msra.mxu0 0.0
    %382 = vmatprep.subr.mxu0 0.0
    %383 = vmatpush1.msra.mxu0 0.0
    %384 = vmatprep.subr.mxu0 0.0
    %385 = vmatpush1.msra.mxu0 0.0
    %386 = vmatprep.subr.mxu0 0.0
    %387 = vmatpush1.msra.mxu0 0.0
    %388 = vmatprep.subr.mxu0 0.0
    %389 = vmatpush1.msra.mxu0 0.0
    %390 = vmatprep.subr.mxu0 0.0
    %391 = vmatpush1.msra.mxu0 0.0
    %392 = vmatprep.subr.mxu0 0.0
    %393 = vmatpush1.msra.mxu0 0.0
    %394 = vmatprep.subr.mxu0 0.0
    %395 = vmatpush1.msra.mxu0 0.0
    %396 = vmatprep.subr.mxu0 0.0
    %397 = vmatpush1.msra.mxu0 0.0
    %398 = vmatprep.subr.mxu0 0.0
    %399 = vmatpush1.msra.mxu0 0.0
    %400 = vmatprep.subr.mxu0 0.0
    %401 = vmatpush1.msra.mxu0 0.0
    %402 = vmatprep.subr.mxu0 0.0
    %403 = vmatpush1.msra.mxu0 0.0
    %404 = vmatprep.subr.mxu0 0.0
    %405 = vmatpush1.msra.mxu0 0.0
    %406 = vmatprep.subr.mxu0 0.0
    %407 = vmatpush1.msra.mxu0 0.0
    %408 = vmatprep.mubr.f32.mxu0 0.0
    %409 = vmatmul.mubr.f32.gmra.mrb[0].mxu0 %v342
    %v410 = vpop.f32.mrb[0].mxu0
    %v411 = vadd.f32 0.0, %v410
    %v412 = vpop.f32.mrb[0].mxu0
    %413 = vdwg.mxu0
    %v414 = vadd.f32 %v341, %v411
    %v415 = vxor.u32 %v414, 2147483648
    %v416 = vmul.f32 %v415, 1.442695
    %v417 = vpow.pop %v416
    %v418 = vadd.f32 %v417, 1.0
    %v419 = vrcp.pop %v418
    %v420 = vmul.f32 1.0, %v419
    %v421 = vmul.f32 %v420, 2.0
    %v422 = vsub.f32 %v421, 1.0
    %v423 = vmul.f32 %v420, %v327
    %425 = vrot.lane.b32.xlu0 %v422, 64
    %v426 = vpop.permute.xlu0 %425
    %v428 = vmul.f32 %v420, %v426
    %430 = vrot.lane.b32.xlu0 %v428, 32
    %v431 = vpop.permute.xlu0 %430
    %v433 = vadd.f32 %v423, %v431
    %v434 = vtanh.pop %v433
    %436 = vrot.lane.b32.xlu0 %v434, 64
    %v437 = vpop.permute.xlu0 %436
    %v439 = vmul.f32 %v420, %v437
    %441 = vrot.lane.b32.xlu0 %v439, 32
    %v442 = vpop.permute.xlu0 %441
    %s444 = scalar_lea.vmem [#allocation3], 16
    %445 = vst.msk [vmem:[%s444] sm:$0xff] %vm129, %v442
    %s446 = scalar_lea.vmem [#allocation2], 24
    %v447 = vld [vmem:[%s446] sm:$0xff]
    %v448 = vsel %vm129, %v442, 0
    %450 = vmatprep.subr.mxu0 0.0
    %451 = vmatpush1.msra.mxu0 %v43
    %452 = vmatprep.subr.mxu0 0.0
    %453 = vmatpush1.msra.mxu0 %v44
    %454 = vmatprep.subr.mxu0 0.0
    %455 = vmatpush1.msra.mxu0 %v45
    %456 = vmatprep.subr.mxu0 0.0
    %457 = vmatpush1.msra.mxu0 %v46
    %458 = vmatprep.subr.mxu0 0.0
    %459 = vmatpush1.msra.mxu0 0.0
    %460 = vmatprep.subr.mxu0 0.0
    %461 = vmatpush1.msra.mxu0 0.0
    %462 = vmatprep.subr.mxu0 0.0
    %463 = vmatpush1.msra.mxu0 0.0
    %464 = vmatprep.subr.mxu0 0.0
    %465 = vmatpush1.msra.mxu0 0.0
    %466 = vmatprep.subr.mxu0 0.0
    %467 = vmatpush1.msra.mxu0 0.0
    %468 = vmatprep.subr.mxu0 0.0
    %469 = vmatpush1.msra.mxu0 0.0
    %470 = vmatprep.subr.mxu0 0.0
    %471 = vmatpush1.msra.mxu0 0.0
    %472 = vmatprep.subr.mxu0 0.0
    %473 = vmatpush1.msra.mxu0 0.0
    %474 = vmatprep.subr.mxu0 0.0
    %475 = vmatpush1.msra.mxu0 0.0
    %476 = vmatprep.subr.mxu0 0.0
    %477 = vmatpush1.msra.mxu0 0.0
    %478 = vmatprep.subr.mxu0 0.0
    %479 = vmatpush1.msra.mxu0 0.0
    %480 = vmatprep.subr.mxu0 0.0
    %481 = vmatpush1.msra.mxu0 0.0
    %482 = vmatprep.subr.mxu0 0.0
    %483 = vmatpush1.msra.mxu0 0.0
    %484 = vmatprep.subr.mxu0 0.0
    %485 = vmatpush1.msra.mxu0 0.0
    %486 = vmatprep.subr.mxu0 0.0
    %487 = vmatpush1.msra.mxu0 0.0
    %488 = vmatprep.subr.mxu0 0.0
    %489 = vmatpush1.msra.mxu0 0.0
    %490 = vmatprep.subr.mxu0 0.0
    %491 = vmatpush1.msra.mxu0 0.0
    %492 = vmatprep.subr.mxu0 0.0
    %493 = vmatpush1.msra.mxu0 0.0
    %494 = vmatprep.subr.mxu0 0.0
    %495 = vmatpush1.msra.mxu0 0.0
    %496 = vmatprep.subr.mxu0 0.0
    %497 = vmatpush1.msra.mxu0 0.0
    %498 = vmatprep.subr.mxu0 0.0
    %499 = vmatpush1.msra.mxu0 0.0
    %500 = vmatprep.subr.mxu0 0.0
    %501 = vmatpush1.msra.mxu0 0.0
    %502 = vmatprep.subr.mxu0 0.0
    %503 = vmatpush1.msra.mxu0 0.0
    %504 = vmatprep.subr.mxu0 0.0
    %505 = vmatpush1.msra.mxu0 0.0
    %506 = vmatprep.subr.mxu0 0.0
    %507 = vmatpush1.msra.mxu0 0.0
    %508 = vmatprep.subr.mxu0 0.0
    %509 = vmatpush1.msra.mxu0 0.0
    %510 = vmatprep.subr.mxu0 0.0
    %511 = vmatpush1.msra.mxu0 0.0
    %512 = vmatprep.subr.mxu0 0.0
    %513 = vmatpush1.msra.mxu0 0.0
    %514 = vmatprep.mubr.f32.mxu0 0.0
    %515 = vmatmul.mubr.f32.gmra.mrb[0].mxu0 %v448
    %v516 = vpop.f32.mrb[0].mxu0
    %v517 = vadd.f32 0.0, %v516
    %v518 = vpop.f32.mrb[0].mxu0
    %519 = vdwg.mxu0
    %v520 = vadd.f32 %v447, %v517
    %v521 = vxor.u32 %v520, 2147483648
    %v522 = vmul.f32 %v521, 1.442695
    %v523 = vpow.pop %v522
    %v524 = vadd.f32 %v523, 1.0
    %v525 = vrcp.pop %v524
    %v526 = vmul.f32 1.0, %v525
    %v527 = vmul.f32 %v526, 2.0
    %v528 = vsub.f32 %v527, 1.0
    %v529 = vmul.f32 %v526, %v433
    %531 = vrot.lane.b32.xlu0 %v528, 64
    %v532 = vpop.permute.xlu0 %531
    %v534 = vmul.f32 %v526, %v532
    %536 = vrot.lane.b32.xlu0 %v534, 32
    %v537 = vpop.permute.xlu0 %536
    %v539 = vadd.f32 %v529, %v537
    %v540 = vtanh.pop %v539
    %542 = vrot.lane.b32.xlu0 %v540, 64
    %v543 = vpop.permute.xlu0 %542
    %v545 = vmul.f32 %v526, %v543
    %547 = vrot.lane.b32.xlu0 %v545, 32
    %v548 = vpop.permute.xlu0 %547
    %s550 = scalar_lea.vmem [#allocation3], 24
    %551 = vst.msk [vmem:[%s550] sm:$0xff] %vm129, %v548
    %s552 = scalar_lea.vmem [#allocation2], 32
    %v553 = vld [vmem:[%s552] sm:$0xff]
    %v554 = vsel %vm129, %v548, 0
    %556 = vmatprep.subr.mxu0 0.0
    %557 = vmatpush1.msra.mxu0 %v43
    %558 = vmatprep.subr.mxu0 0.0
    %559 = vmatpush1.msra.mxu0 %v44
    %560 = vmatprep.subr.mxu0 0.0
    %561 = vmatpush1.msra.mxu0 %v45
    %562 = vmatprep.subr.mxu0 0.0
    %563 = vmatpush1.msra.mxu0 %v46
    %564 = vmatprep.subr.mxu0 0.0
    %565 = vmatpush1.msra.mxu0 0.0
    %566 = vmatprep.subr.mxu0 0.0
    %567 = vmatpush1.msra.mxu0 0.0
    %568 = vmatprep.subr.mxu0 0.0
    %569 = vmatpush1.msra.mxu0 0.0
    %570 = vmatprep.subr.mxu0 0.0
    %571 = vmatpush1.msra.mxu0 0.0
    %572 = vmatprep.subr.mxu0 0.0
    %573 = vmatpush1.msra.mxu0 0.0
    %574 = vmatprep.subr.mxu0 0.0
    %575 = vmatpush1.msra.mxu0 0.0
    %576 = vmatprep.subr.mxu0 0.0
    %577 = vmatpush1.msra.mxu0 0.0
    %578 = vmatprep.subr.mxu0 0.0
    %579 = vmatpush1.msra.mxu0 0.0
    %580 = vmatprep.subr.mxu0 0.0
    %581 = vmatpush1.msra.mxu0 0.0
    %582 = vmatprep.subr.mxu0 0.0
    %583 = vmatpush1.msra.mxu0 0.0
    %584 = vmatprep.subr.mxu0 0.0
    %585 = vmatpush1.msra.mxu0 0.0
    %586 = vmatprep.subr.mxu0 0.0
    %587 = vmatpush1.msra.mxu0 0.0
    %588 = vmatprep.subr.mxu0 0.0
    %589 = vmatpush1.msra.mxu0 0.0
    %590 = vmatprep.subr.mxu0 0.0
    %591 = vmatpush1.msra.mxu0 0.0
    %592 = vmatprep.subr.mxu0 0.0
    %593 = vmatpush1.msra.mxu0 0.0
    %594 = vmatprep.subr.mxu0 0.0
    %595 = vmatpush1.msra.mxu0 0.0
    %596 = vmatprep.subr.mxu0 0.0
    %597 = vmatpush1.msra.mxu0 0.0
    %598 = vmatprep.subr.mxu0 0.0
    %599 = vmatpush1.msra.mxu0 0.0
    %600 = vmatprep.subr.mxu0 0.0
    %601 = vmatpush1.msra.mxu0 0.0
    %602 = vmatprep.subr.mxu0 0.0
    %603 = vmatpush1.msra.mxu0 0.0
    %604 = vmatprep.subr.mxu0 0.0
    %605 = vmatpush1.msra.mxu0 0.0
    %606 = vmatprep.subr.mxu0 0.0
    %607 = vmatpush1.msra.mxu0 0.0
    %608 = vmatprep.subr.mxu0 0.0
    %609 = vmatpush1.msra.mxu0 0.0
    %610 = vmatprep.subr.mxu0 0.0
    %611 = vmatpush1.msra.mxu0 0.0
    %612 = vmatprep.subr.mxu0 0.0
    %613 = vmatpush1.msra.mxu0 0.0
    %614 = vmatprep.subr.mxu0 0.0
    %615 = vmatpush1.msra.mxu0 0.0
    %616 = vmatprep.subr.mxu0 0.0
    %617 = vmatpush1.msra.mxu0 0.0
    %618 = vmatprep.subr.mxu0 0.0
    %619 = vmatpush1.msra.mxu0 0.0
    %620 = vmatprep.mubr.f32.mxu0 0.0
    %621 = vmatmul.mubr.f32.gmra.mrb[0].mxu0 %v554
    %v622 = vpop.f32.mrb[0].mxu0
    %v623 = vadd.f32 0.0, %v622
    %v624 = vpop.f32.mrb[0].mxu0
    %625 = vdwg.mxu0
    %v626 = vadd.f32 %v553, %v623
    %v627 = vxor.u32 %v626, 2147483648
    %v628 = vmul.f32 %v627, 1.442695
    %v629 = vpow.pop %v628
    %v630 = vadd.f32 %v629, 1.0
    %v631 = vrcp.pop %v630
    %v632 = vmul.f32 1.0, %v631
    %v633 = vmul.f32 %v632, 2.0
    %v634 = vsub.f32 %v633, 1.0
    %v635 = vmul.f32 %v632, %v539
    %637 = vrot.lane.b32.xlu0 %v634, 64
    %v638 = vpop.permute.xlu0 %637
    %v640 = vmul.f32 %v632, %v638
    %642 = vrot.lane.b32.xlu0 %v640, 32
    %v643 = vpop.permute.xlu0 %642
    %v645 = vadd.f32 %v635, %v643
    %v646 = vtanh.pop %v645
    %648 = vrot.lane.b32.xlu0 %v646, 64
    %v649 = vpop.permute.xlu0 %648
    %v651 = vmul.f32 %v632, %v649
    %653 = vrot.lane.b32.xlu0 %v651, 32
    %v654 = vpop.permute.xlu0 %653
    %s656 = scalar_lea.vmem [#allocation3], 32
    %657 = vst.msk [vmem:[%s656] sm:$0xff] %vm129, %v654
    %s658 = scalar_lea.vmem [#allocation2], 40
    %v659 = vld [vmem:[%s658] sm:$0xff]
    %v660 = vsel %vm129, %v654, 0
    %662 = vmatprep.subr.mxu0 0.0
    %663 = vmatpush1.msra.mxu0 %v43
    %664 = vmatprep.subr.mxu0 0.0
    %665 = vmatpush1.msra.mxu0 %v44
    %666 = vmatprep.subr.mxu0 0.0
    %667 = vmatpush1.msra.mxu0 %v45
    %668 = vmatprep.subr.mxu0 0.0
    %669 = vmatpush1.msra.mxu0 %v46
    %670 = vmatprep.subr.mxu0 0.0
    %671 = vmatpush1.msra.mxu0 0.0
    %672 = vmatprep.subr.mxu0 0.0
    %673 = vmatpush1.msra.mxu0 0.0
    %674 = vmatprep.subr.mxu0 0.0
    %675 = vmatpush1.msra.mxu0 0.0
    %676 = vmatprep.subr.mxu0 0.0
    %677 = vmatpush1.msra.mxu0 0.0
    %678 = vmatprep.subr.mxu0 0.0
    %679 = vmatpush1.msra.mxu0 0.0
    %680 = vmatprep.subr.mxu0 0.0
    %681 = vmatpush1.msra.mxu0 0.0
    %682 = vmatprep.subr.mxu0 0.0
    %683 = vmatpush1.msra.mxu0 0.0
    %684 = vmatprep.subr.mxu0 0.0
    %685 = vmatpush1.msra.mxu0 0.0
    %686 = vmatprep.subr.mxu0 0.0
    %687 = vmatpush1.msra.mxu0 0.0
    %688 = vmatprep.subr.mxu0 0.0
    %689 = vmatpush1.msra.mxu0 0.0
    %690 = vmatprep.subr.mxu0 0.0
    %691 = vmatpush1.msra.mxu0 0.0
    %692 = vmatprep.subr.mxu0 0.0
    %693 = vmatpush1.msra.mxu0 0.0
    %694 = vmatprep.subr.mxu0 0.0
    %695 = vmatpush1.msra.mxu0 0.0
    %696 = vmatprep.subr.mxu0 0.0
    %697 = vmatpush1.msra.mxu0 0.0
    %698 = vmatprep.subr.mxu0 0.0
    %699 = vmatpush1.msra.mxu0 0.0
    %700 = vmatprep.subr.mxu0 0.0
    %701 = vmatpush1.msra.mxu0 0.0
    %702 = vmatprep.subr.mxu0 0.0
    %703 = vmatpush1.msra.mxu0 0.0
    %704 = vmatprep.subr.mxu0 0.0
    %705 = vmatpush1.msra.mxu0 0.0
    %706 = vmatprep.subr.mxu0 0.0
    %707 = vmatpush1.msra.mxu0 0.0
    %708 = vmatprep.subr.mxu0 0.0
    %709 = vmatpush1.msra.mxu0 0.0
    %710 = vmatprep.subr.mxu0 0.0
    %711 = vmatpush1.msra.mxu0 0.0
    %712 = vmatprep.subr.mxu0 0.0
    %713 = vmatpush1.msra.mxu0 0.0
    %714 = vmatprep.subr.mxu0 0.0
    %715 = vmatpush1.msra.mxu0 0.0
    %716 = vmatprep.subr.mxu0 0.0
    %717 = vmatpush1.msra.mxu0 0.0
    %718 = vmatprep.subr.mxu0 0.0
    %719 = vmatpush1.msra.mxu0 0.0
    %720 = vmatprep.subr.mxu0 0.0
    %721 = vmatpush1.msra.mxu0 0.0
    %722 = vmatprep.subr.mxu0 0.0
    %723 = vmatpush1.msra.mxu0 0.0
    %724 = vmatprep.subr.mxu0 0.0
    %725 = vmatpush1.msra.mxu0 0.0
    %726 = vmatprep.mubr.f32.mxu0 0.0
    %727 = vmatmul.mubr.f32.gmra.mrb[0].mxu0 %v660
    %v728 = vpop.f32.mrb[0].mxu0
    %v729 = vadd.f32 0.0, %v728
    %v730 = vpop.f32.mrb[0].mxu0
    %731 = vdwg.mxu0
    %v732 = vadd.f32 %v659, %v729
    %v733 = vxor.u32 %v732, 2147483648
    %v734 = vmul.f32 %v733, 1.442695
    %v735 = vpow.pop %v734
    %v736 = vadd.f32 %v735, 1.0
    %v737 = vrcp.pop %v736
    %v738 = vmul.f32 1.0, %v737
    %v739 = vmul.f32 %v738, 2.0
    %v740 = vsub.f32 %v739, 1.0
    %v741 = vmul.f32 %v738, %v645
    %743 = vrot.lane.b32.xlu0 %v740, 64
    %v744 = vpop.permute.xlu0 %743
    %v746 = vmul.f32 %v738, %v744
    %748 = vrot.lane.b32.xlu0 %v746, 32
    %v749 = vpop.permute.xlu0 %748
    %v751 = vadd.f32 %v741, %v749
    %v752 = vtanh.pop %v751
    %754 = vrot.lane.b32.xlu0 %v752, 64
    %v755 = vpop.permute.xlu0 %754
    %v757 = vmul.f32 %v738, %v755
    %759 = vrot.lane.b32.xlu0 %v757, 32
    %v760 = vpop.permute.xlu0 %759
    %s762 = scalar_lea.vmem [#allocation3], 40
    %763 = vst.msk [vmem:[%s762] sm:$0xff] %vm129, %v760
    %s764 = scalar_lea.vmem [#allocation2], 48
    %v765 = vld [vmem:[%s764] sm:$0xff]
    %v766 = vsel %vm129, %v760, 0
    %768 = vmatprep.subr.mxu0 0.0
    %769 = vmatpush1.msra.mxu0 %v43
    %770 = vmatprep.subr.mxu0 0.0
    %771 = vmatpush1.msra.mxu0 %v44
    %772 = vmatprep.subr.mxu0 0.0
    %773 = vmatpush1.msra.mxu0 %v45
    %774 = vmatprep.subr.mxu0 0.0
    %775 = vmatpush1.msra.mxu0 %v46
    %776 = vmatprep.subr.mxu0 0.0
    %777 = vmatpush1.msra.mxu0 0.0
    %778 = vmatprep.subr.mxu0 0.0
    %779 = vmatpush1.msra.mxu0 0.0
    %780 = vmatprep.subr.mxu0 0.0
    %781 = vmatpush1.msra.mxu0 0.0
    %782 = vmatprep.subr.mxu0 0.0
    %783 = vmatpush1.msra.mxu0 0.0
    %784 = vmatprep.subr.mxu0 0.0
    %785 = vmatpush1.msra.mxu0 0.0
    %786 = vmatprep.subr.mxu0 0.0
    %787 = vmatpush1.msra.mxu0 0.0
    %788 = vmatprep.subr.mxu0 0.0
    %789 = vmatpush1.msra.mxu0 0.0
    %790 = vmatprep.subr.mxu0 0.0
    %791 = vmatpush1.msra.mxu0 0.0
    %792 = vmatprep.subr.mxu0 0.0
    %793 = vmatpush1.msra.mxu0 0.0
    %794 = vmatprep.subr.mxu0 0.0
    %795 = vmatpush1.msra.mxu0 0.0
    %796 = vmatprep.subr.mxu0 0.0
    %797 = vmatpush1.msra.mxu0 0.0
    %798 = vmatprep.subr.mxu0 0.0
    %799 = vmatpush1.msra.mxu0 0.0
    %800 = vmatprep.subr.mxu0 0.0
    %801 = vmatpush1.msra.mxu0 0.0
    %802 = vmatprep.subr.mxu0 0.0
    %803 = vmatpush1.msra.mxu0 0.0
    %804 = vmatprep.subr.mxu0 0.0
    %805 = vmatpush1.msra.mxu0 0.0
    %806 = vmatprep.subr.mxu0 0.0
    %807 = vmatpush1.msra.mxu0 0.0
    %808 = vmatprep.subr.mxu0 0.0
    %809 = vmatpush1.msra.mxu0 0.0
    %810 = vmatprep.subr.mxu0 0.0
    %811 = vmatpush1.msra.mxu0 0.0
    %812 = vmatprep.subr.mxu0 0.0
    %813 = vmatpush1.msra.mxu0 0.0
    %814 = vmatprep.subr.mxu0 0.0
    %815 = vmatpush1.msra.mxu0 0.0
    %816 = vmatprep.subr.mxu0 0.0
    %817 = vmatpush1.msra.mxu0 0.0
    %818 = vmatprep.subr.mxu0 0.0
    %819 = vmatpush1.msra.mxu0 0.0
    %820 = vmatprep.subr.mxu0 0.0
    %821 = vmatpush1.msra.mxu0 0.0
    %822 = vmatprep.subr.mxu0 0.0
    %823 = vmatpush1.msra.mxu0 0.0
    %824 = vmatprep.subr.mxu0 0.0
    %825 = vmatpush1.msra.mxu0 0.0
    %826 = vmatprep.subr.mxu0 0.0
    %827 = vmatpush1.msra.mxu0 0.0
    %828 = vmatprep.subr.mxu0 0.0
    %829 = vmatpush1.msra.mxu0 0.0
    %830 = vmatprep.subr.mxu0 0.0
    %831 = vmatpush1.msra.mxu0 0.0
    %832 = vmatprep.mubr.f32.mxu0 0.0
    %833 = vmatmul.mubr.f32.gmra.mrb[0].mxu0 %v766
    %v834 = vpop.f32.mrb[0].mxu0
    %v835 = vadd.f32 0.0, %v834
    %v836 = vpop.f32.mrb[0].mxu0
    %837 = vdwg.mxu0
    %v838 = vadd.f32 %v765, %v835
    %v839 = vxor.u32 %v838, 2147483648
    %v840 = vmul.f32 %v839, 1.442695
    %v841 = vpow.pop %v840
    %v842 = vadd.f32 %v841, 1.0
    %v843 = vrcp.pop %v842
    %v844 = vmul.f32 1.0, %v843
    %v845 = vmul.f32 %v844, 2.0
    %v846 = vsub.f32 %v845, 1.0
    %v847 = vmul.f32 %v844, %v751
    %849 = vrot.lane.b32.xlu0 %v846, 64
    %v850 = vpop.permute.xlu0 %849
    %v852 = vmul.f32 %v844, %v850
    %854 = vrot.lane.b32.xlu0 %v852, 32
    %v855 = vpop.permute.xlu0 %854
    %v857 = vadd.f32 %v847, %v855
    %v858 = vtanh.pop %v857
    %860 = vrot.lane.b32.xlu0 %v858, 64
    %v861 = vpop.permute.xlu0 %860
    %v863 = vmul.f32 %v844, %v861
    %865 = vrot.lane.b32.xlu0 %v863, 32
    %v866 = vpop.permute.xlu0 %865
    %s868 = scalar_lea.vmem [#allocation3], 48
    %869 = vst.msk [vmem:[%s868] sm:$0xff] %vm129, %v866
    %s870 = scalar_lea.vmem [#allocation2], 56
    %v871 = vld [vmem:[%s870] sm:$0xff]
    %v872 = vsel %vm129, %v866, 0
    %874 = vmatprep.subr.mxu0 0.0
    %875 = vmatpush1.msra.mxu0 %v43
    %876 = vmatprep.subr.mxu0 0.0
    %877 = vmatpush1.msra.mxu0 %v44
    %878 = vmatprep.subr.mxu0 0.0
    %879 = vmatpush1.msra.mxu0 %v45
    %880 = vmatprep.subr.mxu0 0.0
    %881 = vmatpush1.msra.mxu0 %v46
    %882 = vmatprep.subr.mxu0 0.0
    %883 = vmatpush1.msra.mxu0 0.0
    %884 = vmatprep.subr.mxu0 0.0
    %885 = vmatpush1.msra.mxu0 0.0
    %886 = vmatprep.subr.mxu0 0.0
    %887 = vmatpush1.msra.mxu0 0.0
    %888 = vmatprep.subr.mxu0 0.0
    %889 = vmatpush1.msra.mxu0 0.0
    %890 = vmatprep.subr.mxu0 0.0
    %891 = vmatpush1.msra.mxu0 0.0
    %892 = vmatprep.subr.mxu0 0.0
    %893 = vmatpush1.msra.mxu0 0.0
    %894 = vmatprep.subr.mxu0 0.0
    %895 = vmatpush1.msra.mxu0 0.0
    %896 = vmatprep.subr.mxu0 0.0
    %897 = vmatpush1.msra.mxu0 0.0
    %898 = vmatprep.subr.mxu0 0.0
    %899 = vmatpush1.msra.mxu0 0.0
    %900 = vmatprep.subr.mxu0 0.0
    %901 = vmatpush1.msra.mxu0 0.0
    %902 = vmatprep.subr.mxu0 0.0
    %903 = vmatpush1.msra.mxu0 0.0
    %904 = vmatprep.subr.mxu0 0.0
    %905 = vmatpush1.msra.mxu0 0.0
    %906 = vmatprep.subr.mxu0 0.0
    %907 = vmatpush1.msra.mxu0 0.0
    %908 = vmatprep.subr.mxu0 0.0
    %909 = vmatpush1.msra.mxu0 0.0
    %910 = vmatprep.subr.mxu0 0.0
    %911 = vmatpush1.msra.mxu0 0.0
    %912 = vmatprep.subr.mxu0 0.0
    %913 = vmatpush1.msra.mxu0 0.0
    %914 = vmatprep.subr.mxu0 0.0
    %915 = vmatpush1.msra.mxu0 0.0
    %916 = vmatprep.subr.mxu0 0.0
    %917 = vmatpush1.msra.mxu0 0.0
    %918 = vmatprep.subr.mxu0 0.0
    %919 = vmatpush1.msra.mxu0 0.0
    %920 = vmatprep.subr.mxu0 0.0
    %921 = vmatpush1.msra.mxu0 0.0
    %922 = vmatprep.subr.mxu0 0.0
    %923 = vmatpush1.msra.mxu0 0.0
    %924 = vmatprep.subr.mxu0 0.0
    %925 = vmatpush1.msra.mxu0 0.0
    %926 = vmatprep.subr.mxu0 0.0
    %927 = vmatpush1.msra.mxu0 0.0
    %928 = vmatprep.subr.mxu0 0.0
    %929 = vmatpush1.msra.mxu0 0.0
    %930 = vmatprep.subr.mxu0 0.0
    %931 = vmatpush1.msra.mxu0 0.0
    %932 = vmatprep.subr.mxu0 0.0
    %933 = vmatpush1.msra.mxu0 0.0
    %934 = vmatprep.subr.mxu0 0.0
    %935 = vmatpush1.msra.mxu0 0.0
    %936 = vmatprep.subr.mxu0 0.0
    %937 = vmatpush1.msra.mxu0 0.0
    %938 = vmatprep.mubr.f32.mxu0 0.0
    %939 = vmatmul.mubr.f32.gmra.mrb[0].mxu0 %v872
    %v940 = vpop.f32.mrb[0].mxu0
    %v941 = vadd.f32 0.0, %v940
    %v942 = vpop.f32.mrb[0].mxu0
    %943 = vdwg.mxu0
    %v944 = vadd.f32 %v871, %v941
    %v945 = vxor.u32 %v944, 2147483648
    %v946 = vmul.f32 %v945, 1.442695
    %v947 = vpow.pop %v946
    %v948 = vadd.f32 %v947, 1.0
    %v949 = vrcp.pop %v948
    %v950 = vmul.f32 1.0, %v949
    %v951 = vmul.f32 %v950, 2.0
    %v952 = vsub.f32 %v951, 1.0
    %v953 = vmul.f32 %v950, %v857
    %955 = vrot.lane.b32.xlu0 %v952, 64
    %v956 = vpop.permute.xlu0 %955
    %v958 = vmul.f32 %v950, %v956
    %960 = vrot.lane.b32.xlu0 %v958, 32
    %v961 = vpop.permute.xlu0 %960
    %v963 = vadd.f32 %v953, %v961
    %v964 = vtanh.pop %v963
    %966 = vrot.lane.b32.xlu0 %v964, 64
    %v967 = vpop.permute.xlu0 %966
    %v969 = vmul.f32 %v950, %v967
    %971 = vrot.lane.b32.xlu0 %v969, 32
    %v972 = vpop.permute.xlu0 %971
    %s974 = scalar_lea.vmem [#allocation3], 56
    %975 = vst.msk [vmem:[%s974] sm:$0xff] %vm129, %v972
    %v976 = vld [vmem:[#allocation4 + $0x30] sm:$0xff]
    %v977 = vld [vmem:[#allocation4 + $0x38] sm:$0xff]
    %v978 = vld [vmem:[#allocation4 + $0x40] sm:$0xff]
    %v979 = vld [vmem:[#allocation4 + $0x48] sm:$0xff]
    %v980 = vld [vmem:[#allocation4 + $0x50] sm:$0xff]
    %v981 = vld [vmem:[#allocation4 + $0x58] sm:$0xff]
    %v982 = vld [vmem:[#allocation4 + $0x60] sm:$0xff]
    %v983 = vld [vmem:[#allocation4 + $0x68] sm:$0xff]
    %v984 = vld [vmem:[#allocation4 + $0x70] sm:$0x1]
    %v985 = vld [vmem:[#allocation3] sm:$0xff]
    %v986 = vld [vmem:[#allocation3 + $0x8] sm:$0xff]
    %v987 = vld [vmem:[#allocation3 + $0x10] sm:$0xff]
    %v988 = vld [vmem:[#allocation3 + $0x18] sm:$0xff]
    %v989 = vld [vmem:[#allocation3 + $0x20] sm:$0xff]
    %v990 = vld [vmem:[#allocation3 + $0x28] sm:$0xff]
    %v991 = vld [vmem:[#allocation3 + $0x30] sm:$0xff]
    %v992 = vld [vmem:[#allocation3 + $0x38] sm:$0xff]
    %v993 = vlaneseq
    %v994 = vshrl.u32 %v993, 7
    %v995 = vsub.s32 0, %v994
    %v996 = vrot.slane %v984, %v995
    %v998 = vsel %vm129, %v985, 0
    %v1001 = vsel %vm129, %v986, 0
    %v1004 = vsel %vm129, %v987, 0
    %v1007 = vsel %vm129, %v988, 0
    %v1010 = vsel %vm129, %v989, 0
    %v1013 = vsel %vm129, %v990, 0
    %v1016 = vsel %vm129, %v991, 0
    %v1019 = vsel %vm129, %v992, 0
    %1021 = vmatprep.subr.mxu0 0.0
    %1022 = vmatpush1.msra.mxu0 %v976
    %1023 = vmatprep.subr.mxu0 0.0
    %1024 = vmatpush1.msra.mxu0 %v977
    %1025 = vmatprep.subr.mxu0 0.0
    %1026 = vmatpush1.msra.mxu0 %v978
    %1027 = vmatprep.subr.mxu0 0.0
    %1028 = vmatpush1.msra.mxu0 %v979
    %1029 = vmatprep.subr.mxu0 0.0
    %1030 = vmatpush1.msra.mxu0 0.0
    %1031 = vmatprep.subr.mxu0 0.0
    %1032 = vmatpush1.msra.mxu0 0.0
    %1033 = vmatprep.subr.mxu0 0.0
    %1034 = vmatpush1.msra.mxu0 0.0
    %1035 = vmatprep.subr.mxu0 0.0
    %1036 = vmatpush1.msra.mxu0 0.0
    %1037 = vmatprep.subr.mxu0 0.0
    %1038 = vmatpush1.msra.mxu0 0.0
    %1039 = vmatprep.subr.mxu0 0.0
    %1040 = vmatpush1.msra.mxu0 0.0
    %1041 = vmatprep.subr.mxu0 0.0
    %1042 = vmatpush1.msra.mxu0 0.0
    %1043 = vmatprep.subr.mxu0 0.0
    %1044 = vmatpush1.msra.mxu0 0.0
    %1045 = vmatprep.subr.mxu0 0.0
    %1046 = vmatpush1.msra.mxu0 0.0
    %1047 = vmatprep.subr.mxu0 0.0
    %1048 = vmatpush1.msra.mxu0 0.0
    %1049 = vmatprep.subr.mxu0 0.0
    %1050 = vmatpush1.msra.mxu0 0.0
    %1051 = vmatprep.subr.mxu0 0.0
    %1052 = vmatpush1.msra.mxu0 0.0
    %1053 = vmatprep.subr.mxu0 0.0
    %1054 = vmatpush1.msra.mxu0 0.0
    %1055 = vmatprep.subr.mxu0 0.0
    %1056 = vmatpush1.msra.mxu0 0.0
    %1057 = vmatprep.subr.mxu0 0.0
    %1058 = vmatpush1.msra.mxu0 0.0
    %1059 = vmatprep.subr.mxu0 0.0
    %1060 = vmatpush1.msra.mxu0 0.0
    %1061 = vmatprep.subr.mxu0 0.0
    %1062 = vmatpush1.msra.mxu0 0.0
    %1063 = vmatprep.subr.mxu0 0.0
    %1064 = vmatpush1.msra.mxu0 0.0
    %1065 = vmatprep.subr.mxu0 0.0
    %1066 = vmatpush1.msra.mxu0 0.0
    %1067 = vmatprep.subr.mxu0 0.0
    %1068 = vmatpush1.msra.mxu0 0.0
    %1069 = vmatprep.subr.mxu0 0.0
    %1070 = vmatpush1.msra.mxu0 0.0
    %1071 = vmatprep.subr.mxu0 0.0
    %1072 = vmatpush1.msra.mxu0 0.0
    %1073 = vmatprep.subr.mxu0 0.0
    %1074 = vmatpush1.msra.mxu0 0.0
    %1075 = vmatprep.subr.mxu0 0.0
    %1076 = vmatpush1.msra.mxu0 0.0
    %1077 = vmatprep.subr.mxu0 0.0
    %1078 = vmatpush1.msra.mxu0 0.0
    %1079 = vmatprep.subr.mxu0 0.0
    %1080 = vmatpush1.msra.mxu0 0.0
    %1081 = vmatprep.subr.mxu0 0.0
    %1082 = vmatpush1.msra.mxu0 0.0
    %1083 = vmatprep.subr.mxu0 0.0
    %1084 = vmatpush1.msra.mxu0 0.0
    %1085 = vmatprep.mubr.f32.mxu0 0.0
    %1086 = vmatmul.mubr.f32.gmra.mrb[0].mxu0 %v998
    %v1087 = vpop.f32.mrb[0].mxu0
    %v1088 = vadd.f32 %v996, %v1087
    %v1089 = vpop.f32.mrb[0].mxu0
    %1090 = vmatprep.mubr.f32.mxu0 0.0
    %1091 = vmatmul.mubr.f32.gmra.mrb[0].mxu0 %v1001
    %v1092 = vpop.f32.mrb[0].mxu0
    %v1093 = vadd.f32 %v996, %v1092
    %v1094 = vpop.f32.mrb[0].mxu0
    %1095 = vmatprep.mubr.f32.mxu0 0.0
    %1096 = vmatmul.mubr.f32.gmra.mrb[0].mxu0 %v1004
    %v1097 = vpop.f32.mrb[0].mxu0
    %v1098 = vadd.f32 %v996, %v1097
    %v1099 = vpop.f32.mrb[0].mxu0
    %1100 = vmatprep.mubr.f32.mxu0 0.0
    %1101 = vmatmul.mubr.f32.gmra.mrb[0].mxu0 %v1007
    %v1102 = vpop.f32.mrb[0].mxu0
    %v1103 = vadd.f32 %v996, %v1102
    %v1104 = vpop.f32.mrb[0].mxu0
    %1105 = vmatprep.mubr.f32.mxu0 0.0
    %1106 = vmatmul.mubr.f32.gmra.mrb[0].mxu0 %v1010
    %v1107 = vpop.f32.mrb[0].mxu0
    %v1108 = vadd.f32 %v996, %v1107
    %v1109 = vpop.f32.mrb[0].mxu0
    %1110 = vmatprep.mubr.f32.mxu0 0.0
    %1111 = vmatmul.mubr.f32.gmra.mrb[0].mxu0 %v1013
    %v1112 = vpop.f32.mrb[0].mxu0
    %v1113 = vadd.f32 %v996, %v1112
    %v1114 = vpop.f32.mrb[0].mxu0
    %1115 = vmatprep.mubr.f32.mxu0 0.0
    %1116 = vmatmul.mubr.f32.gmra.mrb[0].mxu0 %v1016
    %v1117 = vpop.f32.mrb[0].mxu0
    %v1118 = vadd.f32 %v996, %v1117
    %v1119 = vpop.f32.mrb[0].mxu0
    %1120 = vmatprep.mubr.f32.mxu0 0.0
    %1121 = vmatmul.mubr.f32.gmra.mrb[0].mxu0 %v1019
    %v1122 = vpop.f32.mrb[0].mxu0
    %v1123 = vadd.f32 %v996, %v1122
    %v1124 = vpop.f32.mrb[0].mxu0
    %1125 = vdwg.mxu0
    %1126 = vst [vmem:[#allocation2] sm:$0xff] %v1088
    %1127 = vst [vmem:[#allocation2 + $0x8] sm:$0xff] %v1093
    %1128 = vst [vmem:[#allocation2 + $0x10] sm:$0xff] %v1098
    %1129 = vst [vmem:[#allocation2 + $0x18] sm:$0xff] %v1103
    %1130 = vst [vmem:[#allocation2 + $0x20] sm:$0xff] %v1108
    %1131 = vst [vmem:[#allocation2 + $0x28] sm:$0xff] %v1113
    %1132 = vst [vmem:[#allocation2 + $0x30] sm:$0xff] %v1118
    %1133 = vst [vmem:[#allocation2 + $0x38] sm:$0xff] %v1123
    %v1134 = vld [vmem:[#allocation2] sm:$0xff]
    %1135 = vmatprep.subr.mxu0 0.0
    %1136 = vmatpush1.msra.mxu0 %v980
    %1137 = vmatprep.subr.mxu0 0.0
    %1138 = vmatpush1.msra.mxu0 %v981
    %1139 = vmatprep.subr.mxu0 0.0
    %1140 = vmatpush1.msra.mxu0 %v982
    %1141 = vmatprep.subr.mxu0 0.0
    %1142 = vmatpush1.msra.mxu0 %v983
    %1143 = vmatprep.subr.mxu0 0.0
    %1144 = vmatpush1.msra.mxu0 0.0
    %1145 = vmatprep.subr.mxu0 0.0
    %1146 = vmatpush1.msra.mxu0 0.0
    %1147 = vmatprep.subr.mxu0 0.0
    %1148 = vmatpush1.msra.mxu0 0.0
    %1149 = vmatprep.subr.mxu0 0.0
    %1150 = vmatpush1.msra.mxu0 0.0
    %1151 = vmatprep.subr.mxu0 0.0
    %1152 = vmatpush1.msra.mxu0 0.0
    %1153 = vmatprep.subr.mxu0 0.0
    %1154 = vmatpush1.msra.mxu0 0.0
    %1155 = vmatprep.subr.mxu0 0.0
    %1156 = vmatpush1.msra.mxu0 0.0
    %1157 = vmatprep.subr.mxu0 0.0
    %1158 = vmatpush1.msra.mxu0 0.0
    %1159 = vmatprep.subr.mxu0 0.0
    %1160 = vmatpush1.msra.mxu0 0.0
    %1161 = vmatprep.subr.mxu0 0.0
    %1162 = vmatpush1.msra.mxu0 0.0
    %1163 = vmatprep.subr.mxu0 0.0
    %1164 = vmatpush1.msra.mxu0 0.0
    %1165 = vmatprep.subr.mxu0 0.0
    %1166 = vmatpush1.msra.mxu0 0.0
    %1167 = vmatprep.subr.mxu0 0.0
    %1168 = vmatpush1.msra.mxu0 0.0
    %1169 = vmatprep.subr.mxu0 0.0
    %1170 = vmatpush1.msra.mxu0 0.0
    %1171 = vmatprep.subr.mxu0 0.0
    %1172 = vmatpush1.msra.mxu0 0.0
    %1173 = vmatprep.subr.mxu0 0.0
    %1174 = vmatpush1.msra.mxu0 0.0
    %1175 = vmatprep.subr.mxu0 0.0
    %1176 = vmatpush1.msra.mxu0 0.0
    %1177 = vmatprep.subr.mxu0 0.0
    %1178 = vmatpush1.msra.mxu0 0.0
    %1179 = vmatprep.subr.mxu0 0.0
    %1180 = vmatpush1.msra.mxu0 0.0
    %1181 = vmatprep.subr.mxu0 0.0
    %1182 = vmatpush1.msra.mxu0 0.0
    %1183 = vmatprep.subr.mxu0 0.0
    %1184 = vmatpush1.msra.mxu0 0.0
    %1185 = vmatprep.subr.mxu0 0.0
    %1186 = vmatpush1.msra.mxu0 0.0
    %1187 = vmatprep.subr.mxu0 0.0
    %1188 = vmatpush1.msra.mxu0 0.0
    %1189 = vmatprep.subr.mxu0 0.0
    %1190 = vmatpush1.msra.mxu0 0.0
    %1191 = vmatprep.subr.mxu0 0.0
    %1192 = vmatpush1.msra.mxu0 0.0
    %1193 = vmatprep.subr.mxu0 0.0
    %1194 = vmatpush1.msra.mxu0 0.0
    %1195 = vmatprep.subr.mxu0 0.0
    %1196 = vmatpush1.msra.mxu0 0.0
    %1197 = vmatprep.subr.mxu0 0.0
    %1198 = vmatpush1.msra.mxu0 0.0
    %1199 = vmatprep.mubr.f32.mxu0 0.0
    %1200 = vmatmul.mubr.f32.gmra.mrb[0].mxu0 %v131
    %v1201 = vpop.f32.mrb[0].mxu0
    %v1202 = vadd.f32 0.0, %v1201
    %v1203 = vpop.f32.mrb[0].mxu0
    %1204 = vdwg.mxu0
    %v1205 = vadd.f32 %v1134, %v1202
    %v1206 = vxor.u32 %v1205, 2147483648
    %v1207 = vmul.f32 %v1206, 1.442695
    %v1208 = vpow.pop %v1207
    %v1209 = vadd.f32 %v1208, 1.0
    %v1210 = vrcp.pop %v1209
    %v1211 = vmul.f32 1.0, %v1210
    %v1212 = vmul.f32 %v1211, 2.0
    %v1213 = vsub.f32 %v1212, 1.0
    %v1214 = vmul.f32 %v1211, 0.0
    %1216 = vrot.lane.b32.xlu0 %v1213, 64
    %v1217 = vpop.permute.xlu0 %1216
    %v1219 = vmul.f32 %v1211, %v1217
    %1221 = vrot.lane.b32.xlu0 %v1219, 32
    %v1222 = vpop.permute.xlu0 %1221
    %v1224 = vadd.f32 %v1214, %v1222
    %v1225 = vtanh.pop %v1224
    %1227 = vrot.lane.b32.xlu0 %v1225, 64
    %v1228 = vpop.permute.xlu0 %1227
    %v1230 = vmul.f32 %v1211, %v1228
    %v1231 = vld [vmem:[%s234] sm:$0xff]
    %1233 = vrot.lane.b32.xlu0 %v1230, 32
    %v1234 = vpop.permute.xlu0 %1233
    %v1235 = vsel %vm129, %v1234, 0
    %1237 = vmatprep.subr.mxu0 0.0
    %1238 = vmatpush1.msra.mxu0 %v980
    %1239 = vmatprep.subr.mxu0 0.0
    %1240 = vmatpush1.msra.mxu0 %v981
    %1241 = vmatprep.subr.mxu0 0.0
    %1242 = vmatpush1.msra.mxu0 %v982
    %1243 = vmatprep.subr.mxu0 0.0
    %1244 = vmatpush1.msra.mxu0 %v983
    %1245 = vmatprep.subr.mxu0 0.0
    %1246 = vmatpush1.msra.mxu0 0.0
    %1247 = vmatprep.subr.mxu0 0.0
    %1248 = vmatpush1.msra.mxu0 0.0
    %1249 = vmatprep.subr.mxu0 0.0
    %1250 = vmatpush1.msra.mxu0 0.0
    %1251 = vmatprep.subr.mxu0 0.0
    %1252 = vmatpush1.msra.mxu0 0.0
    %1253 = vmatprep.subr.mxu0 0.0
    %1254 = vmatpush1.msra.mxu0 0.0
    %1255 = vmatprep.subr.mxu0 0.0
    %1256 = vmatpush1.msra.mxu0 0.0
    %1257 = vmatprep.subr.mxu0 0.0
    %1258 = vmatpush1.msra.mxu0 0.0
    %1259 = vmatprep.subr.mxu0 0.0
    %1260 = vmatpush1.msra.mxu0 0.0
    %1261 = vmatprep.subr.mxu0 0.0
    %1262 = vmatpush1.msra.mxu0 0.0
    %1263 = vmatprep.subr.mxu0 0.0
    %1264 = vmatpush1.msra.mxu0 0.0
    %1265 = vmatprep.subr.mxu0 0.0
    %1266 = vmatpush1.msra.mxu0 0.0
    %1267 = vmatprep.subr.mxu0 0.0
    %1268 = vmatpush1.msra.mxu0 0.0
    %1269 = vmatprep.subr.mxu0 0.0
    %1270 = vmatpush1.msra.mxu0 0.0
    %1271 = vmatprep.subr.mxu0 0.0
    %1272 = vmatpush1.msra.mxu0 0.0
    %1273 = vmatprep.subr.mxu0 0.0
    %1274 = vmatpush1.msra.mxu0 0.0
    %1275 = vmatprep.subr.mxu0 0.0
    %1276 = vmatpush1.msra.mxu0 0.0
    %1277 = vmatprep.subr.mxu0 0.0
    %1278 = vmatpush1.msra.mxu0 0.0
    %1279 = vmatprep.subr.mxu0 0.0
    %1280 = vmatpush1.msra.mxu0 0.0
    %1281 = vmatprep.subr.mxu0 0.0
    %1282 = vmatpush1.msra.mxu0 0.0
    %1283 = vmatprep.subr.mxu0 0.0
    %1284 = vmatpush1.msra.mxu0 0.0
    %1285 = vmatprep.subr.mxu0 0.0
    %1286 = vmatpush1.msra.mxu0 0.0
    %1287 = vmatprep.subr.mxu0 0.0
    %1288 = vmatpush1.msra.mxu0 0.0
    %1289 = vmatprep.subr.mxu0 0.0
    %1290 = vmatpush1.msra.mxu0 0.0
    %1291 = vmatprep.subr.mxu0 0.0
    %1292 = vmatpush1.msra.mxu0 0.0
    %1293 = vmatprep.subr.mxu0 0.0
    %1294 = vmatpush1.msra.mxu0 0.0
    %1295 = vmatprep.subr.mxu0 0.0
    %1296 = vmatpush1.msra.mxu0 0.0
    %1297 = vmatprep.subr.mxu0 0.0
    %1298 = vmatpush1.msra.mxu0 0.0
    %1299 = vmatprep.subr.mxu0 0.0
    %1300 = vmatpush1.msra.mxu0 0.0
    %1301 = vmatprep.mubr.f32.mxu0 0.0
    %1302 = vmatmul.mubr.f32.gmra.mrb[0].mxu0 %v1235
    %v1303 = vpop.f32.mrb[0].mxu0
    %v1304 = vadd.f32 0.0, %v1303
    %v1305 = vpop.f32.mrb[0].mxu0
    %1306 = vdwg.mxu0
    %v1307 = vadd.f32 %v1231, %v1304
    %v1308 = vxor.u32 %v1307, 2147483648
    %v1309 = vmul.f32 %v1308, 1.442695
    %v1310 = vpow.pop %v1309
    %v1311 = vadd.f32 %v1310, 1.0
    %v1312 = vrcp.pop %v1311
    %v1313 = vmul.f32 1.0, %v1312
    %v1314 = vmul.f32 %v1313, 2.0
    %v1315 = vsub.f32 %v1314, 1.0
    %v1316 = vmul.f32 %v1313, %v1224
    %1318 = vrot.lane.b32.xlu0 %v1315, 64
    %v1319 = vpop.permute.xlu0 %1318
    %v1321 = vmul.f32 %v1313, %v1319
    %1323 = vrot.lane.b32.xlu0 %v1321, 32
    %v1324 = vpop.permute.xlu0 %1323
    %v1326 = vadd.f32 %v1316, %v1324
    %v1327 = vtanh.pop %v1326
    %1329 = vrot.lane.b32.xlu0 %v1327, 64
    %v1330 = vpop.permute.xlu0 %1329
    %v1332 = vmul.f32 %v1313, %v1330
    %v1333 = vld [vmem:[%s340] sm:$0xff]
    %1335 = vrot.lane.b32.xlu0 %v1332, 32
    %v1336 = vpop.permute.xlu0 %1335
    %v1337 = vsel %vm129, %v1336, 0
    %1339 = vmatprep.subr.mxu0 0.0
    %1340 = vmatpush1.msra.mxu0 %v980
    %1341 = vmatprep.subr.mxu0 0.0
    %1342 = vmatpush1.msra.mxu0 %v981
    %1343 = vmatprep.subr.mxu0 0.0
    %1344 = vmatpush1.msra.mxu0 %v982
    %1345 = vmatprep.subr.mxu0 0.0
    %1346 = vmatpush1.msra.mxu0 %v983
    %1347 = vmatprep.subr.mxu0 0.0
    %1348 = vmatpush1.msra.mxu0 0.0
    %1349 = vmatprep.subr.mxu0 0.0
    %1350 = vmatpush1.msra.mxu0 0.0
    %1351 = vmatprep.subr.mxu0 0.0
    %1352 = vmatpush1.msra.mxu0 0.0
    %1353 = vmatprep.subr.mxu0 0.0
    %1354 = vmatpush1.msra.mxu0 0.0
    %1355 = vmatprep.subr.mxu0 0.0
    %1356 = vmatpush1.msra.mxu0 0.0
    %1357 = vmatprep.subr.mxu0 0.0
    %1358 = vmatpush1.msra.mxu0 0.0
    %1359 = vmatprep.subr.mxu0 0.0
    %1360 = vmatpush1.msra.mxu0 0.0
    %1361 = vmatprep.subr.mxu0 0.0
    %1362 = vmatpush1.msra.mxu0 0.0
    %1363 = vmatprep.subr.mxu0 0.0
    %1364 = vmatpush1.msra.mxu0 0.0
    %1365 = vmatprep.subr.mxu0 0.0
    %1366 = vmatpush1.msra.mxu0 0.0
    %1367 = vmatprep.subr.mxu0 0.0
    %1368 = vmatpush1.msra.mxu0 0.0
    %1369 = vmatprep.subr.mxu0 0.0
    %1370 = vmatpush1.msra.mxu0 0.0
    %1371 = vmatprep.subr.mxu0 0.0
    %1372 = vmatpush1.msra.mxu0 0.0
    %1373 = vmatprep.subr.mxu0 0.0
    %1374 = vmatpush1.msra.mxu0 0.0
    %1375 = vmatprep.subr.mxu0 0.0
    %1376 = vmatpush1.msra.mxu0 0.0
    %1377 = vmatprep.subr.mxu0 0.0
    %1378 = vmatpush1.msra.mxu0 0.0
    %1379 = vmatprep.subr.mxu0 0.0
    %1380 = vmatpush1.msra.mxu0 0.0
    %1381 = vmatprep.subr.mxu0 0.0
    %1382 = vmatpush1.msra.mxu0 0.0
    %1383 = vmatprep.subr.mxu0 0.0
    %1384 = vmatpush1.msra.mxu0 0.0
    %1385 = vmatprep.subr.mxu0 0.0
    %1386 = vmatpush1.msra.mxu0 0.0
    %1387 = vmatprep.subr.mxu0 0.0
    %1388 = vmatpush1.msra.mxu0 0.0
    %1389 = vmatprep.subr.mxu0 0.0
    %1390 = vmatpush1.msra.mxu0 0.0
    %1391 = vmatprep.subr.mxu0 0.0
    %1392 = vmatpush1.msra.mxu0 0.0
    %1393 = vmatprep.subr.mxu0 0.0
    %1394 = vmatpush1.msra.mxu0 0.0
    %1395 = vmatprep.subr.mxu0 0.0
    %1396 = vmatpush1.msra.mxu0 0.0
    %1397 = vmatprep.subr.mxu0 0.0
    %1398 = vmatpush1.msra.mxu0 0.0
    %1399 = vmatprep.subr.mxu0 0.0
    %1400 = vmatpush1.msra.mxu0 0.0
    %1401 = vmatprep.subr.mxu0 0.0
    %1402 = vmatpush1.msra.mxu0 0.0
    %1403 = vmatprep.mubr.f32.mxu0 0.0
    %1404 = vmatmul.mubr.f32.gmra.mrb[0].mxu0 %v1337
    %v1405 = vpop.f32.mrb[0].mxu0
    %v1406 = vadd.f32 0.0, %v1405
    %v1407 = vpop.f32.mrb[0].mxu0
    %1408 = vdwg.mxu0
    %v1409 = vadd.f32 %v1333, %v1406
    %v1410 = vxor.u32 %v1409, 2147483648
    %v1411 = vmul.f32 %v1410, 1.442695
    %v1412 = vpow.pop %v1411
    %v1413 = vadd.f32 %v1412, 1.0
    %v1414 = vrcp.pop %v1413
    %v1415 = vmul.f32 1.0, %v1414
    %v1416 = vmul.f32 %v1415, 2.0
    %v1417 = vsub.f32 %v1416, 1.0
    %v1418 = vmul.f32 %v1415, %v1326
    %1420 = vrot.lane.b32.xlu0 %v1417, 64
    %v1421 = vpop.permute.xlu0 %1420
    %v1423 = vmul.f32 %v1415, %v1421
    %1425 = vrot.lane.b32.xlu0 %v1423, 32
    %v1426 = vpop.permute.xlu0 %1425
    %v1428 = vadd.f32 %v1418, %v1426
    %v1429 = vtanh.pop %v1428
    %1431 = vrot.lane.b32.xlu0 %v1429, 64
    %v1432 = vpop.permute.xlu0 %1431
    %v1434 = vmul.f32 %v1415, %v1432
    %v1435 = vld [vmem:[%s446] sm:$0xff]
    %1437 = vrot.lane.b32.xlu0 %v1434, 32
    %v1438 = vpop.permute.xlu0 %1437
    %v1439 = vsel %vm129, %v1438, 0
    %1441 = vmatprep.subr.mxu0 0.0
    %1442 = vmatpush1.msra.mxu0 %v980
    %1443 = vmatprep.subr.mxu0 0.0
    %1444 = vmatpush1.msra.mxu0 %v981
    %1445 = vmatprep.subr.mxu0 0.0
    %1446 = vmatpush1.msra.mxu0 %v982
    %1447 = vmatprep.subr.mxu0 0.0
    %1448 = vmatpush1.msra.mxu0 %v983
    %1449 = vmatprep.subr.mxu0 0.0
    %1450 = vmatpush1.msra.mxu0 0.0
    %1451 = vmatprep.subr.mxu0 0.0
    %1452 = vmatpush1.msra.mxu0 0.0
    %1453 = vmatprep.subr.mxu0 0.0
    %1454 = vmatpush1.msra.mxu0 0.0
    %1455 = vmatprep.subr.mxu0 0.0
    %1456 = vmatpush1.msra.mxu0 0.0
    %1457 = vmatprep.subr.mxu0 0.0
    %1458 = vmatpush1.msra.mxu0 0.0
    %1459 = vmatprep.subr.mxu0 0.0
    %1460 = vmatpush1.msra.mxu0 0.0
    %1461 = vmatprep.subr.mxu0 0.0
    %1462 = vmatpush1.msra.mxu0 0.0
    %1463 = vmatprep.subr.mxu0 0.0
    %1464 = vmatpush1.msra.mxu0 0.0
    %1465 = vmatprep.subr.mxu0 0.0
    %1466 = vmatpush1.msra.mxu0 0.0
    %1467 = vmatprep.subr.mxu0 0.0
    %1468 = vmatpush1.msra.mxu0 0.0
    %1469 = vmatprep.subr.mxu0 0.0
    %1470 = vmatpush1.msra.mxu0 0.0
    %1471 = vmatprep.subr.mxu0 0.0
    %1472 = vmatpush1.msra.mxu0 0.0
    %1473 = vmatprep.subr.mxu0 0.0
    %1474 = vmatpush1.msra.mxu0 0.0
    %1475 = vmatprep.subr.mxu0 0.0
    %1476 = vmatpush1.msra.mxu0 0.0
    %1477 = vmatprep.subr.mxu0 0.0
    %1478 = vmatpush1.msra.mxu0 0.0
    %1479 = vmatprep.subr.mxu0 0.0
    %1480 = vmatpush1.msra.mxu0 0.0
    %1481 = vmatprep.subr.mxu0 0.0
    %1482 = vmatpush1.msra.mxu0 0.0
    %1483 = vmatprep.subr.mxu0 0.0
    %1484 = vmatpush1.msra.mxu0 0.0
    %1485 = vmatprep.subr.mxu0 0.0
    %1486 = vmatpush1.msra.mxu0 0.0
    %1487 = vmatprep.subr.mxu0 0.0
    %1488 = vmatpush1.msra.mxu0 0.0
    %1489 = vmatprep.subr.mxu0 0.0
    %1490 = vmatpush1.msra.mxu0 0.0
    %1491 = vmatprep.subr.mxu0 0.0
    %1492 = vmatpush1.msra.mxu0 0.0
    %1493 = vmatprep.subr.mxu0 0.0
    %1494 = vmatpush1.msra.mxu0 0.0
    %1495 = vmatprep.subr.mxu0 0.0
    %1496 = vmatpush1.msra.mxu0 0.0
    %1497 = vmatprep.subr.mxu0 0.0
    %1498 = vmatpush1.msra.mxu0 0.0
    %1499 = vmatprep.subr.mxu0 0.0
    %1500 = vmatpush1.msra.mxu0 0.0
    %1501 = vmatprep.subr.mxu0 0.0
    %1502 = vmatpush1.msra.mxu0 0.0
    %1503 = vmatprep.subr.mxu0 0.0
    %1504 = vmatpush1.msra.mxu0 0.0
    %1505 = vmatprep.mubr.f32.mxu0 0.0
    %1506 = vmatmul.mubr.f32.gmra.mrb[0].mxu0 %v1439
    %v1507 = vpop.f32.mrb[0].mxu0
    %v1508 = vadd.f32 0.0, %v1507
    %v1509 = vpop.f32.mrb[0].mxu0
    %1510 = vdwg.mxu0
    %v1511 = vadd.f32 %v1435, %v1508
    %v1512 = vxor.u32 %v1511, 2147483648
    %v1513 = vmul.f32 %v1512, 1.442695
    %v1514 = vpow.pop %v1513
    %v1515 = vadd.f32 %v1514, 1.0
    %v1516 = vrcp.pop %v1515
    %v1517 = vmul.f32 1.0, %v1516
    %v1518 = vmul.f32 %v1517, 2.0
    %v1519 = vsub.f32 %v1518, 1.0
    %v1520 = vmul.f32 %v1517, %v1428
    %1522 = vrot.lane.b32.xlu0 %v1519, 64
    %v1523 = vpop.permute.xlu0 %1522
    %v1525 = vmul.f32 %v1517, %v1523
    %1527 = vrot.lane.b32.xlu0 %v1525, 32
    %v1528 = vpop.permute.xlu0 %1527
    %v1530 = vadd.f32 %v1520, %v1528
    %v1531 = vtanh.pop %v1530
    %1533 = vrot.lane.b32.xlu0 %v1531, 64
    %v1534 = vpop.permute.xlu0 %1533
    %v1536 = vmul.f32 %v1517, %v1534
    %v1537 = vld [vmem:[%s552] sm:$0xff]
    %1539 = vrot.lane.b32.xlu0 %v1536, 32
    %v1540 = vpop.permute.xlu0 %1539
    %v1541 = vsel %vm129, %v1540, 0
    %1543 = vmatprep.subr.mxu0 0.0
    %1544 = vmatpush1.msra.mxu0 %v980
    %1545 = vmatprep.subr.mxu0 0.0
    %1546 = vmatpush1.msra.mxu0 %v981
    %1547 = vmatprep.subr.mxu0 0.0
    %1548 = vmatpush1.msra.mxu0 %v982
    %1549 = vmatprep.subr.mxu0 0.0
    %1550 = vmatpush1.msra.mxu0 %v983
    %1551 = vmatprep.subr.mxu0 0.0
    %1552 = vmatpush1.msra.mxu0 0.0
    %1553 = vmatprep.subr.mxu0 0.0
    %1554 = vmatpush1.msra.mxu0 0.0
    %1555 = vmatprep.subr.mxu0 0.0
    %1556 = vmatpush1.msra.mxu0 0.0
    %1557 = vmatprep.subr.mxu0 0.0
    %1558 = vmatpush1.msra.mxu0 0.0
    %1559 = vmatprep.subr.mxu0 0.0
    %1560 = vmatpush1.msra.mxu0 0.0
    %1561 = vmatprep.subr.mxu0 0.0
    %1562 = vmatpush1.msra.mxu0 0.0
    %1563 = vmatprep.subr.mxu0 0.0
    %1564 = vmatpush1.msra.mxu0 0.0
    %1565 = vmatprep.subr.mxu0 0.0
    %1566 = vmatpush1.msra.mxu0 0.0
    %1567 = vmatprep.subr.mxu0 0.0
    %1568 = vmatpush1.msra.mxu0 0.0
    %1569 = vmatprep.subr.mxu0 0.0
    %1570 = vmatpush1.msra.mxu0 0.0
    %1571 = vmatprep.subr.mxu0 0.0
    %1572 = vmatpush1.msra.mxu0 0.0
    %1573 = vmatprep.subr.mxu0 0.0
    %1574 = vmatpush1.msra.mxu0 0.0
    %1575 = vmatprep.subr.mxu0 0.0
    %1576 = vmatpush1.msra.mxu0 0.0
    %1577 = vmatprep.subr.mxu0 0.0
    %1578 = vmatpush1.msra.mxu0 0.0
    %1579 = vmatprep.subr.mxu0 0.0
    %1580 = vmatpush1.msra.mxu0 0.0
    %1581 = vmatprep.subr.mxu0 0.0
    %1582 = vmatpush1.msra.mxu0 0.0
    %1583 = vmatprep.subr.mxu0 0.0
    %1584 = vmatpush1.msra.mxu0 0.0
    %1585 = vmatprep.subr.mxu0 0.0
    %1586 = vmatpush1.msra.mxu0 0.0
    %1587 = vmatprep.subr.mxu0 0.0
    %1588 = vmatpush1.msra.mxu0 0.0
    %1589 = vmatprep.subr.mxu0 0.0
    %1590 = vmatpush1.msra.mxu0 0.0
    %1591 = vmatprep.subr.mxu0 0.0
    %1592 = vmatpush1.msra.mxu0 0.0
    %1593 = vmatprep.subr.mxu0 0.0
    %1594 = vmatpush1.msra.mxu0 0.0
    %1595 = vmatprep.subr.mxu0 0.0
    %1596 = vmatpush1.msra.mxu0 0.0
    %1597 = vmatprep.subr.mxu0 0.0
    %1598 = vmatpush1.msra.mxu0 0.0
    %1599 = vmatprep.subr.mxu0 0.0
    %1600 = vmatpush1.msra.mxu0 0.0
    %1601 = vmatprep.subr.mxu0 0.0
    %1602 = vmatpush1.msra.mxu0 0.0
    %1603 = vmatprep.subr.mxu0 0.0
    %1604 = vmatpush1.msra.mxu0 0.0
    %1605 = vmatprep.subr.mxu0 0.0
    %1606 = vmatpush1.msra.mxu0 0.0
    %1607 = vmatprep.mubr.f32.mxu0 0.0
    %1608 = vmatmul.mubr.f32.gmra.mrb[0].mxu0 %v1541
    %v1609 = vpop.f32.mrb[0].mxu0
    %v1610 = vadd.f32 0.0, %v1609
    %v1611 = vpop.f32.mrb[0].mxu0
    %1612 = vdwg.mxu0
    %v1613 = vadd.f32 %v1537, %v1610
    %v1614 = vxor.u32 %v1613, 2147483648
    %v1615 = vmul.f32 %v1614, 1.442695
    %v1616 = vpow.pop %v1615
    %v1617 = vadd.f32 %v1616, 1.0
    %v1618 = vrcp.pop %v1617
    %v1619 = vmul.f32 1.0, %v1618
    %v1620 = vmul.f32 %v1619, 2.0
    %v1621 = vsub.f32 %v1620, 1.0
    %v1622 = vmul.f32 %v1619, %v1530
    %1624 = vrot.lane.b32.xlu0 %v1621, 64
    %v1625 = vpop.permute.xlu0 %1624
    %v1627 = vmul.f32 %v1619, %v1625
    %1629 = vrot.lane.b32.xlu0 %v1627, 32
    %v1630 = vpop.permute.xlu0 %1629
    %v1632 = vadd.f32 %v1622, %v1630
    %v1633 = vtanh.pop %v1632
    %1635 = vrot.lane.b32.xlu0 %v1633, 64
    %v1636 = vpop.permute.xlu0 %1635
    %v1638 = vmul.f32 %v1619, %v1636
    %v1639 = vld [vmem:[%s658] sm:$0xff]
    %1641 = vrot.lane.b32.xlu0 %v1638, 32
    %v1642 = vpop.permute.xlu0 %1641
    %v1643 = vsel %vm129, %v1642, 0
    %1645 = vmatprep.subr.mxu0 0.0
    %1646 = vmatpush1.msra.mxu0 %v980
    %1647 = vmatprep.subr.mxu0 0.0
    %1648 = vmatpush1.msra.mxu0 %v981
    %1649 = vmatprep.subr.mxu0 0.0
    %1650 = vmatpush1.msra.mxu0 %v982
    %1651 = vmatprep.subr.mxu0 0.0
    %1652 = vmatpush1.msra.mxu0 %v983
    %1653 = vmatprep.subr.mxu0 0.0
    %1654 = vmatpush1.msra.mxu0 0.0
    %1655 = vmatprep.subr.mxu0 0.0
    %1656 = vmatpush1.msra.mxu0 0.0
    %1657 = vmatprep.subr.mxu0 0.0
    %1658 = vmatpush1.msra.mxu0 0.0
    %1659 = vmatprep.subr.mxu0 0.0
    %1660 = vmatpush1.msra.mxu0 0.0
    %1661 = vmatprep.subr.mxu0 0.0
    %1662 = vmatpush1.msra.mxu0 0.0
    %1663 = vmatprep.subr.mxu0 0.0
    %1664 = vmatpush1.msra.mxu0 0.0
    %1665 = vmatprep.subr.mxu0 0.0
    %1666 = vmatpush1.msra.mxu0 0.0
    %1667 = vmatprep.subr.mxu0 0.0
    %1668 = vmatpush1.msra.mxu0 0.0
    %1669 = vmatprep.subr.mxu0 0.0
    %1670 = vmatpush1.msra.mxu0 0.0
    %1671 = vmatprep.subr.mxu0 0.0
    %1672 = vmatpush1.msra.mxu0 0.0
    %1673 = vmatprep.subr.mxu0 0.0
    %1674 = vmatpush1.msra.mxu0 0.0
    %1675 = vmatprep.subr.mxu0 0.0
    %1676 = vmatpush1.msra.mxu0 0.0
    %1677 = vmatprep.subr.mxu0 0.0
    %1678 = vmatpush1.msra.mxu0 0.0
    %1679 = vmatprep.subr.mxu0 0.0
    %1680 = vmatpush1.msra.mxu0 0.0
    %1681 = vmatprep.subr.mxu0 0.0
    %1682 = vmatpush1.msra.mxu0 0.0
    %1683 = vmatprep.subr.mxu0 0.0
    %1684 = vmatpush1.msra.mxu0 0.0
    %1685 = vmatprep.subr.mxu0 0.0
    %1686 = vmatpush1.msra.mxu0 0.0
    %1687 = vmatprep.subr.mxu0 0.0
    %1688 = vmatpush1.msra.mxu0 0.0
    %1689 = vmatprep.subr.mxu0 0.0
    %1690 = vmatpush1.msra.mxu0 0.0
    %1691 = vmatprep.subr.mxu0 0.0
    %1692 = vmatpush1.msra.mxu0 0.0
    %1693 = vmatprep.subr.mxu0 0.0
    %1694 = vmatpush1.msra.mxu0 0.0
    %1695 = vmatprep.subr.mxu0 0.0
    %1696 = vmatpush1.msra.mxu0 0.0
    %1697 = vmatprep.subr.mxu0 0.0
    %1698 = vmatpush1.msra.mxu0 0.0
    %1699 = vmatprep.subr.mxu0 0.0
    %1700 = vmatpush1.msra.mxu0 0.0
    %1701 = vmatprep.subr.mxu0 0.0
    %1702 = vmatpush1.msra.mxu0 0.0
    %1703 = vmatprep.subr.mxu0 0.0
    %1704 = vmatpush1.msra.mxu0 0.0
    %1705 = vmatprep.subr.mxu0 0.0
    %1706 = vmatpush1.msra.mxu0 0.0
    %1707 = vmatprep.subr.mxu0 0.0
    %1708 = vmatpush1.msra.mxu0 0.0
    %1709 = vmatprep.mubr.f32.mxu0 0.0
    %1710 = vmatmul.mubr.f32.gmra.mrb[0].mxu0 %v1643
    %v1711 = vpop.f32.mrb[0].mxu0
    %v1712 = vadd.f32 0.0, %v1711
    %v1713 = vpop.f32.mrb[0].mxu0
    %1714 = vdwg.mxu0
    %v1715 = vadd.f32 %v1639, %v1712
    %v1716 = vxor.u32 %v1715, 2147483648
    %v1717 = vmul.f32 %v1716, 1.442695
    %v1718 = vpow.pop %v1717
    %v1719 = vadd.f32 %v1718, 1.0
    %v1720 = vrcp.pop %v1719
    %v1721 = vmul.f32 1.0, %v1720
    %v1722 = vmul.f32 %v1721, 2.0
    %v1723 = vsub.f32 %v1722, 1.0
    %v1724 = vmul.f32 %v1721, %v1632
    %1726 = vrot.lane.b32.xlu0 %v1723, 64
    %v1727 = vpop.permute.xlu0 %1726
    %v1729 = vmul.f32 %v1721, %v1727
    %1731 = vrot.lane.b32.xlu0 %v1729, 32
    %v1732 = vpop.permute.xlu0 %1731
    %v1734 = vadd.f32 %v1724, %v1732
    %v1735 = vtanh.pop %v1734
    %1737 = vrot.lane.b32.xlu0 %v1735, 64
    %v1738 = vpop.permute.xlu0 %1737
    %v1740 = vmul.f32 %v1721, %v1738
    %v1741 = vld [vmem:[%s764] sm:$0xff]
    %1743 = vrot.lane.b32.xlu0 %v1740, 32
    %v1744 = vpop.permute.xlu0 %1743
    %v1745 = vsel %vm129, %v1744, 0
    %1747 = vmatprep.subr.mxu0 0.0
    %1748 = vmatpush1.msra.mxu0 %v980
    %1749 = vmatprep.subr.mxu0 0.0
    %1750 = vmatpush1.msra.mxu0 %v981
    %1751 = vmatprep.subr.mxu0 0.0
    %1752 = vmatpush1.msra.mxu0 %v982
    %1753 = vmatprep.subr.mxu0 0.0
    %1754 = vmatpush1.msra.mxu0 %v983
    %1755 = vmatprep.subr.mxu0 0.0
    %1756 = vmatpush1.msra.mxu0 0.0
    %1757 = vmatprep.subr.mxu0 0.0
    %1758 = vmatpush1.msra.mxu0 0.0
    %1759 = vmatprep.subr.mxu0 0.0
    %1760 = vmatpush1.msra.mxu0 0.0
    %1761 = vmatprep.subr.mxu0 0.0
    %1762 = vmatpush1.msra.mxu0 0.0
    %1763 = vmatprep.subr.mxu0 0.0
    %1764 = vmatpush1.msra.mxu0 0.0
    %1765 = vmatprep.subr.mxu0 0.0
    %1766 = vmatpush1.msra.mxu0 0.0
    %1767 = vmatprep.subr.mxu0 0.0
    %1768 = vmatpush1.msra.mxu0 0.0
    %1769 = vmatprep.subr.mxu0 0.0
    %1770 = vmatpush1.msra.mxu0 0.0
    %1771 = vmatprep.subr.mxu0 0.0
    %1772 = vmatpush1.msra.mxu0 0.0
    %1773 = vmatprep.subr.mxu0 0.0
    %1774 = vmatpush1.msra.mxu0 0.0
    %1775 = vmatprep.subr.mxu0 0.0
    %1776 = vmatpush1.msra.mxu0 0.0
    %1777 = vmatprep.subr.mxu0 0.0
    %1778 = vmatpush1.msra.mxu0 0.0
    %1779 = vmatprep.subr.mxu0 0.0
    %1780 = vmatpush1.msra.mxu0 0.0
    %1781 = vmatprep.subr.mxu0 0.0
    %1782 = vmatpush1.msra.mxu0 0.0
    %1783 = vmatprep.subr.mxu0 0.0
    %1784 = vmatpush1.msra.mxu0 0.0
    %1785 = vmatprep.subr.mxu0 0.0
    %1786 = vmatpush1.msra.mxu0 0.0
    %1787 = vmatprep.subr.mxu0 0.0
    %1788 = vmatpush1.msra.mxu0 0.0
    %1789 = vmatprep.subr.mxu0 0.0
    %1790 = vmatpush1.msra.mxu0 0.0
    %1791 = vmatprep.subr.mxu0 0.0
    %1792 = vmatpush1.msra.mxu0 0.0
    %1793 = vmatprep.subr.mxu0 0.0
    %1794 = vmatpush1.msra.mxu0 0.0
    %1795 = vmatprep.subr.mxu0 0.0
    %1796 = vmatpush1.msra.mxu0 0.0
    %1797 = vmatprep.subr.mxu0 0.0
    %1798 = vmatpush1.msra.mxu0 0.0
    %1799 = vmatprep.subr.mxu0 0.0
    %1800 = vmatpush1.msra.mxu0 0.0
    %1801 = vmatprep.subr.mxu0 0.0
    %1802 = vmatpush1.msra.mxu0 0.0
    %1803 = vmatprep.subr.mxu0 0.0
    %1804 = vmatpush1.msra.mxu0 0.0
    %1805 = vmatprep.subr.mxu0 0.0
    %1806 = vmatpush1.msra.mxu0 0.0
    %1807 = vmatprep.subr.mxu0 0.0
    %1808 = vmatpush1.msra.mxu0 0.0
    %1809 = vmatprep.subr.mxu0 0.0
    %1810 = vmatpush1.msra.mxu0 0.0
    %1811 = vmatprep.mubr.f32.mxu0 0.0
    %1812 = vmatmul.mubr.f32.gmra.mrb[0].mxu0 %v1745
    %v1813 = vpop.f32.mrb[0].mxu0
    %v1814 = vadd.f32 0.0, %v1813
    %v1815 = vpop.f32.mrb[0].mxu0
    %1816 = vdwg.mxu0
    %v1817 = vadd.f32 %v1741, %v1814
    %v1818 = vxor.u32 %v1817, 2147483648
    %v1819 = vmul.f32 %v1818, 1.442695
    %v1820 = vpow.pop %v1819
    %v1821 = vadd.f32 %v1820, 1.0
    %v1822 = vrcp.pop %v1821
    %v1823 = vmul.f32 1.0, %v1822
    %v1824 = vmul.f32 %v1823, 2.0
    %v1825 = vsub.f32 %v1824, 1.0
    %v1826 = vmul.f32 %v1823, %v1734
    %1828 = vrot.lane.b32.xlu0 %v1825, 64
    %v1829 = vpop.permute.xlu0 %1828
    %v1831 = vmul.f32 %v1823, %v1829
    %1833 = vrot.lane.b32.xlu0 %v1831, 32
    %v1834 = vpop.permute.xlu0 %1833
    %v1836 = vadd.f32 %v1826, %v1834
    %v1837 = vtanh.pop %v1836
    %1839 = vrot.lane.b32.xlu0 %v1837, 64
    %v1840 = vpop.permute.xlu0 %1839
    %v1842 = vmul.f32 %v1823, %v1840
    %v1843 = vld [vmem:[%s870] sm:$0xff]
    %1845 = vrot.lane.b32.xlu0 %v1842, 32
    %v1846 = vpop.permute.xlu0 %1845
    %v1847 = vsel %vm129, %v1846, 0
    %1849 = vmatprep.subr.mxu0 0.0
    %1850 = vmatpush1.msra.mxu0 %v980
    %1851 = vmatprep.subr.mxu0 0.0
    %1852 = vmatpush1.msra.mxu0 %v981
    %1853 = vmatprep.subr.mxu0 0.0
    %1854 = vmatpush1.msra.mxu0 %v982
    %1855 = vmatprep.subr.mxu0 0.0
    %1856 = vmatpush1.msra.mxu0 %v983
    %1857 = vmatprep.subr.mxu0 0.0
    %1858 = vmatpush1.msra.mxu0 0.0
    %1859 = vmatprep.subr.mxu0 0.0
    %1860 = vmatpush1.msra.mxu0 0.0
    %1861 = vmatprep.subr.mxu0 0.0
    %1862 = vmatpush1.msra.mxu0 0.0
    %1863 = vmatprep.subr.mxu0 0.0
    %1864 = vmatpush1.msra.mxu0 0.0
    %1865 = vmatprep.subr.mxu0 0.0
    %1866 = vmatpush1.msra.mxu0 0.0
    %1867 = vmatprep.subr.mxu0 0.0
    %1868 = vmatpush1.msra.mxu0 0.0
    %1869 = vmatprep.subr.mxu0 0.0
    %1870 = vmatpush1.msra.mxu0 0.0
    %1871 = vmatprep.subr.mxu0 0.0
    %1872 = vmatpush1.msra.mxu0 0.0
    %1873 = vmatprep.subr.mxu0 0.0
    %1874 = vmatpush1.msra.mxu0 0.0
    %1875 = vmatprep.subr.mxu0 0.0
    %1876 = vmatpush1.msra.mxu0 0.0
    %1877 = vmatprep.subr.mxu0 0.0
    %1878 = vmatpush1.msra.mxu0 0.0
    %1879 = vmatprep.subr.mxu0 0.0
    %1880 = vmatpush1.msra.mxu0 0.0
    %1881 = vmatprep.subr.mxu0 0.0
    %1882 = vmatpush1.msra.mxu0 0.0
    %1883 = vmatprep.subr.mxu0 0.0
    %1884 = vmatpush1.msra.mxu0 0.0
    %1885 = vmatprep.subr.mxu0 0.0
    %1886 = vmatpush1.msra.mxu0 0.0
    %1887 = vmatprep.subr.mxu0 0.0
    %1888 = vmatpush1.msra.mxu0 0.0
    %1889 = vmatprep.subr.mxu0 0.0
    %1890 = vmatpush1.msra.mxu0 0.0
    %1891 = vmatprep.subr.mxu0 0.0
    %1892 = vmatpush1.msra.mxu0 0.0
    %1893 = vmatprep.subr.mxu0 0.0
    %1894 = vmatpush1.msra.mxu0 0.0
    %1895 = vmatprep.subr.mxu0 0.0
    %1896 = vmatpush1.msra.mxu0 0.0
    %1897 = vmatprep.subr.mxu0 0.0
    %1898 = vmatpush1.msra.mxu0 0.0
    %1899 = vmatprep.subr.mxu0 0.0
    %1900 = vmatpush1.msra.mxu0 0.0
    %1901 = vmatprep.subr.mxu0 0.0
    %1902 = vmatpush1.msra.mxu0 0.0
    %1903 = vmatprep.subr.mxu0 0.0
    %1904 = vmatpush1.msra.mxu0 0.0
    %1905 = vmatprep.subr.mxu0 0.0
    %1906 = vmatpush1.msra.mxu0 0.0
    %1907 = vmatprep.subr.mxu0 0.0
    %1908 = vmatpush1.msra.mxu0 0.0
    %1909 = vmatprep.subr.mxu0 0.0
    %1910 = vmatpush1.msra.mxu0 0.0
    %1911 = vmatprep.subr.mxu0 0.0
    %1912 = vmatpush1.msra.mxu0 0.0
    %1913 = vmatprep.mubr.f32.mxu0 0.0
    %1914 = vmatmul.mubr.f32.gmra.mrb[0].mxu0 %v1847
    %v1915 = vpop.f32.mrb[0].mxu0
    %v1916 = vadd.f32 0.0, %v1915
    %v1917 = vpop.f32.mrb[0].mxu0
    %1918 = vdwg.mxu0
    %v1919 = vadd.f32 %v1843, %v1916
    %v1920 = vxor.u32 %v1919, 2147483648
    %v1921 = vmul.f32 %v1920, 1.442695
    %v1922 = vpow.pop %v1921
    %v1923 = vadd.f32 %v1922, 1.0
    %v1924 = vrcp.pop %v1923
    %v1925 = vmul.f32 1.0, %v1924
    %v1926 = vmul.f32 %v1925, 2.0
    %v1927 = vsub.f32 %v1926, 1.0
    %v1928 = vmul.f32 %v1925, %v1836
    %1930 = vrot.lane.b32.xlu0 %v1927, 64
    %v1931 = vpop.permute.xlu0 %1930
    %v1933 = vmul.f32 %v1925, %v1931
    %1935 = vrot.lane.b32.xlu0 %v1933, 32
    %v1936 = vpop.permute.xlu0 %1935
    %v1938 = vadd.f32 %v1928, %v1936
    %v1939 = vtanh.pop %v1938
    %1941 = vrot.lane.b32.xlu0 %v1939, 64
    %v1942 = vpop.permute.xlu0 %1941
    %v1944 = vmul.f32 %v1925, %v1942
    %v1945 = vld [vmem:[#allocation6] sm:$0xff]
    %v1946 = vld [vmem:[#allocation6 + $0x8] sm:$0xff]
    %v1947 = vld [vmem:[#allocation6 + $0x10] sm:$0xff]
    %v1948 = vld [vmem:[#allocation6 + $0x18] sm:$0xff]
    %v1949 = vld [vmem:[#allocation6 + $0x20] sm:$0x1]
    %v1950 = vld [vmem:[#allocation6 + $0x28] sm:$0xff]
    %v1951 = vld [vmem:[#allocation6 + $0x30] sm:$0xff]
    %v1952 = vld [vmem:[#allocation6 + $0x38] sm:$0xff]
    %v1953 = vld [vmem:[#allocation6 + $0x40] sm:$0xff]
    %v1954 = vld [vmem:[#allocation6 + $0x48] sm:$0xff]
    %v1955 = vld [vmem:[#allocation6 + $0x50] sm:$0xff]
    %v1956 = vld [vmem:[#allocation6 + $0x58] sm:$0xff]
    %v1957 = vld [vmem:[#allocation6 + $0x60] sm:$0xff]
    %v1958 = vld [vmem:[#allocation6 + $0x68] sm:$0xff]
    %v1959 = vld [vmem:[#allocation6 + $0x70] sm:$0xff]
    %v1960 = vld [vmem:[#allocation6 + $0x78] sm:$0xff]
    %v1961 = vld [vmem:[#allocation6 + $0x80] sm:$0xff]
    %v1962 = vld [vmem:[#allocation6 + $0x88] sm:$0xff]
    %v1963 = vld [vmem:[#allocation6 + $0x90] sm:$0xff]
    %v1964 = vld [vmem:[#allocation6 + $0x98] sm:$0xff]
    %v1965 = vld [vmem:[#allocation6 + $0xa0] sm:$0xff]
    %v1966 = vld [vmem:[#allocation6 + $0xa8] sm:$0x1]
    %v1967 = vld [vmem:[#allocation6 + $0xb0] sm:$0xff]
    %v1968 = vld [vmem:[#allocation6 + $0xb8] sm:$0xff]
    %v1969 = vld [vmem:[#allocation6 + $0xc0] sm:$0xff]
    %v1970 = vld [vmem:[#allocation6 + $0xc8] sm:$0xff]
    %v1971 = vld [vmem:[#allocation6 + $0xd0] sm:$0xff]
    %v1972 = vld [vmem:[#allocation6 + $0xd8] sm:$0xff]
    %v1973 = vld [vmem:[#allocation6 + $0xe0] sm:$0xff]
    %v1974 = vld [vmem:[#allocation6 + $0xe8] sm:$0xff]
    %v1975 = vld [vmem:[#allocation6 + $0xf0] sm:$0xff]
    %v1976 = vld [vmem:[#allocation6 + $0xf8] sm:$0xff]
    %v1977 = vld [vmem:[#allocation6 + $0x100] sm:$0xff]
    %v1978 = vld [vmem:[#allocation6 + $0x108] sm:$0xff]
    %v1979 = vld [vmem:[#allocation6 + $0x110] sm:$0xff]
    %v1980 = vld [vmem:[#allocation6 + $0x118] sm:$0xff]
    %v1981 = vld [vmem:[#allocation6 + $0x120] sm:$0xff]
    %v1982 = vld [vmem:[#allocation6 + $0x128] sm:$0xff]
    %v1983 = vld [vmem:[#allocation6 + $0x130] sm:$0x1]
    %v1984 = vld [vmem:[#allocation6 + $0x138] sm:$0xff]
    %v1985 = vld [vmem:[#allocation6 + $0x140] sm:$0xff]
    %v1986 = vld [vmem:[#allocation6 + $0x148] sm:$0xff]
    %v1987 = vld [vmem:[#allocation6 + $0x150] sm:$0xff]
    %v1988 = vld [vmem:[#allocation6 + $0x158] sm:$0xff]
    %v1989 = vld [vmem:[#allocation6 + $0x160] sm:$0xff]
    %v1990 = vld [vmem:[#allocation6 + $0x168] sm:$0xff]
    %v1991 = vld [vmem:[#allocation6 + $0x170] sm:$0xff]
    %v1992 = vld [vmem:[#allocation6 + $0x178] sm:$0xff]
    %v1993 = vld [vmem:[#allocation6 + $0x180] sm:$0xff]
    %v1994 = vld [vmem:[#allocation6 + $0x188] sm:$0xff]
    %v1995 = vld [vmem:[#allocation6 + $0x190] sm:$0xff]
    %v1996 = vld [vmem:[#allocation6 + $0x198] sm:$0xff]
    %v1997 = vld [vmem:[#allocation6 + $0x1a0] sm:$0xff]
    %v1998 = vld [vmem:[#allocation6 + $0x1a8] sm:$0xff]
    %v1999 = vld [vmem:[#allocation6 + $0x1b0] sm:$0xff]
    %v2000 = vld [vmem:[#allocation6 + $0x1b8] sm:$0x1]
    %v2001 = vld [vmem:[#allocation6 + $0x1c0] sm:$0xff]
    %v2002 = vld [vmem:[#allocation6 + $0x1c8] sm:$0xff]
    %v2003 = vld [vmem:[#allocation6 + $0x1d0] sm:$0xff]
    %v2004 = vld [vmem:[#allocation6 + $0x1d8] sm:$0xff]
    %v2005 = vlaneseq
    %v2006 = vshrl.u32 %v2005, 7
    %v2007 = vsub.s32 0, %v2006
    %v2008 = vrot.slane %v1949, %v2007
    %2010 = vrot.lane.b32.xlu0 %v1944, 32
    %v2011 = vpop.permute.xlu0 %2010
    %v2012 = vsel %vm129, %v2011, 0
    %2014 = vmatprep.subr.mxu0 0.0
    %2015 = vmatpush1.msra.mxu0 %v1945
    %2016 = vmatprep.subr.mxu0 0.0
    %2017 = vmatpush1.msra.mxu0 %v1946
    %2018 = vmatprep.subr.mxu0 0.0
    %2019 = vmatpush1.msra.mxu0 %v1947
    %2020 = vmatprep.subr.mxu0 0.0
    %2021 = vmatpush1.msra.mxu0 %v1948
    %2022 = vmatprep.subr.mxu0 0.0
    %2023 = vmatpush1.msra.mxu0 0.0
    %2024 = vmatprep.subr.mxu0 0.0
    %2025 = vmatpush1.msra.mxu0 0.0
    %2026 = vmatprep.subr.mxu0 0.0
    %2027 = vmatpush1.msra.mxu0 0.0
    %2028 = vmatprep.subr.mxu0 0.0
    %2029 = vmatpush1.msra.mxu0 0.0
    %2030 = vmatprep.subr.mxu0 0.0
    %2031 = vmatpush1.msra.mxu0 0.0
    %2032 = vmatprep.subr.mxu0 0.0
    %2033 = vmatpush1.msra.mxu0 0.0
    %2034 = vmatprep.subr.mxu0 0.0
    %2035 = vmatpush1.msra.mxu0 0.0
    %2036 = vmatprep.subr.mxu0 0.0
    %2037 = vmatpush1.msra.mxu0 0.0
    %2038 = vmatprep.subr.mxu0 0.0
    %2039 = vmatpush1.msra.mxu0 0.0
    %2040 = vmatprep.subr.mxu0 0.0
    %2041 = vmatpush1.msra.mxu0 0.0
    %2042 = vmatprep.subr.mxu0 0.0
    %2043 = vmatpush1.msra.mxu0 0.0
    %2044 = vmatprep.subr.mxu0 0.0
    %2045 = vmatpush1.msra.mxu0 0.0
    %2046 = vmatprep.subr.mxu0 0.0
    %2047 = vmatpush1.msra.mxu0 0.0
    %2048 = vmatprep.subr.mxu0 0.0
    %2049 = vmatpush1.msra.mxu0 0.0
    %2050 = vmatprep.subr.mxu0 0.0
    %2051 = vmatpush1.msra.mxu0 0.0
    %2052 = vmatprep.subr.mxu0 0.0
    %2053 = vmatpush1.msra.mxu0 0.0
    %2054 = vmatprep.subr.mxu0 0.0
    %2055 = vmatpush1.msra.mxu0 0.0
    %2056 = vmatprep.subr.mxu0 0.0
    %2057 = vmatpush1.msra.mxu0 0.0
    %2058 = vmatprep.subr.mxu0 0.0
    %2059 = vmatpush1.msra.mxu0 0.0
    %2060 = vmatprep.subr.mxu0 0.0
    %2061 = vmatpush1.msra.mxu0 0.0
    %2062 = vmatprep.subr.mxu0 0.0
    %2063 = vmatpush1.msra.mxu0 0.0
    %2064 = vmatprep.subr.mxu0 0.0
    %2065 = vmatpush1.msra.mxu0 0.0
    %2066 = vmatprep.subr.mxu0 0.0
    %2067 = vmatpush1.msra.mxu0 0.0
    %2068 = vmatprep.subr.mxu0 0.0
    %2069 = vmatpush1.msra.mxu0 0.0
    %2070 = vmatprep.subr.mxu0 0.0
    %2071 = vmatpush1.msra.mxu0 0.0
    %2072 = vmatprep.subr.mxu0 0.0
    %2073 = vmatpush1.msra.mxu0 0.0
    %2074 = vmatprep.subr.mxu0 0.0
    %2075 = vmatpush1.msra.mxu0 0.0
    %2076 = vmatprep.subr.mxu0 0.0
    %2077 = vmatpush1.msra.mxu0 0.0
    %2078 = vmatprep.mubr.f32.mxu0 0.0
    %2079 = vmatmul.mubr.f32.gmra.mrb[0].mxu0 %v2012
    %v2080 = vpop.f32.mrb[0].mxu0
    %v2081 = vadd.f32 %v2008, %v2080
    %v2082 = vpop.f32.mrb[0].mxu0
    %2083 = vdwg.mxu0
    %v2084 = vmax.f32 %v2081, 0.0
    %v2085 = vlaneseq
    %v2086 = vshrl.u32 %v2085, 7
    %v2087 = vsub.s32 0, %v2086
    %v2088 = vrot.slane %v1966, %v2087
    %2089 = vmatprep.subr.mxu0 0.0
    %2090 = vmatpush1.msra.mxu0 %v1950
    %2091 = vmatprep.subr.mxu0 0.0
    %2092 = vmatpush1.msra.mxu0 %v1951
    %2093 = vmatprep.subr.mxu0 0.0
    %2094 = vmatpush1.msra.mxu0 %v1952
    %2095 = vmatprep.subr.mxu0 0.0
    %2096 = vmatpush1.msra.mxu0 %v1953
    %2097 = vmatprep.subr.mxu0 0.0
    %2098 = vmatpush1.msra.mxu0 %v1954
    %2099 = vmatprep.subr.mxu0 0.0
    %2100 = vmatpush1.msra.mxu0 %v1955
    %2101 = vmatprep.subr.mxu0 0.0
    %2102 = vmatpush1.msra.mxu0 %v1956
    %2103 = vmatprep.subr.mxu0 0.0
    %2104 = vmatpush1.msra.mxu0 %v1957
    %2105 = vmatprep.subr.mxu0 0.0
    %2106 = vmatpush1.msra.mxu0 %v1958
    %2107 = vmatprep.subr.mxu0 0.0
    %2108 = vmatpush1.msra.mxu0 %v1959
    %2109 = vmatprep.subr.mxu0 0.0
    %2110 = vmatpush1.msra.mxu0 %v1960
    %2111 = vmatprep.subr.mxu0 0.0
    %2112 = vmatpush1.msra.mxu0 %v1961
    %2113 = vmatprep.subr.mxu0 0.0
    %2114 = vmatpush1.msra.mxu0 %v1962
    %2115 = vmatprep.subr.mxu0 0.0
    %2116 = vmatpush1.msra.mxu0 %v1963
    %2117 = vmatprep.subr.mxu0 0.0
    %2118 = vmatpush1.msra.mxu0 %v1964
    %2119 = vmatprep.subr.mxu0 0.0
    %2120 = vmatpush1.msra.mxu0 %v1965
    %2121 = vmatprep.subr.mxu0 0.0
    %2122 = vmatpush1.msra.mxu0 0.0
    %2123 = vmatprep.subr.mxu0 0.0
    %2124 = vmatpush1.msra.mxu0 0.0
    %2125 = vmatprep.subr.mxu0 0.0
    %2126 = vmatpush1.msra.mxu0 0.0
    %2127 = vmatprep.subr.mxu0 0.0
    %2128 = vmatpush1.msra.mxu0 0.0
    %2129 = vmatprep.subr.mxu0 0.0
    %2130 = vmatpush1.msra.mxu0 0.0
    %2131 = vmatprep.subr.mxu0 0.0
    %2132 = vmatpush1.msra.mxu0 0.0
    %2133 = vmatprep.subr.mxu0 0.0
    %2134 = vmatpush1.msra.mxu0 0.0
    %2135 = vmatprep.subr.mxu0 0.0
    %2136 = vmatpush1.msra.mxu0 0.0
    %2137 = vmatprep.subr.mxu0 0.0
    %2138 = vmatpush1.msra.mxu0 0.0
    %2139 = vmatprep.subr.mxu0 0.0
    %2140 = vmatpush1.msra.mxu0 0.0
    %2141 = vmatprep.subr.mxu0 0.0
    %2142 = vmatpush1.msra.mxu0 0.0
    %2143 = vmatprep.subr.mxu0 0.0
    %2144 = vmatpush1.msra.mxu0 0.0
    %2145 = vmatprep.subr.mxu0 0.0
    %2146 = vmatpush1.msra.mxu0 0.0
    %2147 = vmatprep.subr.mxu0 0.0
    %2148 = vmatpush1.msra.mxu0 0.0
    %2149 = vmatprep.subr.mxu0 0.0
    %2150 = vmatpush1.msra.mxu0 0.0
    %2151 = vmatprep.subr.mxu0 0.0
    %2152 = vmatpush1.msra.mxu0 0.0
    %2153 = vmatprep.mubr.f32.mxu0 0.0
    %2154 = vmatmul.mubr.f32.gmra.mrb[0].mxu0 %v2084
    %v2155 = vpop.f32.mrb[0].mxu0
    %v2156 = vadd.f32 %v2088, %v2155
    %v2157 = vpop.f32.mrb[0].mxu0
    %2158 = vdwg.mxu0
    %v2159 = vmax.f32 %v2156, 0.0
    %v2160 = vlaneseq
    %v2161 = vshrl.u32 %v2160, 7
    %v2162 = vsub.s32 0, %v2161
    %v2163 = vrot.slane %v1983, %v2162
    %2164 = vmatprep.subr.mxu0 0.0
    %2165 = vmatpush1.msra.mxu0 %v1967
    %2166 = vmatprep.subr.mxu0 0.0
    %2167 = vmatpush1.msra.mxu0 %v1968
    %2168 = vmatprep.subr.mxu0 0.0
    %2169 = vmatpush1.msra.mxu0 %v1969
    %2170 = vmatprep.subr.mxu0 0.0
    %2171 = vmatpush1.msra.mxu0 %v1970
    %2172 = vmatprep.subr.mxu0 0.0
    %2173 = vmatpush1.msra.mxu0 %v1971
    %2174 = vmatprep.subr.mxu0 0.0
    %2175 = vmatpush1.msra.mxu0 %v1972
    %2176 = vmatprep.subr.mxu0 0.0
    %2177 = vmatpush1.msra.mxu0 %v1973
    %2178 = vmatprep.subr.mxu0 0.0
    %2179 = vmatpush1.msra.mxu0 %v1974
    %2180 = vmatprep.subr.mxu0 0.0
    %2181 = vmatpush1.msra.mxu0 %v1975
    %2182 = vmatprep.subr.mxu0 0.0
    %2183 = vmatpush1.msra.mxu0 %v1976
    %2184 = vmatprep.subr.mxu0 0.0
    %2185 = vmatpush1.msra.mxu0 %v1977
    %2186 = vmatprep.subr.mxu0 0.0
    %2187 = vmatpush1.msra.mxu0 %v1978
    %2188 = vmatprep.subr.mxu0 0.0
    %2189 = vmatpush1.msra.mxu0 %v1979
    %2190 = vmatprep.subr.mxu0 0.0
    %2191 = vmatpush1.msra.mxu0 %v1980
    %2192 = vmatprep.subr.mxu0 0.0
    %2193 = vmatpush1.msra.mxu0 %v1981
    %2194 = vmatprep.subr.mxu0 0.0
    %2195 = vmatpush1.msra.mxu0 %v1982
    %2196 = vmatprep.subr.mxu0 0.0
    %2197 = vmatpush1.msra.mxu0 0.0
    %2198 = vmatprep.subr.mxu0 0.0
    %2199 = vmatpush1.msra.mxu0 0.0
    %2200 = vmatprep.subr.mxu0 0.0
    %2201 = vmatpush1.msra.mxu0 0.0
    %2202 = vmatprep.subr.mxu0 0.0
    %2203 = vmatpush1.msra.mxu0 0.0
    %2204 = vmatprep.subr.mxu0 0.0
    %2205 = vmatpush1.msra.mxu0 0.0
    %2206 = vmatprep.subr.mxu0 0.0
    %2207 = vmatpush1.msra.mxu0 0.0
    %2208 = vmatprep.subr.mxu0 0.0
    %2209 = vmatpush1.msra.mxu0 0.0
    %2210 = vmatprep.subr.mxu0 0.0
    %2211 = vmatpush1.msra.mxu0 0.0
    %2212 = vmatprep.subr.mxu0 0.0
    %2213 = vmatpush1.msra.mxu0 0.0
    %2214 = vmatprep.subr.mxu0 0.0
    %2215 = vmatpush1.msra.mxu0 0.0
    %2216 = vmatprep.subr.mxu0 0.0
    %2217 = vmatpush1.msra.mxu0 0.0
    %2218 = vmatprep.subr.mxu0 0.0
    %2219 = vmatpush1.msra.mxu0 0.0
    %2220 = vmatprep.subr.mxu0 0.0
    %2221 = vmatpush1.msra.mxu0 0.0
    %2222 = vmatprep.subr.mxu0 0.0
    %2223 = vmatpush1.msra.mxu0 0.0
    %2224 = vmatprep.subr.mxu0 0.0
    %2225 = vmatpush1.msra.mxu0 0.0
    %2226 = vmatprep.subr.mxu0 0.0
    %2227 = vmatpush1.msra.mxu0 0.0
    %2228 = vmatprep.mubr.f32.mxu0 0.0
    %2229 = vmatmul.mubr.f32.gmra.mrb[0].mxu0 %v2159
    %v2230 = vpop.f32.mrb[0].mxu0
    %v2231 = vadd.f32 %v2163, %v2230
    %v2232 = vpop.f32.mrb[0].mxu0
    %2233 = vdwg.mxu0
    %v2234 = vmax.f32 %v2231, 0.0
    %2235 = vmatprep.subr.mxu0 0.0
    %2236 = vmatpush1.msra.mxu0 %v1984
    %2237 = vmatprep.subr.mxu0 0.0
    %2238 = vmatpush1.msra.mxu0 %v1985
    %2239 = vmatprep.subr.mxu0 0.0
    %2240 = vmatpush1.msra.mxu0 %v1986
    %2241 = vmatprep.subr.mxu0 0.0
    %2242 = vmatpush1.msra.mxu0 %v1987
    %2243 = vmatprep.subr.mxu0 0.0
    %2244 = vmatpush1.msra.mxu0 %v1988
    %2245 = vmatprep.subr.mxu0 0.0
    %2246 = vmatpush1.msra.mxu0 %v1989
    %2247 = vmatprep.subr.mxu0 0.0
    %2248 = vmatpush1.msra.mxu0 %v1990
    %2249 = vmatprep.subr.mxu0 0.0
    %2250 = vmatpush1.msra.mxu0 %v1991
    %2251 = vmatprep.subr.mxu0 0.0
    %2252 = vmatpush1.msra.mxu0 %v1992
    %2253 = vmatprep.subr.mxu0 0.0
    %2254 = vmatpush1.msra.mxu0 %v1993
    %2255 = vmatprep.subr.mxu0 0.0
    %2256 = vmatpush1.msra.mxu0 %v1994
    %2257 = vmatprep.subr.mxu0 0.0
    %2258 = vmatpush1.msra.mxu0 %v1995
    %2259 = vmatprep.subr.mxu0 0.0
    %2260 = vmatpush1.msra.mxu0 %v1996
    %2261 = vmatprep.subr.mxu0 0.0
    %2262 = vmatpush1.msra.mxu0 %v1997
    %2263 = vmatprep.subr.mxu0 0.0
    %2264 = vmatpush1.msra.mxu0 %v1998
    %2265 = vmatprep.subr.mxu0 0.0
    %2266 = vmatpush1.msra.mxu0 %v1999
    %2267 = vmatprep.subr.mxu0 0.0
    %2268 = vmatpush1.msra.mxu0 0.0
    %2269 = vmatprep.subr.mxu0 0.0
    %2270 = vmatpush1.msra.mxu0 0.0
    %2271 = vmatprep.subr.mxu0 0.0
    %2272 = vmatpush1.msra.mxu0 0.0
    %2273 = vmatprep.subr.mxu0 0.0
    %2274 = vmatpush1.msra.mxu0 0.0
    %2275 = vmatprep.subr.mxu0 0.0
    %2276 = vmatpush1.msra.mxu0 0.0
    %2277 = vmatprep.subr.mxu0 0.0
    %2278 = vmatpush1.msra.mxu0 0.0
    %2279 = vmatprep.subr.mxu0 0.0
    %2280 = vmatpush1.msra.mxu0 0.0
    %2281 = vmatprep.subr.mxu0 0.0
    %2282 = vmatpush1.msra.mxu0 0.0
    %2283 = vmatprep.subr.mxu0 0.0
    %2284 = vmatpush1.msra.mxu0 0.0
    %2285 = vmatprep.subr.mxu0 0.0
    %2286 = vmatpush1.msra.mxu0 0.0
    %2287 = vmatprep.subr.mxu0 0.0
    %2288 = vmatpush1.msra.mxu0 0.0
    %2289 = vmatprep.subr.mxu0 0.0
    %2290 = vmatpush1.msra.mxu0 0.0
    %2291 = vmatprep.subr.mxu0 0.0
    %2292 = vmatpush1.msra.mxu0 0.0
    %2293 = vmatprep.subr.mxu0 0.0
    %2294 = vmatpush1.msra.mxu0 0.0
    %2295 = vmatprep.subr.mxu0 0.0
    %2296 = vmatpush1.msra.mxu0 0.0
    %2297 = vmatprep.subr.mxu0 0.0
    %2298 = vmatpush1.msra.mxu0 0.0
    %2299 = vmatprep.mubr.f32.mxu0 0.0
    %2300 = vmatmul.mubr.f32.gmra.mrb[0].mxu0 %v2234
    %v2301 = vpop.f32.mrb[0].mxu0
    %v2302 = vadd.f32 0.0, %v2301
    %v2303 = vpop.f32.mrb[0].mxu0
    %2304 = vdwg.mxu0
    %2305 = vmatprep.subr.mxu0 0.0
    %2306 = vmatpush1.msra.mxu0 %v2001
    %2307 = vmatprep.subr.mxu0 0.0
    %2308 = vmatpush1.msra.mxu0 %v2002
    %2309 = vmatprep.subr.mxu0 0.0
    %2310 = vmatpush1.msra.mxu0 %v2003
    %2311 = vmatprep.subr.mxu0 0.0
    %2312 = vmatpush1.msra.mxu0 %v2004
    %2313 = vmatprep.subr.mxu0 0.0
    %2314 = vmatpush1.msra.mxu0 0.0
    %2315 = vmatprep.subr.mxu0 0.0
    %2316 = vmatpush1.msra.mxu0 0.0
    %2317 = vmatprep.subr.mxu0 0.0
    %2318 = vmatpush1.msra.mxu0 0.0
    %2319 = vmatprep.subr.mxu0 0.0
    %2320 = vmatpush1.msra.mxu0 0.0
    %2321 = vmatprep.subr.mxu0 0.0
    %2322 = vmatpush1.msra.mxu0 0.0
    %2323 = vmatprep.subr.mxu0 0.0
    %2324 = vmatpush1.msra.mxu0 0.0
    %2325 = vmatprep.subr.mxu0 0.0
    %2326 = vmatpush1.msra.mxu0 0.0
    %2327 = vmatprep.subr.mxu0 0.0
    %2328 = vmatpush1.msra.mxu0 0.0
    %2329 = vmatprep.subr.mxu0 0.0
    %2330 = vmatpush1.msra.mxu0 0.0
    %2331 = vmatprep.subr.mxu0 0.0
    %2332 = vmatpush1.msra.mxu0 0.0
    %2333 = vmatprep.subr.mxu0 0.0
    %2334 = vmatpush1.msra.mxu0 0.0
    %2335 = vmatprep.subr.mxu0 0.0
    %2336 = vmatpush1.msra.mxu0 0.0
    %2337 = vmatprep.subr.mxu0 0.0
    %2338 = vmatpush1.msra.mxu0 0.0
    %2339 = vmatprep.subr.mxu0 0.0
    %2340 = vmatpush1.msra.mxu0 0.0
    %2341 = vmatprep.subr.mxu0 0.0
    %2342 = vmatpush1.msra.mxu0 0.0
    %2343 = vmatprep.subr.mxu0 0.0
    %2344 = vmatpush1.msra.mxu0 0.0
    %2345 = vmatprep.subr.mxu0 0.0
    %2346 = vmatpush1.msra.mxu0 0.0
    %2347 = vmatprep.subr.mxu0 0.0
    %2348 = vmatpush1.msra.mxu0 0.0
    %2349 = vmatprep.subr.mxu0 0.0
    %2350 = vmatpush1.msra.mxu0 0.0
    %2351 = vmatprep.subr.mxu0 0.0
    %2352 = vmatpush1.msra.mxu0 0.0
    %2353 = vmatprep.subr.mxu0 0.0
    %2354 = vmatpush1.msra.mxu0 0.0
    %2355 = vmatprep.subr.mxu0 0.0
    %2356 = vmatpush1.msra.mxu0 0.0
    %2357 = vmatprep.subr.mxu0 0.0
    %2358 = vmatpush1.msra.mxu0 0.0
    %2359 = vmatprep.subr.mxu0 0.0
    %2360 = vmatpush1.msra.mxu0 0.0
    %2361 = vmatprep.subr.mxu0 0.0
    %2362 = vmatpush1.msra.mxu0 0.0
    %2363 = vmatprep.subr.mxu0 0.0
    %2364 = vmatpush1.msra.mxu0 0.0
    %2365 = vmatprep.subr.mxu0 0.0
    %2366 = vmatpush1.msra.mxu0 0.0
    %2367 = vmatprep.subr.mxu0 0.0
    %2368 = vmatpush1.msra.mxu0 0.0
    %2369 = vmatprep.mubr.f32.mxu0 0.0
    %2370 = vmatmul.mubr.f32.gmra.mrb[0].mxu0 %v2012
    %v2371 = vpop.f32.mrb[0].mxu0
    %v2372 = vadd.f32 %v2302, %v2371
    %v2373 = vpop.f32.mrb[0].mxu0
    %2374 = vdwg.mxu0
    %v2375 = vlaneseq
    %v2376 = vshrl.u32 %v2375, 7
    %v2377 = vsub.s32 0, %v2376
    %v2378 = vrot.slane %v2000, %v2377
    %v2379 = vadd.f32 %v2372, %v2378
    %2380 = vst [vmem:[%s3] sm:$0xff] %v2379
    // Predicated region
    $region22: #{model_forward.1} parent=1 // pred_check
      _
    $region23: #{model_forward.1} parent=1 // pred_check_branch
      %2382 = sbr.rel (0) target = $region25
    $region24: #{model_forward.1} parent=1 // pred_region
      _
    $region25: #{model_forward.1} parent=1 // pred_fallthru
      _
    // Predicated region
    $region26: #{model_forward.1} parent=1 // pred_check
      _
    $region27: #{model_forward.1} parent=1 // pred_check_branch
      %2384 = sbr.rel (0) target = $region29
    $region28: #{model_forward.1} parent=1 // pred_region
      _
    $region29: #{model_forward.1} parent=1 // pred_fallthru
      _
    %2385 = vsyncpa [#allocation5], 1
    %2386 = vsyncpa [#allocation7], 1

</llo_original>
